<compile_context>
chip_gen: v7x
topology: tpu7x:2x2x1
jax: 0.10.0
libtpu: 0.0.40
codegen_flags: <defaults>
</compile_context>

<pallas_src>
import jax
import jax.numpy as jnp
from jax import lax
from jax.experimental import pallas as pl
from jax.experimental.pallas import tpu as pltpu

LANES = 128


# ------------------------- Pallas kernel -------------------------

def bilstm_kernel(len_ref, xp_ref, wih_ref, b_ref, whh_ref,
                  w1_ref, b1_ref, w2_ref, b2_ref,
                  out_ref, gin_ref):
    # len_ref : [B, 1]      int32 sequence lengths
    # xp_ref  : [T*B, 2E]   bf16, row s*B+b = [x[s, b] | x[T-1-s, b]]
    # wih_ref : [2E, 8H]    bf16, gate-major interleaved paired input weights
    # b_ref   : [1, 8H]     f32, fused (b_ih + b_hh) biases, gate-major interleaved
    # whh_ref : [2H, 8H]    bf16, block-diagonal gate-major interleaved recurrent weights
    # w1/b1   : [2H, FP] bf16 / [1, FP] f32   (fc1, lane-padded)
    # w2/b2   : [FP, 128] bf16 / [1, 128] f32 (fc2, lane-padded; logit in column 0)
    # gin_ref : [T, B, 8H]  f32 VMEM scratch (precomputed input gates)
    T, B, G = gin_ref.shape                     # G = 8H
    H2 = whh_ref.shape[0]                       # 2H (fused fwd|bwd state width)
    H = H2 // 2

    # ---- preamble: input projection for all timesteps / both directions in one MXU pass ----
    gin = jnp.dot(xp_ref[...], wih_ref[...],
                  preferred_element_type=jnp.float32) + b_ref[...]
    gin_ref[...] = gin.reshape(T, B, G)

    whh = whh_ref[...]                          # bf16, stays resident in VMEM/vregs
    lens = len_ref[...]                         # [B, 1] int32
    tml = T - lens                              # [B, 1] backward-valid threshold (hoisted)
    # lane -> which half of the fused state this column belongs to (cols 0:H fwd, H:2H bwd)
    is_fwd = lax.broadcasted_iota(jnp.int32, (1, H2), 1) < H

    def sig(x):                                 # exact identity, single EUP tanh
        return 0.5 * jnp.tanh(0.5 * x) + 0.5

    h0 = jnp.zeros((B, H2), jnp.float32)
    c0 = jnp.zeros((B, H2), jnp.float32)

    def step(s, carry):
        h, c = carry
        # single recurrent matmul for BOTH directions: [B,2H] @ [2H,8H], bf16 operands, f32 acc
        gates = gin_ref[s] + jnp.dot(h.astype(jnp.bfloat16), whh,
                                     preferred_element_type=jnp.float32)
        i = sig(gates[:, 0 * H2:1 * H2])        # [i_f | i_b]
        f = sig(gates[:, 1 * H2:2 * H2])        # [f_f | f_b]
        g = jnp.tanh(gates[:, 2 * H2:3 * H2])   # [g_f | g_b]
        o = sig(gates[:, 3 * H2:4 * H2])        # [o_f | o_b]
        c_new = f * c + i * g
        h_new = o * jnp.tanh(c_new)
        # pack_padded_sequence semantics: fwd valid while s < len, bwd valid while s >= T-len
        vf = (s < lens).astype(jnp.float32)     # [B, 1]
        vb = (s >= tml).astype(jnp.float32)     # [B, 1]
        valid = jnp.where(is_fwd, vf, vb) > 0.0  # [B, 2H]
        return jnp.where(valid, h_new, h), jnp.where(valid, c_new, c)

    # short static trip count: fully unroll so the step chain interleaves MXU/EUP/VPU work
    h, _ = lax.fori_loop(0, T, step, (h0, c0), unroll=True)

    # h == torch.cat((hidden[-2], hidden[-1]), dim=1).  FC head on full 128-lane slabs.
    z1 = jnp.dot(h.astype(jnp.bfloat16), w1_ref[...],
                 preferred_element_type=jnp.float32) + b1_ref[...]
    z1 = jnp.maximum(z1, 0.0)                   # ReLU
    z2 = jnp.dot(z1.astype(jnp.bfloat16), w2_ref[...],
                 preferred_element_type=jnp.float32) + b2_ref[...]
    out_ref[...] = sig(z2)                      # [B, 128] lane-dense store; column 0 = probability


# ------------------------- one-time param prep (hoisted out of the forward path) -------------------------

def _interleave_gates(wf, wb, H):
    # [in, 4H] x2 -> [in, 8H] with columns [i_f i_b | f_f f_b | g_f g_b | o_f o_b]
    n = wf.shape[0]
    return jnp.concatenate([wf.reshape(n, 4, 1, H),
                            wb.reshape(n, 4, 1, H)], axis=2).reshape(n, 8 * H)


def prepare_params(params):
    """Static weight munging done once at init, not per forward call."""
    H = params["whh_f"].shape[0]
    F = params["w2"].shape[0]
    FP = max(F, LANES)

    zE = jnp.zeros_like(params["wih_f"])
    zH = jnp.zeros_like(params["whh_f"])

    # paired input weights [2E, 8H]: rows 0:E act on x[s] (fwd), rows E:2E on x[T-1-s] (bwd)
    wih_pair = jnp.concatenate([_interleave_gates(params["wih_f"], zE, H),
                                _interleave_gates(zE, params["wih_b"], H)], axis=0)
    # fused biases, gate-major interleaved [1, 8H]
    b_pair = _interleave_gates(params["b_f"], params["b_b"], H)
    # block-diagonal recurrent weights [2H, 8H]
    whh_blk = jnp.concatenate([_interleave_gates(params["whh_f"], zH, H),
                               _interleave_gates(zH, params["whh_b"], H)], axis=0)
    # fc head padded to full 128-lane slabs; real logit lives in column 0 of w2p/b2p
    w1p = jnp.zeros((2 * H, FP), jnp.float32).at[:, :F].set(params["w1"])
    b1p = jnp.zeros((1, FP), jnp.float32).at[:, :F].set(params["b1"])
    w2p = jnp.zeros((FP, LANES), jnp.float32).at[:F, :1].set(params["w2"])
    b2p = jnp.zeros((1, LANES), jnp.float32).at[:, :1].set(params["b2"])

    return {
        "embedding": params["embedding"],
        "wih_pair": wih_pair.astype(jnp.bfloat16),
        "b_pair": b_pair.astype(jnp.float32),
        "whh_blk": whh_blk.astype(jnp.bfloat16),
        "w1p": w1p.astype(jnp.bfloat16),
        "b1p": b1p,
        "w2p": w2p.astype(jnp.bfloat16),
        "b2p": b2p,
    }


# ------------------------- forward wrapper -------------------------

def bidirectional_rnn_forward(text, lengths, prep):
    # Embedding lookup (gather) is glue in plain JAX; padding_idx=0 row is zero in the table.
    emb = prep["embedding"][text]                            # [B, T, E] f32
    B, T, E = emb.shape
    x = jnp.transpose(emb, (1, 0, 2))                        # time-major [T, B, E]
    # fused fwd|bwd input: xp[s] = [x[s] | x[T-1-s]]  ->  flat [T*B, 2E], bf16 MXU operand
    xp = jnp.concatenate([x, x[::-1]], axis=-1).astype(jnp.bfloat16).reshape(T * B, 2 * E)
    len_col = lengths.astype(jnp.int32).reshape(B, 1)

    H2 = prep["whh_blk"].shape[0]                            # 2H
    vmem = pl.BlockSpec(memory_space=pltpu.MemorySpace.VMEM)
    args = (len_col, xp, prep["wih_pair"], prep["b_pair"], prep["whh_blk"],
            prep["w1p"], prep["b1p"], prep["w2p"], prep["b2p"])

    # TODO(synk): when B >= 16, add a batch grid axis with per-batch BlockSpecs for
    # len/xp/out and dimension_semantics=("parallel",) so v7x's two TensorCores split the
    # batch, and tighten vmem_limit_bytes as B*T*H scales.
    out = pl.pallas_call(
        bilstm_kernel,
        out_shape=jax.ShapeDtypeStruct((B, LANES), jnp.float32),
        in_specs=[vmem] * len(args),
        out_specs=vmem,
        scratch_shapes=[pltpu.VMEM((T, B, 4 * H2), jnp.float32)],   # gin: [T, B, 8H]
        compiler_params=pltpu.CompilerParams(vmem_limit_bytes=32 * 1024 * 1024),
    )(*args)
    return out[:, :1]                                        # [B, 1]


# ------------------------- deterministic params -------------------------

def init_params(key, vocab_size, embed_dim, H, F):
    ks = jax.random.split(key, 12)
    s = 0.1
    emb = jax.random.normal(ks[0], (vocab_size, embed_dim), jnp.float32) * s
    emb = emb.at[0].set(0.0)                                 # padding_idx=0
    return {
        "embedding": emb,
        # LSTM weights as [in, 4H] (transposed vs PyTorch [4H, in]); biases fused (b_ih + b_hh).
        "wih_f": jax.random.normal(ks[1], (embed_dim, 4 * H), jnp.float32) * s,
        "whh_f": jax.random.normal(ks[2], (H, 4 * H), jnp.float32) * s,
        "b_f":   jax.random.normal(ks[3], (1, 4 * H), jnp.float32) * s,
        "wih_b": jax.random.normal(ks[4], (embed_dim, 4 * H), jnp.float32) * s,
        "whh_b": jax.random.normal(ks[5], (H, 4 * H), jnp.float32) * s,
        "b_b":   jax.random.normal(ks[6], (1, 4 * H), jnp.float32) * s,
        "w1":    jax.random.normal(ks[7], (2 * H, F), jnp.float32) * s,
        "b1":    jax.random.normal(ks[8], (1, F), jnp.float32) * s,
        "w2":    jax.random.normal(ks[9], (F, 1), jnp.float32) * s,
        "b2":    jax.random.normal(ks[10], (1, 1), jnp.float32) * s,
    }


# ------------------------- pure-JAX reference (f32) -------------------------

def reference_forward(text, lengths, params):
    emb = params["embedding"][text]                          # [B, T, E]
    B, T, _ = emb.shape
    H = params["whh_f"].shape[0]

    def run(wih, whh, b, reverse):
        h = jnp.zeros((B, H), jnp.float32)
        c = jnp.zeros((B, H), jnp.float32)
        order = range(T - 1, -1, -1) if reverse else range(T)
        for t in order:
            x_t = emb[:, t, :]
            gates = x_t @ wih + h @ whh + b
            i, f, g, o = jnp.split(gates, 4, axis=1)
            i = jax.nn.sigmoid(i); f = jax.nn.sigmoid(f)
            g = jnp.tanh(g); o = jax.nn.sigmoid(o)
            c_new = f * c + i * g
            h_new = o * jnp.tanh(c_new)
            m = (t < lengths).astype(jnp.float32)[:, None]
            h = m * h_new + (1.0 - m) * h
            c = m * c_new + (1.0 - m) * c
        return h

    h_f = run(params["wih_f"], params["whh_f"], params["b_f"], False)
    h_b = run(params["wih_b"], params["whh_b"], params["b_b"], True)
    hcat = jnp.concatenate([h_f, h_b], axis=1)
    z1 = jnp.maximum(hcat @ params["w1"] + params["b1"], 0.0)
    return jax.nn.sigmoid(z1 @ params["w2"] + params["b2"])


# ------------------------- main -------------------------

if __name__ == "__main__":
    B, T = 8, 12
    vocab_size, embed_dim = 50, 20
    rnn_hidden_size, fc_hidden_size = 64, 64

    key = jax.random.PRNGKey(0)
    k_params, k_text = jax.random.split(key)
    params = init_params(k_params, vocab_size, embed_dim, rnn_hidden_size, fc_hidden_size)
    prep = prepare_params(params)                            # one-time weight prep (hoisted)

    lengths = jnp.array([12, 9, 7, 12, 3, 5, 1, 10], dtype=jnp.int32)
    text = jax.random.randint(k_text, (B, T), 1, vocab_size, dtype=jnp.int32)
    pos = jnp.arange(T, dtype=jnp.int32)[None, :]
    text = jnp.where(pos < lengths[:, None], text, 0)        # pad with index 0 (padding_idx)

    fwd = jax.jit(bidirectional_rnn_forward)
    out = fwd(text, lengths, prep)
    out = jax.block_until_ready(out)

    ref = reference_forward(text, lengths, params)
    assert out.shape == (B, 1)
    # tolerance widened slightly vs pure-f32 to account for bf16 MXU operands (f32 accumulation,
    # f32 carry/gate math preserved).
    assert jnp.allclose(out, ref, atol=5e-3, rtol=5e-3), (out, ref)

    print("KERNEL_OK")
</pallas_src>

<mosaic_0001>
module attributes {stable_mosaic.version = 11 : i64} {
  func.func @bilstm_kernel(%arg0: memref<8x1xi32, #tpu.memory_space<vmem>>, %arg1: memref<96x40xbf16, #tpu.memory_space<vmem>>, %arg2: memref<40x512xbf16, #tpu.memory_space<vmem>>, %arg3: memref<1x512xf32, #tpu.memory_space<vmem>>, %arg4: memref<128x512xbf16, #tpu.memory_space<vmem>>, %arg5: memref<128x128xbf16, #tpu.memory_space<vmem>>, %arg6: memref<1x128xf32, #tpu.memory_space<vmem>>, %arg7: memref<128x128xbf16, #tpu.memory_space<vmem>>, %arg8: memref<1x128xf32, #tpu.memory_space<vmem>>, %arg9: memref<8x128xf32, #tpu.memory_space<vmem>>, %arg10: memref<12x8x512xf32, #tpu.memory_space<vmem>>) attributes {dimension_semantics = [], scalar_prefetch = 0 : i64, scratch_operands = 1 : i64, tpu.core_type = #tpu.core_type<tc>} {
    %c0 = arith.constant 0 : index
    %c0_0 = arith.constant 0 : index
    %0 = vector.load %arg1[%c0, %c0_0] : memref<96x40xbf16, #tpu.memory_space<vmem>>, vector<96x40xbf16>
    %c0_1 = arith.constant 0 : index
    %c0_2 = arith.constant 0 : index
    %1 = vector.load %arg2[%c0_1, %c0_2] : memref<40x512xbf16, #tpu.memory_space<vmem>>, vector<40x512xbf16>
    %cst = arith.constant dense<0.000000e+00> : vector<96x512xf32>
    %2 = tpu.matmul %0, %1, %cst {dimension_numbers = #tpu.dot_dimension_numbers<[1], [0], [0], [1], [0, 0, 1, 1], [], []>} : vector<96x40xbf16>, vector<40x512xbf16>, vector<96x512xf32> -> vector<96x512xf32>
    %c0_3 = arith.constant 0 : index
    %c0_4 = arith.constant 0 : index
    %3 = vector.load %arg3[%c0_3, %c0_4] : memref<1x512xf32, #tpu.memory_space<vmem>>, vector<1x512xf32>
    %4 = vector.broadcast %3 : vector<1x512xf32> to vector<96x512xf32>
    %5 = arith.addf %2, %4 : vector<96x512xf32>
    %6 = vector.shape_cast %5 : vector<96x512xf32> to vector<12x8x512xf32>
    %c0_5 = arith.constant 0 : index
    %c0_6 = arith.constant 0 : index
    %c0_7 = arith.constant 0 : index
    %7 = vector.load %arg10[%c0_5, %c0_6, %c0_7] : memref<12x8x512xf32, #tpu.memory_space<vmem>>, vector<12x8x512xf32>
    tpu.vector_store %arg10[%c0_5, %c0_6, %c0_7], %6 {strides = array<i32>} : memref<12x8x512xf32, #tpu.memory_space<vmem>>, vector<12x8x512xf32>,
    %c0_8 = arith.constant 0 : index
    %c0_9 = arith.constant 0 : index
    %8 = vector.load %arg4[%c0_8, %c0_9] : memref<128x512xbf16, #tpu.memory_space<vmem>>, vector<128x512xbf16>
    %c0_10 = arith.constant 0 : index
    %c0_11 = arith.constant 0 : index
    %9 = vector.load %arg0[%c0_10, %c0_11] : memref<8x1xi32, #tpu.memory_space<vmem>>, vector<8x1xi32>
    %c12_i32 = arith.constant 12 : i32
    %10 = vector.broadcast %c12_i32 : i32 to vector<8x1xi32>
    %11 = arith.subi %10, %9 : vector<8x1xi32>
    %12 = tpu.iota {dimensions = array<i32: 1>} : vector<1x128xi32>
    %c64_i32 = arith.constant 64 : i32
    %13 = vector.broadcast %c64_i32 : i32 to vector<1x128xi32>
    %14 = arith.cmpi slt, %12, %13 : vector<1x128xi32>
    %cst_12 = arith.constant 0.000000e+00 : f32
    %15 = vector.broadcast %cst_12 : f32 to vector<8x128xf32>
    %cst_13 = arith.constant 0.000000e+00 : f32
    %16 = vector.broadcast %cst_13 : f32 to vector<8x128xf32>
    %c0_i32 = arith.constant 0 : i32
    %17 = arith.index_cast %c0_i32 : i32 to index
    %c0_14 = arith.constant 0 : index
    %c0_15 = arith.constant 0 : index
    %18 = vector.load %arg10[%17, %c0_14, %c0_15] : memref<12x8x512xf32, #tpu.memory_space<vmem>>, vector<1x8x512xf32>
    %19 = vector.shape_cast %18 : vector<1x8x512xf32> to vector<8x512xf32>
    %20 = arith.truncf %15 : vector<8x128xf32> to vector<8x128xbf16>
    %cst_16 = arith.constant dense<0.000000e+00> : vector<8x512xf32>
    %21 = tpu.matmul %20, %8, %cst_16 {dimension_numbers = #tpu.dot_dimension_numbers<[1], [0], [0], [1], [0, 0, 1, 1], [], []>} : vector<8x128xbf16>, vector<128x512xbf16>, vector<8x512xf32> -> vector<8x512xf32>
    %22 = arith.addf %19, %21 : vector<8x512xf32>
    %23 = vector.extract_strided_slice %22 {offsets = [0, 0], sizes = [8, 128], strides = [1, 1]} : vector<8x512xf32> to vector<8x128xf32>
    %cst_17 = arith.constant 5.000000e-01 : f32
    %24 = vector.broadcast %cst_17 : f32 to vector<8x128xf32>
    %25 = arith.mulf %24, %23 : vector<8x128xf32>
    %26 = math.tanh %25 : vector<8x128xf32>
    %cst_18 = arith.constant 5.000000e-01 : f32
    %27 = vector.broadcast %cst_18 : f32 to vector<8x128xf32>
    %28 = arith.mulf %27, %26 : vector<8x128xf32>
    %cst_19 = arith.constant 5.000000e-01 : f32
    %29 = vector.broadcast %cst_19 : f32 to vector<8x128xf32>
    %30 = arith.addf %28, %29 : vector<8x128xf32>
    %31 = vector.extract_strided_slice %22 {offsets = [0, 128], sizes = [8, 128], strides = [1, 1]} : vector<8x512xf32> to vector<8x128xf32>
    %cst_20 = arith.constant 5.000000e-01 : f32
    %32 = vector.broadcast %cst_20 : f32 to vector<8x128xf32>
    %33 = arith.mulf %32, %31 : vector<8x128xf32>
    %34 = math.tanh %33 : vector<8x128xf32>
    %cst_21 = arith.constant 5.000000e-01 : f32
    %35 = vector.broadcast %cst_21 : f32 to vector<8x128xf32>
    %36 = arith.mulf %35, %34 : vector<8x128xf32>
    %cst_22 = arith.constant 5.000000e-01 : f32
    %37 = vector.broadcast %cst_22 : f32 to vector<8x128xf32>
    %38 = arith.addf %36, %37 : vector<8x128xf32>
    %39 = vector.extract_strided_slice %22 {offsets = [0, 256], sizes = [8, 128], strides = [1, 1]} : vector<8x512xf32> to vector<8x128xf32>
    %40 = math.tanh %39 : vector<8x128xf32>
    %41 = vector.extract_strided_slice %22 {offsets = [0, 384], sizes = [8, 128], strides = [1, 1]} : vector<8x512xf32> to vector<8x128xf32>
    %cst_23 = arith.constant 5.000000e-01 : f32
    %42 = vector.broadcast %cst_23 : f32 to vector<8x128xf32>
    %43 = arith.mulf %42, %41 : vector<8x128xf32>
    %44 = math.tanh %43 : vector<8x128xf32>
    %cst_24 = arith.constant 5.000000e-01 : f32
    %45 = vector.broadcast %cst_24 : f32 to vector<8x128xf32>
    %46 = arith.mulf %45, %44 : vector<8x128xf32>
    %cst_25 = arith.constant 5.000000e-01 : f32
    %47 = vector.broadcast %cst_25 : f32 to vector<8x128xf32>
    %48 = arith.addf %46, %47 : vector<8x128xf32>
    %49 = arith.mulf %38, %16 : vector<8x128xf32>
    %50 = arith.mulf %30, %40 : vector<8x128xf32>
    %51 = arith.addf %49, %50 : vector<8x128xf32>
    %52 = math.tanh %51 : vector<8x128xf32>
    %53 = arith.mulf %48, %52 : vector<8x128xf32>
    %54 = vector.broadcast %c0_i32 : i32 to vector<8x1xi32>
    %55 = arith.cmpi slt, %54, %9 : vector<8x1xi32>
    %56 = arith.extui %55 : vector<8x1xi1> to vector<8x1xi32>
    %57 = arith.sitofp %56 : vector<8x1xi32> to vector<8x1xf32>
    %58 = vector.broadcast %c0_i32 : i32 to vector<8x1xi32>
    %59 = arith.cmpi sge, %58, %11 : vector<8x1xi32>
    %60 = arith.extui %59 : vector<8x1xi1> to vector<8x1xi32>
    %61 = arith.sitofp %60 : vector<8x1xi32> to vector<8x1xf32>
    %62 = vector.shape_cast %14 : vector<1x128xi1> to vector<1x128xi1>
    %63 = vector.broadcast %62 : vector<1x128xi1> to vector<8x128xi1>
    %64 = vector.shape_cast %57 : vector<8x1xf32> to vector<8x1xf32>
    %65 = vector.broadcast %64 : vector<8x1xf32> to vector<8x128xf32>
    %66 = vector.shape_cast %61 : vector<8x1xf32> to vector<8x1xf32>
    %67 = vector.broadcast %66 : vector<8x1xf32> to vector<8x128xf32>
    %68 = arith.select %63, %65, %67 : vector<8x128xi1>, vector<8x128xf32>
    %cst_26 = arith.constant 0.000000e+00 : f32
    %69 = vector.broadcast %cst_26 : f32 to vector<8x128xf32>
    %70 = arith.cmpf ogt, %68, %69 : vector<8x128xf32>
    %71 = arith.select %70, %53, %15 : vector<8x128xi1>, vector<8x128xf32>
    %72 = arith.select %70, %51, %16 : vector<8x128xi1>, vector<8x128xf32>
    %c1_i32 = arith.constant 1 : i32
    %73 = arith.index_cast %c1_i32 : i32 to index
    %c0_27 = arith.constant 0 : index
    %c0_28 = arith.constant 0 : index
    %74 = vector.load %arg10[%73, %c0_27, %c0_28] : memref<12x8x512xf32, #tpu.memory_space<vmem>>, vector<1x8x512xf32>
    %75 = vector.shape_cast %74 : vector<1x8x512xf32> to vector<8x512xf32>
    %76 = arith.truncf %71 : vector<8x128xf32> to vector<8x128xbf16>
    %cst_29 = arith.constant dense<0.000000e+00> : vector<8x512xf32>
    %77 = tpu.matmul %76, %8, %cst_29 {dimension_numbers = #tpu.dot_dimension_numbers<[1], [0], [0], [1], [0, 0, 1, 1], [], []>} : vector<8x128xbf16>, vector<128x512xbf16>, vector<8x512xf32> -> vector<8x512xf32>
    %78 = arith.addf %75, %77 : vector<8x512xf32>
    %79 = vector.extract_strided_slice %78 {offsets = [0, 0], sizes = [8, 128], strides = [1, 1]} : vector<8x512xf32> to vector<8x128xf32>
    %cst_30 = arith.constant 5.000000e-01 : f32
    %80 = vector.broadcast %cst_30 : f32 to vector<8x128xf32>
    %81 = arith.mulf %80, %79 : vector<8x128xf32>
    %82 = math.tanh %81 : vector<8x128xf32>
    %cst_31 = arith.constant 5.000000e-01 : f32
    %83 = vector.broadcast %cst_31 : f32 to vector<8x128xf32>
    %84 = arith.mulf %83, %82 : vector<8x128xf32>
    %cst_32 = arith.constant 5.000000e-01 : f32
    %85 = vector.broadcast %cst_32 : f32 to vector<8x128xf32>
    %86 = arith.addf %84, %85 : vector<8x128xf32>
    %87 = vector.extract_strided_slice %78 {offsets = [0, 128], sizes = [8, 128], strides = [1, 1]} : vector<8x512xf32> to vector<8x128xf32>
    %cst_33 = arith.constant 5.000000e-01 : f32
    %88 = vector.broadcast %cst_33 : f32 to vector<8x128xf32>
    %89 = arith.mulf %88, %87 : vector<8x128xf32>
    %90 = math.tanh %89 : vector<8x128xf32>
    %cst_34 = arith.constant 5.000000e-01 : f32
    %91 = vector.broadcast %cst_34 : f32 to vector<8x128xf32>
    %92 = arith.mulf %91, %90 : vector<8x128xf32>
    %cst_35 = arith.constant 5.000000e-01 : f32
    %93 = vector.broadcast %cst_35 : f32 to vector<8x128xf32>
    %94 = arith.addf %92, %93 : vector<8x128xf32>
    %95 = vector.extract_strided_slice %78 {offsets = [0, 256], sizes = [8, 128], strides = [1, 1]} : vector<8x512xf32> to vector<8x128xf32>
    %96 = math.tanh %95 : vector<8x128xf32>
    %97 = vector.extract_strided_slice %78 {offsets = [0, 384], sizes = [8, 128], strides = [1, 1]} : vector<8x512xf32> to vector<8x128xf32>
    %cst_36 = arith.constant 5.000000e-01 : f32
    %98 = vector.broadcast %cst_36 : f32 to vector<8x128xf32>
    %99 = arith.mulf %98, %97 : vector<8x128xf32>
    %100 = math.tanh %99 : vector<8x128xf32>
    %cst_37 = arith.constant 5.000000e-01 : f32
    %101 = vector.broadcast %cst_37 : f32 to vector<8x128xf32>
    %102 = arith.mulf %101, %100 : vector<8x128xf32>
    %cst_38 = arith.constant 5.000000e-01 : f32
    %103 = vector.broadcast %cst_38 : f32 to vector<8x128xf32>
    %104 = arith.addf %102, %103 : vector<8x128xf32>
    %105 = arith.mulf %94, %72 : vector<8x128xf32>
    %106 = arith.mulf %86, %96 : vector<8x128xf32>
    %107 = arith.addf %105, %106 : vector<8x128xf32>
    %108 = math.tanh %107 : vector<8x128xf32>
    %109 = arith.mulf %104, %108 : vector<8x128xf32>
    %110 = vector.broadcast %c1_i32 : i32 to vector<8x1xi32>
    %111 = arith.cmpi slt, %110, %9 : vector<8x1xi32>
    %112 = arith.extui %111 : vector<8x1xi1> to vector<8x1xi32>
    %113 = arith.sitofp %112 : vector<8x1xi32> to vector<8x1xf32>
    %114 = vector.broadcast %c1_i32 : i32 to vector<8x1xi32>
    %115 = arith.cmpi sge, %114, %11 : vector<8x1xi32>
    %116 = arith.extui %115 : vector<8x1xi1> to vector<8x1xi32>
    %117 = arith.sitofp %116 : vector<8x1xi32> to vector<8x1xf32>
    %118 = vector.shape_cast %14 : vector<1x128xi1> to vector<1x128xi1>
    %119 = vector.broadcast %118 : vector<1x128xi1> to vector<8x128xi1>
    %120 = vector.shape_cast %113 : vector<8x1xf32> to vector<8x1xf32>
    %121 = vector.broadcast %120 : vector<8x1xf32> to vector<8x128xf32>
    %122 = vector.shape_cast %117 : vector<8x1xf32> to vector<8x1xf32>
    %123 = vector.broadcast %122 : vector<8x1xf32> to vector<8x128xf32>
    %124 = arith.select %119, %121, %123 : vector<8x128xi1>, vector<8x128xf32>
    %cst_39 = arith.constant 0.000000e+00 : f32
    %125 = vector.broadcast %cst_39 : f32 to vector<8x128xf32>
    %126 = arith.cmpf ogt, %124, %125 : vector<8x128xf32>
    %127 = arith.select %126, %109, %71 : vector<8x128xi1>, vector<8x128xf32>
    %128 = arith.select %126, %107, %72 : vector<8x128xi1>, vector<8x128xf32>
    %c2_i32 = arith.constant 2 : i32
    %129 = arith.index_cast %c2_i32 : i32 to index
    %c0_40 = arith.constant 0 : index
    %c0_41 = arith.constant 0 : index
    %130 = vector.load %arg10[%129, %c0_40, %c0_41] : memref<12x8x512xf32, #tpu.memory_space<vmem>>, vector<1x8x512xf32>
    %131 = vector.shape_cast %130 : vector<1x8x512xf32> to vector<8x512xf32>
    %132 = arith.truncf %127 : vector<8x128xf32> to vector<8x128xbf16>
    %cst_42 = arith.constant dense<0.000000e+00> : vector<8x512xf32>
    %133 = tpu.matmul %132, %8, %cst_42 {dimension_numbers = #tpu.dot_dimension_numbers<[1], [0], [0], [1], [0, 0, 1, 1], [], []>} : vector<8x128xbf16>, vector<128x512xbf16>, vector<8x512xf32> -> vector<8x512xf32>
    %134 = arith.addf %131, %133 : vector<8x512xf32>
    %135 = vector.extract_strided_slice %134 {offsets = [0, 0], sizes = [8, 128], strides = [1, 1]} : vector<8x512xf32> to vector<8x128xf32>
    %cst_43 = arith.constant 5.000000e-01 : f32
    %136 = vector.broadcast %cst_43 : f32 to vector<8x128xf32>
    %137 = arith.mulf %136, %135 : vector<8x128xf32>
    %138 = math.tanh %137 : vector<8x128xf32>
    %cst_44 = arith.constant 5.000000e-01 : f32
    %139 = vector.broadcast %cst_44 : f32 to vector<8x128xf32>
    %140 = arith.mulf %139, %138 : vector<8x128xf32>
    %cst_45 = arith.constant 5.000000e-01 : f32
    %141 = vector.broadcast %cst_45 : f32 to vector<8x128xf32>
    %142 = arith.addf %140, %141 : vector<8x128xf32>
    %143 = vector.extract_strided_slice %134 {offsets = [0, 128], sizes = [8, 128], strides = [1, 1]} : vector<8x512xf32> to vector<8x128xf32>
    %cst_46 = arith.constant 5.000000e-01 : f32
    %144 = vector.broadcast %cst_46 : f32 to vector<8x128xf32>
    %145 = arith.mulf %144, %143 : vector<8x128xf32>
    %146 = math.tanh %145 : vector<8x128xf32>
    %cst_47 = arith.constant 5.000000e-01 : f32
    %147 = vector.broadcast %cst_47 : f32 to vector<8x128xf32>
    %148 = arith.mulf %147, %146 : vector<8x128xf32>
    %cst_48 = arith.constant 5.000000e-01 : f32
    %149 = vector.broadcast %cst_48 : f32 to vector<8x128xf32>
    %150 = arith.addf %148, %149 : vector<8x128xf32>
    %151 = vector.extract_strided_slice %134 {offsets = [0, 256], sizes = [8, 128], strides = [1, 1]} : vector<8x512xf32> to vector<8x128xf32>
    %152 = math.tanh %151 : vector<8x128xf32>
    %153 = vector.extract_strided_slice %134 {offsets = [0, 384], sizes = [8, 128], strides = [1, 1]} : vector<8x512xf32> to vector<8x128xf32>
    %cst_49 = arith.constant 5.000000e-01 : f32
    %154 = vector.broadcast %cst_49 : f32 to vector<8x128xf32>
    %155 = arith.mulf %154, %153 : vector<8x128xf32>
    %156 = math.tanh %155 : vector<8x128xf32>
    %cst_50 = arith.constant 5.000000e-01 : f32
    %157 = vector.broadcast %cst_50 : f32 to vector<8x128xf32>
    %158 = arith.mulf %157, %156 : vector<8x128xf32>
    %cst_51 = arith.constant 5.000000e-01 : f32
    %159 = vector.broadcast %cst_51 : f32 to vector<8x128xf32>
    %160 = arith.addf %158, %159 : vector<8x128xf32>
    %161 = arith.mulf %150, %128 : vector<8x128xf32>
    %162 = arith.mulf %142, %152 : vector<8x128xf32>
    %163 = arith.addf %161, %162 : vector<8x128xf32>
    %164 = math.tanh %163 : vector<8x128xf32>
    %165 = arith.mulf %160, %164 : vector<8x128xf32>
    %166 = vector.broadcast %c2_i32 : i32 to vector<8x1xi32>
    %167 = arith.cmpi slt, %166, %9 : vector<8x1xi32>
    %168 = arith.extui %167 : vector<8x1xi1> to vector<8x1xi32>
    %169 = arith.sitofp %168 : vector<8x1xi32> to vector<8x1xf32>
    %170 = vector.broadcast %c2_i32 : i32 to vector<8x1xi32>
    %171 = arith.cmpi sge, %170, %11 : vector<8x1xi32>
    %172 = arith.extui %171 : vector<8x1xi1> to vector<8x1xi32>
    %173 = arith.sitofp %172 : vector<8x1xi32> to vector<8x1xf32>
    %174 = vector.shape_cast %14 : vector<1x128xi1> to vector<1x128xi1>
    %175 = vector.broadcast %174 : vector<1x128xi1> to vector<8x128xi1>
    %176 = vector.shape_cast %169 : vector<8x1xf32> to vector<8x1xf32>
    %177 = vector.broadcast %176 : vector<8x1xf32> to vector<8x128xf32>
    %178 = vector.shape_cast %173 : vector<8x1xf32> to vector<8x1xf32>
    %179 = vector.broadcast %178 : vector<8x1xf32> to vector<8x128xf32>
    %180 = arith.select %175, %177, %179 : vector<8x128xi1>, vector<8x128xf32>
    %cst_52 = arith.constant 0.000000e+00 : f32
    %181 = vector.broadcast %cst_52 : f32 to vector<8x128xf32>
    %182 = arith.cmpf ogt, %180, %181 : vector<8x128xf32>
    %183 = arith.select %182, %165, %127 : vector<8x128xi1>, vector<8x128xf32>
    %184 = arith.select %182, %163, %128 : vector<8x128xi1>, vector<8x128xf32>
    %c3_i32 = arith.constant 3 : i32
    %185 = arith.index_cast %c3_i32 : i32 to index
    %c0_53 = arith.constant 0 : index
    %c0_54 = arith.constant 0 : index
    %186 = vector.load %arg10[%185, %c0_53, %c0_54] : memref<12x8x512xf32, #tpu.memory_space<vmem>>, vector<1x8x512xf32>
    %187 = vector.shape_cast %186 : vector<1x8x512xf32> to vector<8x512xf32>
    %188 = arith.truncf %183 : vector<8x128xf32> to vector<8x128xbf16>
    %cst_55 = arith.constant dense<0.000000e+00> : vector<8x512xf32>
    %189 = tpu.matmul %188, %8, %cst_55 {dimension_numbers = #tpu.dot_dimension_numbers<[1], [0], [0], [1], [0, 0, 1, 1], [], []>} : vector<8x128xbf16>, vector<128x512xbf16>, vector<8x512xf32> -> vector<8x512xf32>
    %190 = arith.addf %187, %189 : vector<8x512xf32>
    %191 = vector.extract_strided_slice %190 {offsets = [0, 0], sizes = [8, 128], strides = [1, 1]} : vector<8x512xf32> to vector<8x128xf32>
    %cst_56 = arith.constant 5.000000e-01 : f32
    %192 = vector.broadcast %cst_56 : f32 to vector<8x128xf32>
    %193 = arith.mulf %192, %191 : vector<8x128xf32>
    %194 = math.tanh %193 : vector<8x128xf32>
    %cst_57 = arith.constant 5.000000e-01 : f32
    %195 = vector.broadcast %cst_57 : f32 to vector<8x128xf32>
    %196 = arith.mulf %195, %194 : vector<8x128xf32>
    %cst_58 = arith.constant 5.000000e-01 : f32
    %197 = vector.broadcast %cst_58 : f32 to vector<8x128xf32>
    %198 = arith.addf %196, %197 : vector<8x128xf32>
    %199 = vector.extract_strided_slice %190 {offsets = [0, 128], sizes = [8, 128], strides = [1, 1]} : vector<8x512xf32> to vector<8x128xf32>
    %cst_59 = arith.constant 5.000000e-01 : f32
    %200 = vector.broadcast %cst_59 : f32 to vector<8x128xf32>
    %201 = arith.mulf %200, %199 : vector<8x128xf32>
    %202 = math.tanh %201 : vector<8x128xf32>
    %cst_60 = arith.constant 5.000000e-01 : f32
    %203 = vector.broadcast %cst_60 : f32 to vector<8x128xf32>
    %204 = arith.mulf %203, %202 : vector<8x128xf32>
    %cst_61 = arith.constant 5.000000e-01 : f32
    %205 = vector.broadcast %cst_61 : f32 to vector<8x128xf32>
    %206 = arith.addf %204, %205 : vector<8x128xf32>
    %207 = vector.extract_strided_slice %190 {offsets = [0, 256], sizes = [8, 128], strides = [1, 1]} : vector<8x512xf32> to vector<8x128xf32>
    %208 = math.tanh %207 : vector<8x128xf32>
    %209 = vector.extract_strided_slice %190 {offsets = [0, 384], sizes = [8, 128], strides = [1, 1]} : vector<8x512xf32> to vector<8x128xf32>
    %cst_62 = arith.constant 5.000000e-01 : f32
    %210 = vector.broadcast %cst_62 : f32 to vector<8x128xf32>
    %211 = arith.mulf %210, %209 : vector<8x128xf32>
    %212 = math.tanh %211 : vector<8x128xf32>
    %cst_63 = arith.constant 5.000000e-01 : f32
    %213 = vector.broadcast %cst_63 : f32 to vector<8x128xf32>
    %214 = arith.mulf %213, %212 : vector<8x128xf32>
    %cst_64 = arith.constant 5.000000e-01 : f32
    %215 = vector.broadcast %cst_64 : f32 to vector<8x128xf32>
    %216 = arith.addf %214, %215 : vector<8x128xf32>
    %217 = arith.mulf %206, %184 : vector<8x128xf32>
    %218 = arith.mulf %198, %208 : vector<8x128xf32>
    %219 = arith.addf %217, %218 : vector<8x128xf32>
    %220 = math.tanh %219 : vector<8x128xf32>
    %221 = arith.mulf %216, %220 : vector<8x128xf32>
    %222 = vector.broadcast %c3_i32 : i32 to vector<8x1xi32>
    %223 = arith.cmpi slt, %222, %9 : vector<8x1xi32>
    %224 = arith.extui %223 : vector<8x1xi1> to vector<8x1xi32>
    %225 = arith.sitofp %224 : vector<8x1xi32> to vector<8x1xf32>
    %226 = vector.broadcast %c3_i32 : i32 to vector<8x1xi32>
    %227 = arith.cmpi sge, %226, %11 : vector<8x1xi32>
    %228 = arith.extui %227 : vector<8x1xi1> to vector<8x1xi32>
    %229 = arith.sitofp %228 : vector<8x1xi32> to vector<8x1xf32>
    %230 = vector.shape_cast %14 : vector<1x128xi1> to vector<1x128xi1>
    %231 = vector.broadcast %230 : vector<1x128xi1> to vector<8x128xi1>
    %232 = vector.shape_cast %225 : vector<8x1xf32> to vector<8x1xf32>
    %233 = vector.broadcast %232 : vector<8x1xf32> to vector<8x128xf32>
    %234 = vector.shape_cast %229 : vector<8x1xf32> to vector<8x1xf32>
    %235 = vector.broadcast %234 : vector<8x1xf32> to vector<8x128xf32>
    %236 = arith.select %231, %233, %235 : vector<8x128xi1>, vector<8x128xf32>
    %cst_65 = arith.constant 0.000000e+00 : f32
    %237 = vector.broadcast %cst_65 : f32 to vector<8x128xf32>
    %238 = arith.cmpf ogt, %236, %237 : vector<8x128xf32>
    %239 = arith.select %238, %221, %183 : vector<8x128xi1>, vector<8x128xf32>
    %240 = arith.select %238, %219, %184 : vector<8x128xi1>, vector<8x128xf32>
    %c4_i32 = arith.constant 4 : i32
    %241 = arith.index_cast %c4_i32 : i32 to index
    %c0_66 = arith.constant 0 : index
    %c0_67 = arith.constant 0 : index
    %242 = vector.load %arg10[%241, %c0_66, %c0_67] : memref<12x8x512xf32, #tpu.memory_space<vmem>>, vector<1x8x512xf32>
    %243 = vector.shape_cast %242 : vector<1x8x512xf32> to vector<8x512xf32>
    %244 = arith.truncf %239 : vector<8x128xf32> to vector<8x128xbf16>
    %cst_68 = arith.constant dense<0.000000e+00> : vector<8x512xf32>
    %245 = tpu.matmul %244, %8, %cst_68 {dimension_numbers = #tpu.dot_dimension_numbers<[1], [0], [0], [1], [0, 0, 1, 1], [], []>} : vector<8x128xbf16>, vector<128x512xbf16>, vector<8x512xf32> -> vector<8x512xf32>
    %246 = arith.addf %243, %245 : vector<8x512xf32>
    %247 = vector.extract_strided_slice %246 {offsets = [0, 0], sizes = [8, 128], strides = [1, 1]} : vector<8x512xf32> to vector<8x128xf32>
    %cst_69 = arith.constant 5.000000e-01 : f32
    %248 = vector.broadcast %cst_69 : f32 to vector<8x128xf32>
    %249 = arith.mulf %248, %247 : vector<8x128xf32>
    %250 = math.tanh %249 : vector<8x128xf32>
    %cst_70 = arith.constant 5.000000e-01 : f32
    %251 = vector.broadcast %cst_70 : f32 to vector<8x128xf32>
    %252 = arith.mulf %251, %250 : vector<8x128xf32>
    %cst_71 = arith.constant 5.000000e-01 : f32
    %253 = vector.broadcast %cst_71 : f32 to vector<8x128xf32>
    %254 = arith.addf %252, %253 : vector<8x128xf32>
    %255 = vector.extract_strided_slice %246 {offsets = [0, 128], sizes = [8, 128], strides = [1, 1]} : vector<8x512xf32> to vector<8x128xf32>
    %cst_72 = arith.constant 5.000000e-01 : f32
    %256 = vector.broadcast %cst_72 : f32 to vector<8x128xf32>
    %257 = arith.mulf %256, %255 : vector<8x128xf32>
    %258 = math.tanh %257 : vector<8x128xf32>
    %cst_73 = arith.constant 5.000000e-01 : f32
    %259 = vector.broadcast %cst_73 : f32 to vector<8x128xf32>
    %260 = arith.mulf %259, %258 : vector<8x128xf32>
    %cst_74 = arith.constant 5.000000e-01 : f32
    %261 = vector.broadcast %cst_74 : f32 to vector<8x128xf32>
    %262 = arith.addf %260, %261 : vector<8x128xf32>
    %263 = vector.extract_strided_slice %246 {offsets = [0, 256], sizes = [8, 128], strides = [1, 1]} : vector<8x512xf32> to vector<8x128xf32>
    %264 = math.tanh %263 : vector<8x128xf32>
    %265 = vector.extract_strided_slice %246 {offsets = [0, 384], sizes = [8, 128], strides = [1, 1]} : vector<8x512xf32> to vector<8x128xf32>
    %cst_75 = arith.constant 5.000000e-01 : f32
    %266 = vector.broadcast %cst_75 : f32 to vector<8x128xf32>
    %267 = arith.mulf %266, %265 : vector<8x128xf32>
    %268 = math.tanh %267 : vector<8x128xf32>
    %cst_76 = arith.constant 5.000000e-01 : f32
    %269 = vector.broadcast %cst_76 : f32 to vector<8x128xf32>
    %270 = arith.mulf %269, %268 : vector<8x128xf32>
    %cst_77 = arith.constant 5.000000e-01 : f32
    %271 = vector.broadcast %cst_77 : f32 to vector<8x128xf32>
    %272 = arith.addf %270, %271 : vector<8x128xf32>
    %273 = arith.mulf %262, %240 : vector<8x128xf32>
    %274 = arith.mulf %254, %264 : vector<8x128xf32>
    %275 = arith.addf %273, %274 : vector<8x128xf32>
    %276 = math.tanh %275 : vector<8x128xf32>
    %277 = arith.mulf %272, %276 : vector<8x128xf32>
    %278 = vector.broadcast %c4_i32 : i32 to vector<8x1xi32>
    %279 = arith.cmpi slt, %278, %9 : vector<8x1xi32>
    %280 = arith.extui %279 : vector<8x1xi1> to vector<8x1xi32>
    %281 = arith.sitofp %280 : vector<8x1xi32> to vector<8x1xf32>
    %282 = vector.broadcast %c4_i32 : i32 to vector<8x1xi32>
    %283 = arith.cmpi sge, %282, %11 : vector<8x1xi32>
    %284 = arith.extui %283 : vector<8x1xi1> to vector<8x1xi32>
    %285 = arith.sitofp %284 : vector<8x1xi32> to vector<8x1xf32>
    %286 = vector.shape_cast %14 : vector<1x128xi1> to vector<1x128xi1>
    %287 = vector.broadcast %286 : vector<1x128xi1> to vector<8x128xi1>
    %288 = vector.shape_cast %281 : vector<8x1xf32> to vector<8x1xf32>
    %289 = vector.broadcast %288 : vector<8x1xf32> to vector<8x128xf32>
    %290 = vector.shape_cast %285 : vector<8x1xf32> to vector<8x1xf32>
    %291 = vector.broadcast %290 : vector<8x1xf32> to vector<8x128xf32>
    %292 = arith.select %287, %289, %291 : vector<8x128xi1>, vector<8x128xf32>
    %cst_78 = arith.constant 0.000000e+00 : f32
    %293 = vector.broadcast %cst_78 : f32 to vector<8x128xf32>
    %294 = arith.cmpf ogt, %292, %293 : vector<8x128xf32>
    %295 = arith.select %294, %277, %239 : vector<8x128xi1>, vector<8x128xf32>
    %296 = arith.select %294, %275, %240 : vector<8x128xi1>, vector<8x128xf32>
    %c5_i32 = arith.constant 5 : i32
    %297 = arith.index_cast %c5_i32 : i32 to index
    %c0_79 = arith.constant 0 : index
    %c0_80 = arith.constant 0 : index
    %298 = vector.load %arg10[%297, %c0_79, %c0_80] : memref<12x8x512xf32, #tpu.memory_space<vmem>>, vector<1x8x512xf32>
    %299 = vector.shape_cast %298 : vector<1x8x512xf32> to vector<8x512xf32>
    %300 = arith.truncf %295 : vector<8x128xf32> to vector<8x128xbf16>
    %cst_81 = arith.constant dense<0.000000e+00> : vector<8x512xf32>
    %301 = tpu.matmul %300, %8, %cst_81 {dimension_numbers = #tpu.dot_dimension_numbers<[1], [0], [0], [1], [0, 0, 1, 1], [], []>} : vector<8x128xbf16>, vector<128x512xbf16>, vector<8x512xf32> -> vector<8x512xf32>
    %302 = arith.addf %299, %301 : vector<8x512xf32>
    %303 = vector.extract_strided_slice %302 {offsets = [0, 0], sizes = [8, 128], strides = [1, 1]} : vector<8x512xf32> to vector<8x128xf32>
    %cst_82 = arith.constant 5.000000e-01 : f32
    %304 = vector.broadcast %cst_82 : f32 to vector<8x128xf32>
    %305 = arith.mulf %304, %303 : vector<8x128xf32>
    %306 = math.tanh %305 : vector<8x128xf32>
    %cst_83 = arith.constant 5.000000e-01 : f32
    %307 = vector.broadcast %cst_83 : f32 to vector<8x128xf32>
    %308 = arith.mulf %307, %306 : vector<8x128xf32>
    %cst_84 = arith.constant 5.000000e-01 : f32
    %309 = vector.broadcast %cst_84 : f32 to vector<8x128xf32>
    %310 = arith.addf %308, %309 : vector<8x128xf32>
    %311 = vector.extract_strided_slice %302 {offsets = [0, 128], sizes = [8, 128], strides = [1, 1]} : vector<8x512xf32> to vector<8x128xf32>
    %cst_85 = arith.constant 5.000000e-01 : f32
    %312 = vector.broadcast %cst_85 : f32 to vector<8x128xf32>
    %313 = arith.mulf %312, %311 : vector<8x128xf32>
    %314 = math.tanh %313 : vector<8x128xf32>
    %cst_86 = arith.constant 5.000000e-01 : f32
    %315 = vector.broadcast %cst_86 : f32 to vector<8x128xf32>
    %316 = arith.mulf %315, %314 : vector<8x128xf32>
    %cst_87 = arith.constant 5.000000e-01 : f32
    %317 = vector.broadcast %cst_87 : f32 to vector<8x128xf32>
    %318 = arith.addf %316, %317 : vector<8x128xf32>
    %319 = vector.extract_strided_slice %302 {offsets = [0, 256], sizes = [8, 128], strides = [1, 1]} : vector<8x512xf32> to vector<8x128xf32>
    %320 = math.tanh %319 : vector<8x128xf32>
    %321 = vector.extract_strided_slice %302 {offsets = [0, 384], sizes = [8, 128], strides = [1, 1]} : vector<8x512xf32> to vector<8x128xf32>
    %cst_88 = arith.constant 5.000000e-01 : f32
    %322 = vector.broadcast %cst_88 : f32 to vector<8x128xf32>
    %323 = arith.mulf %322, %321 : vector<8x128xf32>
    %324 = math.tanh %323 : vector<8x128xf32>
    %cst_89 = arith.constant 5.000000e-01 : f32
    %325 = vector.broadcast %cst_89 : f32 to vector<8x128xf32>
    %326 = arith.mulf %325, %324 : vector<8x128xf32>
    %cst_90 = arith.constant 5.000000e-01 : f32
    %327 = vector.broadcast %cst_90 : f32 to vector<8x128xf32>
    %328 = arith.addf %326, %327 : vector<8x128xf32>
    %329 = arith.mulf %318, %296 : vector<8x128xf32>
    %330 = arith.mulf %310, %320 : vector<8x128xf32>
    %331 = arith.addf %329, %330 : vector<8x128xf32>
    %332 = math.tanh %331 : vector<8x128xf32>
    %333 = arith.mulf %328, %332 : vector<8x128xf32>
    %334 = vector.broadcast %c5_i32 : i32 to vector<8x1xi32>
    %335 = arith.cmpi slt, %334, %9 : vector<8x1xi32>
    %336 = arith.extui %335 : vector<8x1xi1> to vector<8x1xi32>
    %337 = arith.sitofp %336 : vector<8x1xi32> to vector<8x1xf32>
    %338 = vector.broadcast %c5_i32 : i32 to vector<8x1xi32>
    %339 = arith.cmpi sge, %338, %11 : vector<8x1xi32>
    %340 = arith.extui %339 : vector<8x1xi1> to vector<8x1xi32>
    %341 = arith.sitofp %340 : vector<8x1xi32> to vector<8x1xf32>
    %342 = vector.shape_cast %14 : vector<1x128xi1> to vector<1x128xi1>
    %343 = vector.broadcast %342 : vector<1x128xi1> to vector<8x128xi1>
    %344 = vector.shape_cast %337 : vector<8x1xf32> to vector<8x1xf32>
    %345 = vector.broadcast %344 : vector<8x1xf32> to vector<8x128xf32>
    %346 = vector.shape_cast %341 : vector<8x1xf32> to vector<8x1xf32>
    %347 = vector.broadcast %346 : vector<8x1xf32> to vector<8x128xf32>
    %348 = arith.select %343, %345, %347 : vector<8x128xi1>, vector<8x128xf32>
    %cst_91 = arith.constant 0.000000e+00 : f32
    %349 = vector.broadcast %cst_91 : f32 to vector<8x128xf32>
    %350 = arith.cmpf ogt, %348, %349 : vector<8x128xf32>
    %351 = arith.select %350, %333, %295 : vector<8x128xi1>, vector<8x128xf32>
    %352 = arith.select %350, %331, %296 : vector<8x128xi1>, vector<8x128xf32>
    %c6_i32 = arith.constant 6 : i32
    %353 = arith.index_cast %c6_i32 : i32 to index
    %c0_92 = arith.constant 0 : index
    %c0_93 = arith.constant 0 : index
    %354 = vector.load %arg10[%353, %c0_92, %c0_93] : memref<12x8x512xf32, #tpu.memory_space<vmem>>, vector<1x8x512xf32>
    %355 = vector.shape_cast %354 : vector<1x8x512xf32> to vector<8x512xf32>
    %356 = arith.truncf %351 : vector<8x128xf32> to vector<8x128xbf16>
    %cst_94 = arith.constant dense<0.000000e+00> : vector<8x512xf32>
    %357 = tpu.matmul %356, %8, %cst_94 {dimension_numbers = #tpu.dot_dimension_numbers<[1], [0], [0], [1], [0, 0, 1, 1], [], []>} : vector<8x128xbf16>, vector<128x512xbf16>, vector<8x512xf32> -> vector<8x512xf32>
    %358 = arith.addf %355, %357 : vector<8x512xf32>
    %359 = vector.extract_strided_slice %358 {offsets = [0, 0], sizes = [8, 128], strides = [1, 1]} : vector<8x512xf32> to vector<8x128xf32>
    %cst_95 = arith.constant 5.000000e-01 : f32
    %360 = vector.broadcast %cst_95 : f32 to vector<8x128xf32>
    %361 = arith.mulf %360, %359 : vector<8x128xf32>
    %362 = math.tanh %361 : vector<8x128xf32>
    %cst_96 = arith.constant 5.000000e-01 : f32
    %363 = vector.broadcast %cst_96 : f32 to vector<8x128xf32>
    %364 = arith.mulf %363, %362 : vector<8x128xf32>
    %cst_97 = arith.constant 5.000000e-01 : f32
    %365 = vector.broadcast %cst_97 : f32 to vector<8x128xf32>
    %366 = arith.addf %364, %365 : vector<8x128xf32>
    %367 = vector.extract_strided_slice %358 {offsets = [0, 128], sizes = [8, 128], strides = [1, 1]} : vector<8x512xf32> to vector<8x128xf32>
    %cst_98 = arith.constant 5.000000e-01 : f32
    %368 = vector.broadcast %cst_98 : f32 to vector<8x128xf32>
    %369 = arith.mulf %368, %367 : vector<8x128xf32>
    %370 = math.tanh %369 : vector<8x128xf32>
    %cst_99 = arith.constant 5.000000e-01 : f32
    %371 = vector.broadcast %cst_99 : f32 to vector<8x128xf32>
    %372 = arith.mulf %371, %370 : vector<8x128xf32>
    %cst_100 = arith.constant 5.000000e-01 : f32
    %373 = vector.broadcast %cst_100 : f32 to vector<8x128xf32>
    %374 = arith.addf %372, %373 : vector<8x128xf32>
    %375 = vector.extract_strided_slice %358 {offsets = [0, 256], sizes = [8, 128], strides = [1, 1]} : vector<8x512xf32> to vector<8x128xf32>
    %376 = math.tanh %375 : vector<8x128xf32>
    %377 = vector.extract_strided_slice %358 {offsets = [0, 384], sizes = [8, 128], strides = [1, 1]} : vector<8x512xf32> to vector<8x128xf32>
    %cst_101 = arith.constant 5.000000e-01 : f32
    %378 = vector.broadcast %cst_101 : f32 to vector<8x128xf32>
    %379 = arith.mulf %378, %377 : vector<8x128xf32>
    %380 = math.tanh %379 : vector<8x128xf32>
    %cst_102 = arith.constant 5.000000e-01 : f32
    %381 = vector.broadcast %cst_102 : f32 to vector<8x128xf32>
    %382 = arith.mulf %381, %380 : vector<8x128xf32>
    %cst_103 = arith.constant 5.000000e-01 : f32
    %383 = vector.broadcast %cst_103 : f32 to vector<8x128xf32>
    %384 = arith.addf %382, %383 : vector<8x128xf32>
    %385 = arith.mulf %374, %352 : vector<8x128xf32>
    %386 = arith.mulf %366, %376 : vector<8x128xf32>
    %387 = arith.addf %385, %386 : vector<8x128xf32>
    %388 = math.tanh %387 : vector<8x128xf32>
    %389 = arith.mulf %384, %388 : vector<8x128xf32>
    %390 = vector.broadcast %c6_i32 : i32 to vector<8x1xi32>
    %391 = arith.cmpi slt, %390, %9 : vector<8x1xi32>
    %392 = arith.extui %391 : vector<8x1xi1> to vector<8x1xi32>
    %393 = arith.sitofp %392 : vector<8x1xi32> to vector<8x1xf32>
    %394 = vector.broadcast %c6_i32 : i32 to vector<8x1xi32>
    %395 = arith.cmpi sge, %394, %11 : vector<8x1xi32>
    %396 = arith.extui %395 : vector<8x1xi1> to vector<8x1xi32>
    %397 = arith.sitofp %396 : vector<8x1xi32> to vector<8x1xf32>
    %398 = vector.shape_cast %14 : vector<1x128xi1> to vector<1x128xi1>
    %399 = vector.broadcast %398 : vector<1x128xi1> to vector<8x128xi1>
    %400 = vector.shape_cast %393 : vector<8x1xf32> to vector<8x1xf32>
    %401 = vector.broadcast %400 : vector<8x1xf32> to vector<8x128xf32>
    %402 = vector.shape_cast %397 : vector<8x1xf32> to vector<8x1xf32>
    %403 = vector.broadcast %402 : vector<8x1xf32> to vector<8x128xf32>
    %404 = arith.select %399, %401, %403 : vector<8x128xi1>, vector<8x128xf32>
    %cst_104 = arith.constant 0.000000e+00 : f32
    %405 = vector.broadcast %cst_104 : f32 to vector<8x128xf32>
    %406 = arith.cmpf ogt, %404, %405 : vector<8x128xf32>
    %407 = arith.select %406, %389, %351 : vector<8x128xi1>, vector<8x128xf32>
    %408 = arith.select %406, %387, %352 : vector<8x128xi1>, vector<8x128xf32>
    %c7_i32 = arith.constant 7 : i32
    %409 = arith.index_cast %c7_i32 : i32 to index
    %c0_105 = arith.constant 0 : index
    %c0_106 = arith.constant 0 : index
    %410 = vector.load %arg10[%409, %c0_105, %c0_106] : memref<12x8x512xf32, #tpu.memory_space<vmem>>, vector<1x8x512xf32>
    %411 = vector.shape_cast %410 : vector<1x8x512xf32> to vector<8x512xf32>
    %412 = arith.truncf %407 : vector<8x128xf32> to vector<8x128xbf16>
    %cst_107 = arith.constant dense<0.000000e+00> : vector<8x512xf32>
    %413 = tpu.matmul %412, %8, %cst_107 {dimension_numbers = #tpu.dot_dimension_numbers<[1], [0], [0], [1], [0, 0, 1, 1], [], []>} : vector<8x128xbf16>, vector<128x512xbf16>, vector<8x512xf32> -> vector<8x512xf32>
    %414 = arith.addf %411, %413 : vector<8x512xf32>
    %415 = vector.extract_strided_slice %414 {offsets = [0, 0], sizes = [8, 128], strides = [1, 1]} : vector<8x512xf32> to vector<8x128xf32>
    %cst_108 = arith.constant 5.000000e-01 : f32
    %416 = vector.broadcast %cst_108 : f32 to vector<8x128xf32>
    %417 = arith.mulf %416, %415 : vector<8x128xf32>
    %418 = math.tanh %417 : vector<8x128xf32>
    %cst_109 = arith.constant 5.000000e-01 : f32
    %419 = vector.broadcast %cst_109 : f32 to vector<8x128xf32>
    %420 = arith.mulf %419, %418 : vector<8x128xf32>
    %cst_110 = arith.constant 5.000000e-01 : f32
    %421 = vector.broadcast %cst_110 : f32 to vector<8x128xf32>
    %422 = arith.addf %420, %421 : vector<8x128xf32>
    %423 = vector.extract_strided_slice %414 {offsets = [0, 128], sizes = [8, 128], strides = [1, 1]} : vector<8x512xf32> to vector<8x128xf32>
    %cst_111 = arith.constant 5.000000e-01 : f32
    %424 = vector.broadcast %cst_111 : f32 to vector<8x128xf32>
    %425 = arith.mulf %424, %423 : vector<8x128xf32>
    %426 = math.tanh %425 : vector<8x128xf32>
    %cst_112 = arith.constant 5.000000e-01 : f32
    %427 = vector.broadcast %cst_112 : f32 to vector<8x128xf32>
    %428 = arith.mulf %427, %426 : vector<8x128xf32>
    %cst_113 = arith.constant 5.000000e-01 : f32
    %429 = vector.broadcast %cst_113 : f32 to vector<8x128xf32>
    %430 = arith.addf %428, %429 : vector<8x128xf32>
    %431 = vector.extract_strided_slice %414 {offsets = [0, 256], sizes = [8, 128], strides = [1, 1]} : vector<8x512xf32> to vector<8x128xf32>
    %432 = math.tanh %431 : vector<8x128xf32>
    %433 = vector.extract_strided_slice %414 {offsets = [0, 384], sizes = [8, 128], strides = [1, 1]} : vector<8x512xf32> to vector<8x128xf32>
    %cst_114 = arith.constant 5.000000e-01 : f32
    %434 = vector.broadcast %cst_114 : f32 to vector<8x128xf32>
    %435 = arith.mulf %434, %433 : vector<8x128xf32>
    %436 = math.tanh %435 : vector<8x128xf32>
    %cst_115 = arith.constant 5.000000e-01 : f32
    %437 = vector.broadcast %cst_115 : f32 to vector<8x128xf32>
    %438 = arith.mulf %437, %436 : vector<8x128xf32>
    %cst_116 = arith.constant 5.000000e-01 : f32
    %439 = vector.broadcast %cst_116 : f32 to vector<8x128xf32>
    %440 = arith.addf %438, %439 : vector<8x128xf32>
    %441 = arith.mulf %430, %408 : vector<8x128xf32>
    %442 = arith.mulf %422, %432 : vector<8x128xf32>
    %443 = arith.addf %441, %442 : vector<8x128xf32>
    %444 = math.tanh %443 : vector<8x128xf32>
    %445 = arith.mulf %440, %444 : vector<8x128xf32>
    %446 = vector.broadcast %c7_i32 : i32 to vector<8x1xi32>
    %447 = arith.cmpi slt, %446, %9 : vector<8x1xi32>
    %448 = arith.extui %447 : vector<8x1xi1> to vector<8x1xi32>
    %449 = arith.sitofp %448 : vector<8x1xi32> to vector<8x1xf32>
    %450 = vector.broadcast %c7_i32 : i32 to vector<8x1xi32>
    %451 = arith.cmpi sge, %450, %11 : vector<8x1xi32>
    %452 = arith.extui %451 : vector<8x1xi1> to vector<8x1xi32>
    %453 = arith.sitofp %452 : vector<8x1xi32> to vector<8x1xf32>
    %454 = vector.shape_cast %14 : vector<1x128xi1> to vector<1x128xi1>
    %455 = vector.broadcast %454 : vector<1x128xi1> to vector<8x128xi1>
    %456 = vector.shape_cast %449 : vector<8x1xf32> to vector<8x1xf32>
    %457 = vector.broadcast %456 : vector<8x1xf32> to vector<8x128xf32>
    %458 = vector.shape_cast %453 : vector<8x1xf32> to vector<8x1xf32>
    %459 = vector.broadcast %458 : vector<8x1xf32> to vector<8x128xf32>
    %460 = arith.select %455, %457, %459 : vector<8x128xi1>, vector<8x128xf32>
    %cst_117 = arith.constant 0.000000e+00 : f32
    %461 = vector.broadcast %cst_117 : f32 to vector<8x128xf32>
    %462 = arith.cmpf ogt, %460, %461 : vector<8x128xf32>
    %463 = arith.select %462, %445, %407 : vector<8x128xi1>, vector<8x128xf32>
    %464 = arith.select %462, %443, %408 : vector<8x128xi1>, vector<8x128xf32>
    %c8_i32 = arith.constant 8 : i32
    %465 = arith.index_cast %c8_i32 : i32 to index
    %c0_118 = arith.constant 0 : index
    %c0_119 = arith.constant 0 : index
    %466 = vector.load %arg10[%465, %c0_118, %c0_119] : memref<12x8x512xf32, #tpu.memory_space<vmem>>, vector<1x8x512xf32>
    %467 = vector.shape_cast %466 : vector<1x8x512xf32> to vector<8x512xf32>
    %468 = arith.truncf %463 : vector<8x128xf32> to vector<8x128xbf16>
    %cst_120 = arith.constant dense<0.000000e+00> : vector<8x512xf32>
    %469 = tpu.matmul %468, %8, %cst_120 {dimension_numbers = #tpu.dot_dimension_numbers<[1], [0], [0], [1], [0, 0, 1, 1], [], []>} : vector<8x128xbf16>, vector<128x512xbf16>, vector<8x512xf32> -> vector<8x512xf32>
    %470 = arith.addf %467, %469 : vector<8x512xf32>
    %471 = vector.extract_strided_slice %470 {offsets = [0, 0], sizes = [8, 128], strides = [1, 1]} : vector<8x512xf32> to vector<8x128xf32>
    %cst_121 = arith.constant 5.000000e-01 : f32
    %472 = vector.broadcast %cst_121 : f32 to vector<8x128xf32>
    %473 = arith.mulf %472, %471 : vector<8x128xf32>
    %474 = math.tanh %473 : vector<8x128xf32>
    %cst_122 = arith.constant 5.000000e-01 : f32
    %475 = vector.broadcast %cst_122 : f32 to vector<8x128xf32>
    %476 = arith.mulf %475, %474 : vector<8x128xf32>
    %cst_123 = arith.constant 5.000000e-01 : f32
    %477 = vector.broadcast %cst_123 : f32 to vector<8x128xf32>
    %478 = arith.addf %476, %477 : vector<8x128xf32>
    %479 = vector.extract_strided_slice %470 {offsets = [0, 128], sizes = [8, 128], strides = [1, 1]} : vector<8x512xf32> to vector<8x128xf32>
    %cst_124 = arith.constant 5.000000e-01 : f32
    %480 = vector.broadcast %cst_124 : f32 to vector<8x128xf32>
    %481 = arith.mulf %480, %479 : vector<8x128xf32>
    %482 = math.tanh %481 : vector<8x128xf32>
    %cst_125 = arith.constant 5.000000e-01 : f32
    %483 = vector.broadcast %cst_125 : f32 to vector<8x128xf32>
    %484 = arith.mulf %483, %482 : vector<8x128xf32>
    %cst_126 = arith.constant 5.000000e-01 : f32
    %485 = vector.broadcast %cst_126 : f32 to vector<8x128xf32>
    %486 = arith.addf %484, %485 : vector<8x128xf32>
    %487 = vector.extract_strided_slice %470 {offsets = [0, 256], sizes = [8, 128], strides = [1, 1]} : vector<8x512xf32> to vector<8x128xf32>
    %488 = math.tanh %487 : vector<8x128xf32>
    %489 = vector.extract_strided_slice %470 {offsets = [0, 384], sizes = [8, 128], strides = [1, 1]} : vector<8x512xf32> to vector<8x128xf32>
    %cst_127 = arith.constant 5.000000e-01 : f32
    %490 = vector.broadcast %cst_127 : f32 to vector<8x128xf32>
    %491 = arith.mulf %490, %489 : vector<8x128xf32>
    %492 = math.tanh %491 : vector<8x128xf32>
    %cst_128 = arith.constant 5.000000e-01 : f32
    %493 = vector.broadcast %cst_128 : f32 to vector<8x128xf32>
    %494 = arith.mulf %493, %492 : vector<8x128xf32>
    %cst_129 = arith.constant 5.000000e-01 : f32
    %495 = vector.broadcast %cst_129 : f32 to vector<8x128xf32>
    %496 = arith.addf %494, %495 : vector<8x128xf32>
    %497 = arith.mulf %486, %464 : vector<8x128xf32>
    %498 = arith.mulf %478, %488 : vector<8x128xf32>
    %499 = arith.addf %497, %498 : vector<8x128xf32>
    %500 = math.tanh %499 : vector<8x128xf32>
    %501 = arith.mulf %496, %500 : vector<8x128xf32>
    %502 = vector.broadcast %c8_i32 : i32 to vector<8x1xi32>
    %503 = arith.cmpi slt, %502, %9 : vector<8x1xi32>
    %504 = arith.extui %503 : vector<8x1xi1> to vector<8x1xi32>
    %505 = arith.sitofp %504 : vector<8x1xi32> to vector<8x1xf32>
    %506 = vector.broadcast %c8_i32 : i32 to vector<8x1xi32>
    %507 = arith.cmpi sge, %506, %11 : vector<8x1xi32>
    %508 = arith.extui %507 : vector<8x1xi1> to vector<8x1xi32>
    %509 = arith.sitofp %508 : vector<8x1xi32> to vector<8x1xf32>
    %510 = vector.shape_cast %14 : vector<1x128xi1> to vector<1x128xi1>
    %511 = vector.broadcast %510 : vector<1x128xi1> to vector<8x128xi1>
    %512 = vector.shape_cast %505 : vector<8x1xf32> to vector<8x1xf32>
    %513 = vector.broadcast %512 : vector<8x1xf32> to vector<8x128xf32>
    %514 = vector.shape_cast %509 : vector<8x1xf32> to vector<8x1xf32>
    %515 = vector.broadcast %514 : vector<8x1xf32> to vector<8x128xf32>
    %516 = arith.select %511, %513, %515 : vector<8x128xi1>, vector<8x128xf32>
    %cst_130 = arith.constant 0.000000e+00 : f32
    %517 = vector.broadcast %cst_130 : f32 to vector<8x128xf32>
    %518 = arith.cmpf ogt, %516, %517 : vector<8x128xf32>
    %519 = arith.select %518, %501, %463 : vector<8x128xi1>, vector<8x128xf32>
    %520 = arith.select %518, %499, %464 : vector<8x128xi1>, vector<8x128xf32>
    %c9_i32 = arith.constant 9 : i32
    %521 = arith.index_cast %c9_i32 : i32 to index
    %c0_131 = arith.constant 0 : index
    %c0_132 = arith.constant 0 : index
    %522 = vector.load %arg10[%521, %c0_131, %c0_132] : memref<12x8x512xf32, #tpu.memory_space<vmem>>, vector<1x8x512xf32>
    %523 = vector.shape_cast %522 : vector<1x8x512xf32> to vector<8x512xf32>
    %524 = arith.truncf %519 : vector<8x128xf32> to vector<8x128xbf16>
    %cst_133 = arith.constant dense<0.000000e+00> : vector<8x512xf32>
    %525 = tpu.matmul %524, %8, %cst_133 {dimension_numbers = #tpu.dot_dimension_numbers<[1], [0], [0], [1], [0, 0, 1, 1], [], []>} : vector<8x128xbf16>, vector<128x512xbf16>, vector<8x512xf32> -> vector<8x512xf32>
    %526 = arith.addf %523, %525 : vector<8x512xf32>
    %527 = vector.extract_strided_slice %526 {offsets = [0, 0], sizes = [8, 128], strides = [1, 1]} : vector<8x512xf32> to vector<8x128xf32>
    %cst_134 = arith.constant 5.000000e-01 : f32
    %528 = vector.broadcast %cst_134 : f32 to vector<8x128xf32>
    %529 = arith.mulf %528, %527 : vector<8x128xf32>
    %530 = math.tanh %529 : vector<8x128xf32>
    %cst_135 = arith.constant 5.000000e-01 : f32
    %531 = vector.broadcast %cst_135 : f32 to vector<8x128xf32>
    %532 = arith.mulf %531, %530 : vector<8x128xf32>
    %cst_136 = arith.constant 5.000000e-01 : f32
    %533 = vector.broadcast %cst_136 : f32 to vector<8x128xf32>
    %534 = arith.addf %532, %533 : vector<8x128xf32>
    %535 = vector.extract_strided_slice %526 {offsets = [0, 128], sizes = [8, 128], strides = [1, 1]} : vector<8x512xf32> to vector<8x128xf32>
    %cst_137 = arith.constant 5.000000e-01 : f32
    %536 = vector.broadcast %cst_137 : f32 to vector<8x128xf32>
    %537 = arith.mulf %536, %535 : vector<8x128xf32>
    %538 = math.tanh %537 : vector<8x128xf32>
    %cst_138 = arith.constant 5.000000e-01 : f32
    %539 = vector.broadcast %cst_138 : f32 to vector<8x128xf32>
    %540 = arith.mulf %539, %538 : vector<8x128xf32>
    %cst_139 = arith.constant 5.000000e-01 : f32
    %541 = vector.broadcast %cst_139 : f32 to vector<8x128xf32>
    %542 = arith.addf %540, %541 : vector<8x128xf32>
    %543 = vector.extract_strided_slice %526 {offsets = [0, 256], sizes = [8, 128], strides = [1, 1]} : vector<8x512xf32> to vector<8x128xf32>
    %544 = math.tanh %543 : vector<8x128xf32>
    %545 = vector.extract_strided_slice %526 {offsets = [0, 384], sizes = [8, 128], strides = [1, 1]} : vector<8x512xf32> to vector<8x128xf32>
    %cst_140 = arith.constant 5.000000e-01 : f32
    %546 = vector.broadcast %cst_140 : f32 to vector<8x128xf32>
    %547 = arith.mulf %546, %545 : vector<8x128xf32>
    %548 = math.tanh %547 : vector<8x128xf32>
    %cst_141 = arith.constant 5.000000e-01 : f32
    %549 = vector.broadcast %cst_141 : f32 to vector<8x128xf32>
    %550 = arith.mulf %549, %548 : vector<8x128xf32>
    %cst_142 = arith.constant 5.000000e-01 : f32
    %551 = vector.broadcast %cst_142 : f32 to vector<8x128xf32>
    %552 = arith.addf %550, %551 : vector<8x128xf32>
    %553 = arith.mulf %542, %520 : vector<8x128xf32>
    %554 = arith.mulf %534, %544 : vector<8x128xf32>
    %555 = arith.addf %553, %554 : vector<8x128xf32>
    %556 = math.tanh %555 : vector<8x128xf32>
    %557 = arith.mulf %552, %556 : vector<8x128xf32>
    %558 = vector.broadcast %c9_i32 : i32 to vector<8x1xi32>
    %559 = arith.cmpi slt, %558, %9 : vector<8x1xi32>
    %560 = arith.extui %559 : vector<8x1xi1> to vector<8x1xi32>
    %561 = arith.sitofp %560 : vector<8x1xi32> to vector<8x1xf32>
    %562 = vector.broadcast %c9_i32 : i32 to vector<8x1xi32>
    %563 = arith.cmpi sge, %562, %11 : vector<8x1xi32>
    %564 = arith.extui %563 : vector<8x1xi1> to vector<8x1xi32>
    %565 = arith.sitofp %564 : vector<8x1xi32> to vector<8x1xf32>
    %566 = vector.shape_cast %14 : vector<1x128xi1> to vector<1x128xi1>
    %567 = vector.broadcast %566 : vector<1x128xi1> to vector<8x128xi1>
    %568 = vector.shape_cast %561 : vector<8x1xf32> to vector<8x1xf32>
    %569 = vector.broadcast %568 : vector<8x1xf32> to vector<8x128xf32>
    %570 = vector.shape_cast %565 : vector<8x1xf32> to vector<8x1xf32>
    %571 = vector.broadcast %570 : vector<8x1xf32> to vector<8x128xf32>
    %572 = arith.select %567, %569, %571 : vector<8x128xi1>, vector<8x128xf32>
    %cst_143 = arith.constant 0.000000e+00 : f32
    %573 = vector.broadcast %cst_143 : f32 to vector<8x128xf32>
    %574 = arith.cmpf ogt, %572, %573 : vector<8x128xf32>
    %575 = arith.select %574, %557, %519 : vector<8x128xi1>, vector<8x128xf32>
    %576 = arith.select %574, %555, %520 : vector<8x128xi1>, vector<8x128xf32>
    %c10_i32 = arith.constant 10 : i32
    %577 = arith.index_cast %c10_i32 : i32 to index
    %c0_144 = arith.constant 0 : index
    %c0_145 = arith.constant 0 : index
    %578 = vector.load %arg10[%577, %c0_144, %c0_145] : memref<12x8x512xf32, #tpu.memory_space<vmem>>, vector<1x8x512xf32>
    %579 = vector.shape_cast %578 : vector<1x8x512xf32> to vector<8x512xf32>
    %580 = arith.truncf %575 : vector<8x128xf32> to vector<8x128xbf16>
    %cst_146 = arith.constant dense<0.000000e+00> : vector<8x512xf32>
    %581 = tpu.matmul %580, %8, %cst_146 {dimension_numbers = #tpu.dot_dimension_numbers<[1], [0], [0], [1], [0, 0, 1, 1], [], []>} : vector<8x128xbf16>, vector<128x512xbf16>, vector<8x512xf32> -> vector<8x512xf32>
    %582 = arith.addf %579, %581 : vector<8x512xf32>
    %583 = vector.extract_strided_slice %582 {offsets = [0, 0], sizes = [8, 128], strides = [1, 1]} : vector<8x512xf32> to vector<8x128xf32>
    %cst_147 = arith.constant 5.000000e-01 : f32
    %584 = vector.broadcast %cst_147 : f32 to vector<8x128xf32>
    %585 = arith.mulf %584, %583 : vector<8x128xf32>
    %586 = math.tanh %585 : vector<8x128xf32>
    %cst_148 = arith.constant 5.000000e-01 : f32
    %587 = vector.broadcast %cst_148 : f32 to vector<8x128xf32>
    %588 = arith.mulf %587, %586 : vector<8x128xf32>
    %cst_149 = arith.constant 5.000000e-01 : f32
    %589 = vector.broadcast %cst_149 : f32 to vector<8x128xf32>
    %590 = arith.addf %588, %589 : vector<8x128xf32>
    %591 = vector.extract_strided_slice %582 {offsets = [0, 128], sizes = [8, 128], strides = [1, 1]} : vector<8x512xf32> to vector<8x128xf32>
    %cst_150 = arith.constant 5.000000e-01 : f32
    %592 = vector.broadcast %cst_150 : f32 to vector<8x128xf32>
    %593 = arith.mulf %592, %591 : vector<8x128xf32>
    %594 = math.tanh %593 : vector<8x128xf32>
    %cst_151 = arith.constant 5.000000e-01 : f32
    %595 = vector.broadcast %cst_151 : f32 to vector<8x128xf32>
    %596 = arith.mulf %595, %594 : vector<8x128xf32>
    %cst_152 = arith.constant 5.000000e-01 : f32
    %597 = vector.broadcast %cst_152 : f32 to vector<8x128xf32>
    %598 = arith.addf %596, %597 : vector<8x128xf32>
    %599 = vector.extract_strided_slice %582 {offsets = [0, 256], sizes = [8, 128], strides = [1, 1]} : vector<8x512xf32> to vector<8x128xf32>
    %600 = math.tanh %599 : vector<8x128xf32>
    %601 = vector.extract_strided_slice %582 {offsets = [0, 384], sizes = [8, 128], strides = [1, 1]} : vector<8x512xf32> to vector<8x128xf32>
    %cst_153 = arith.constant 5.000000e-01 : f32
    %602 = vector.broadcast %cst_153 : f32 to vector<8x128xf32>
    %603 = arith.mulf %602, %601 : vector<8x128xf32>
    %604 = math.tanh %603 : vector<8x128xf32>
    %cst_154 = arith.constant 5.000000e-01 : f32
    %605 = vector.broadcast %cst_154 : f32 to vector<8x128xf32>
    %606 = arith.mulf %605, %604 : vector<8x128xf32>
    %cst_155 = arith.constant 5.000000e-01 : f32
    %607 = vector.broadcast %cst_155 : f32 to vector<8x128xf32>
    %608 = arith.addf %606, %607 : vector<8x128xf32>
    %609 = arith.mulf %598, %576 : vector<8x128xf32>
    %610 = arith.mulf %590, %600 : vector<8x128xf32>
    %611 = arith.addf %609, %610 : vector<8x128xf32>
    %612 = math.tanh %611 : vector<8x128xf32>
    %613 = arith.mulf %608, %612 : vector<8x128xf32>
    %614 = vector.broadcast %c10_i32 : i32 to vector<8x1xi32>
    %615 = arith.cmpi slt, %614, %9 : vector<8x1xi32>
    %616 = arith.extui %615 : vector<8x1xi1> to vector<8x1xi32>
    %617 = arith.sitofp %616 : vector<8x1xi32> to vector<8x1xf32>
    %618 = vector.broadcast %c10_i32 : i32 to vector<8x1xi32>
    %619 = arith.cmpi sge, %618, %11 : vector<8x1xi32>
    %620 = arith.extui %619 : vector<8x1xi1> to vector<8x1xi32>
    %621 = arith.sitofp %620 : vector<8x1xi32> to vector<8x1xf32>
    %622 = vector.shape_cast %14 : vector<1x128xi1> to vector<1x128xi1>
    %623 = vector.broadcast %622 : vector<1x128xi1> to vector<8x128xi1>
    %624 = vector.shape_cast %617 : vector<8x1xf32> to vector<8x1xf32>
    %625 = vector.broadcast %624 : vector<8x1xf32> to vector<8x128xf32>
    %626 = vector.shape_cast %621 : vector<8x1xf32> to vector<8x1xf32>
    %627 = vector.broadcast %626 : vector<8x1xf32> to vector<8x128xf32>
    %628 = arith.select %623, %625, %627 : vector<8x128xi1>, vector<8x128xf32>
    %cst_156 = arith.constant 0.000000e+00 : f32
    %629 = vector.broadcast %cst_156 : f32 to vector<8x128xf32>
    %630 = arith.cmpf ogt, %628, %629 : vector<8x128xf32>
    %631 = arith.select %630, %613, %575 : vector<8x128xi1>, vector<8x128xf32>
    %632 = arith.select %630, %611, %576 : vector<8x128xi1>, vector<8x128xf32>
    %c11_i32 = arith.constant 11 : i32
    %633 = arith.index_cast %c11_i32 : i32 to index
    %c0_157 = arith.constant 0 : index
    %c0_158 = arith.constant 0 : index
    %634 = vector.load %arg10[%633, %c0_157, %c0_158] : memref<12x8x512xf32, #tpu.memory_space<vmem>>, vector<1x8x512xf32>
    %635 = vector.shape_cast %634 : vector<1x8x512xf32> to vector<8x512xf32>
    %636 = arith.truncf %631 : vector<8x128xf32> to vector<8x128xbf16>
    %cst_159 = arith.constant dense<0.000000e+00> : vector<8x512xf32>
    %637 = tpu.matmul %636, %8, %cst_159 {dimension_numbers = #tpu.dot_dimension_numbers<[1], [0], [0], [1], [0, 0, 1, 1], [], []>} : vector<8x128xbf16>, vector<128x512xbf16>, vector<8x512xf32> -> vector<8x512xf32>
    %638 = arith.addf %635, %637 : vector<8x512xf32>
    %639 = vector.extract_strided_slice %638 {offsets = [0, 0], sizes = [8, 128], strides = [1, 1]} : vector<8x512xf32> to vector<8x128xf32>
    %cst_160 = arith.constant 5.000000e-01 : f32
    %640 = vector.broadcast %cst_160 : f32 to vector<8x128xf32>
    %641 = arith.mulf %640, %639 : vector<8x128xf32>
    %642 = math.tanh %641 : vector<8x128xf32>
    %cst_161 = arith.constant 5.000000e-01 : f32
    %643 = vector.broadcast %cst_161 : f32 to vector<8x128xf32>
    %644 = arith.mulf %643, %642 : vector<8x128xf32>
    %cst_162 = arith.constant 5.000000e-01 : f32
    %645 = vector.broadcast %cst_162 : f32 to vector<8x128xf32>
    %646 = arith.addf %644, %645 : vector<8x128xf32>
    %647 = vector.extract_strided_slice %638 {offsets = [0, 128], sizes = [8, 128], strides = [1, 1]} : vector<8x512xf32> to vector<8x128xf32>
    %cst_163 = arith.constant 5.000000e-01 : f32
    %648 = vector.broadcast %cst_163 : f32 to vector<8x128xf32>
    %649 = arith.mulf %648, %647 : vector<8x128xf32>
    %650 = math.tanh %649 : vector<8x128xf32>
    %cst_164 = arith.constant 5.000000e-01 : f32
    %651 = vector.broadcast %cst_164 : f32 to vector<8x128xf32>
    %652 = arith.mulf %651, %650 : vector<8x128xf32>
    %cst_165 = arith.constant 5.000000e-01 : f32
    %653 = vector.broadcast %cst_165 : f32 to vector<8x128xf32>
    %654 = arith.addf %652, %653 : vector<8x128xf32>
    %655 = vector.extract_strided_slice %638 {offsets = [0, 256], sizes = [8, 128], strides = [1, 1]} : vector<8x512xf32> to vector<8x128xf32>
    %656 = math.tanh %655 : vector<8x128xf32>
    %657 = vector.extract_strided_slice %638 {offsets = [0, 384], sizes = [8, 128], strides = [1, 1]} : vector<8x512xf32> to vector<8x128xf32>
    %cst_166 = arith.constant 5.000000e-01 : f32
    %658 = vector.broadcast %cst_166 : f32 to vector<8x128xf32>
    %659 = arith.mulf %658, %657 : vector<8x128xf32>
    %660 = math.tanh %659 : vector<8x128xf32>
    %cst_167 = arith.constant 5.000000e-01 : f32
    %661 = vector.broadcast %cst_167 : f32 to vector<8x128xf32>
    %662 = arith.mulf %661, %660 : vector<8x128xf32>
    %cst_168 = arith.constant 5.000000e-01 : f32
    %663 = vector.broadcast %cst_168 : f32 to vector<8x128xf32>
    %664 = arith.addf %662, %663 : vector<8x128xf32>
    %665 = arith.mulf %654, %632 : vector<8x128xf32>
    %666 = arith.mulf %646, %656 : vector<8x128xf32>
    %667 = arith.addf %665, %666 : vector<8x128xf32>
    %668 = math.tanh %667 : vector<8x128xf32>
    %669 = arith.mulf %664, %668 : vector<8x128xf32>
    %670 = vector.broadcast %c11_i32 : i32 to vector<8x1xi32>
    %671 = arith.cmpi slt, %670, %9 : vector<8x1xi32>
    %672 = arith.extui %671 : vector<8x1xi1> to vector<8x1xi32>
    %673 = arith.sitofp %672 : vector<8x1xi32> to vector<8x1xf32>
    %674 = vector.broadcast %c11_i32 : i32 to vector<8x1xi32>
    %675 = arith.cmpi sge, %674, %11 : vector<8x1xi32>
    %676 = arith.extui %675 : vector<8x1xi1> to vector<8x1xi32>
    %677 = arith.sitofp %676 : vector<8x1xi32> to vector<8x1xf32>
    %678 = vector.shape_cast %14 : vector<1x128xi1> to vector<1x128xi1>
    %679 = vector.broadcast %678 : vector<1x128xi1> to vector<8x128xi1>
    %680 = vector.shape_cast %673 : vector<8x1xf32> to vector<8x1xf32>
    %681 = vector.broadcast %680 : vector<8x1xf32> to vector<8x128xf32>
    %682 = vector.shape_cast %677 : vector<8x1xf32> to vector<8x1xf32>
    %683 = vector.broadcast %682 : vector<8x1xf32> to vector<8x128xf32>
    %684 = arith.select %679, %681, %683 : vector<8x128xi1>, vector<8x128xf32>
    %cst_169 = arith.constant 0.000000e+00 : f32
    %685 = vector.broadcast %cst_169 : f32 to vector<8x128xf32>
    %686 = arith.cmpf ogt, %684, %685 : vector<8x128xf32>
    %687 = arith.select %686, %669, %631 : vector<8x128xi1>, vector<8x128xf32>
    %688 = arith.select %686, %667, %632 : vector<8x128xi1>, vector<8x128xf32>
    %c12_i32_170 = arith.constant 12 : i32
    %689 = arith.truncf %687 : vector<8x128xf32> to vector<8x128xbf16>
    %c0_171 = arith.constant 0 : index
    %c0_172 = arith.constant 0 : index
    %690 = vector.load %arg5[%c0_171, %c0_172] : memref<128x128xbf16, #tpu.memory_space<vmem>>, vector<128x128xbf16>
    %cst_173 = arith.constant dense<0.000000e+00> : vector<8x128xf32>
    %691 = tpu.matmul %689, %690, %cst_173 {dimension_numbers = #tpu.dot_dimension_numbers<[1], [0], [0], [1], [0, 0, 1, 1], [], []>} : vector<8x128xbf16>, vector<128x128xbf16>, vector<8x128xf32> -> vector<8x128xf32>
    %c0_174 = arith.constant 0 : index
    %c0_175 = arith.constant 0 : index
    %692 = vector.load %arg6[%c0_174, %c0_175] : memref<1x128xf32, #tpu.memory_space<vmem>>, vector<1x128xf32>
    %693 = vector.broadcast %692 : vector<1x128xf32> to vector<8x128xf32>
    %694 = arith.addf %691, %693 : vector<8x128xf32>
    %cst_176 = arith.constant 0.000000e+00 : f32
    %695 = vector.broadcast %cst_176 : f32 to vector<8x128xf32>
    %696 = arith.maximumf %694, %695 : vector<8x128xf32>
    %697 = arith.truncf %696 : vector<8x128xf32> to vector<8x128xbf16>
    %c0_177 = arith.constant 0 : index
    %c0_178 = arith.constant 0 : index
    %698 = vector.load %arg7[%c0_177, %c0_178] : memref<128x128xbf16, #tpu.memory_space<vmem>>, vector<128x128xbf16>
    %cst_179 = arith.constant dense<0.000000e+00> : vector<8x128xf32>
    %699 = tpu.matmul %697, %698, %cst_179 {dimension_numbers = #tpu.dot_dimension_numbers<[1], [0], [0], [1], [0, 0, 1, 1], [], []>} : vector<8x128xbf16>, vector<128x128xbf16>, vector<8x128xf32> -> vector<8x128xf32>
    %c0_180 = arith.constant 0 : index
    %c0_181 = arith.constant 0 : index
    %700 = vector.load %arg8[%c0_180, %c0_181] : memref<1x128xf32, #tpu.memory_space<vmem>>, vector<1x128xf32>
    %701 = vector.broadcast %700 : vector<1x128xf32> to vector<8x128xf32>
    %702 = arith.addf %699, %701 : vector<8x128xf32>
    %cst_182 = arith.constant 5.000000e-01 : f32
    %703 = vector.broadcast %cst_182 : f32 to vector<8x128xf32>
    %704 = arith.mulf %703, %702 : vector<8x128xf32>
    %705 = math.tanh %704 : vector<8x128xf32>
    %cst_183 = arith.constant 5.000000e-01 : f32
    %706 = vector.broadcast %cst_183 : f32 to vector<8x128xf32>
    %707 = arith.mulf %706, %705 : vector<8x128xf32>
    %cst_184 = arith.constant 5.000000e-01 : f32
    %708 = vector.broadcast %cst_184 : f32 to vector<8x128xf32>
    %709 = arith.addf %707, %708 : vector<8x128xf32>
    %c0_185 = arith.constant 0 : index
    %c0_186 = arith.constant 0 : index
    %710 = vector.load %arg9[%c0_185, %c0_186] : memref<8x128xf32, #tpu.memory_space<vmem>>, vector<8x128xf32>
    tpu.vector_store %arg9[%c0_185, %c0_186], %709 {strides = array<i32>} : memref<8x128xf32, #tpu.memory_space<vmem>>, vector<8x128xf32>,
    return
  }
}

</mosaic_0001>

<llo_original>
// kernel: bidirectional_rnn_forward.1
$region0: #{bidirectional_rnn_forward.1}
  #allocation0 [shape = 'u32[]', space=smem, size = 0x4, offset = 0x4, fixed_abs, tag = 'smem constant byte address 0x4 - core index']
  #allocation1 [shape = 'u32[144,128]{1,0:T(1,128)}', space=vmem, size = 0x12000, scoped, tag = 'internal scratch']
  #allocation2 [shape = 'f32[12,8,512]{2,1,0:T(8,128)}', space=vmem, size = 0x30000, scoped, tag = 'scratch operand']
  %s0 = inlined_call_operand.vmem [shape: s32[8,1], index: 0, kind: input, shape index: {}]
  %s1 = inlined_call_operand.vmem [shape: bf16[96,40], index: 1, kind: input, shape index: {}]
  %s2 = inlined_call_operand.vmem [shape: bf16[40,512], index: 2, kind: input, shape index: {}]
  %s3 = inlined_call_operand.vmem [shape: f32[1,512], index: 3, kind: input, shape index: {}]
  %s4 = inlined_call_operand.vmem [shape: bf16[128,512], index: 4, kind: input, shape index: {}]
  %s5 = inlined_call_operand.vmem [shape: bf16[128,128], index: 5, kind: input, shape index: {}]
  %s6 = inlined_call_operand.vmem [shape: f32[1,128], index: 6, kind: input, shape index: {}]
  %s7 = inlined_call_operand.vmem [shape: bf16[128,128], index: 7, kind: input, shape index: {}]
  %s8 = inlined_call_operand.vmem [shape: f32[1,128], index: 8, kind: input, shape index: {}]
  %s9 = inlined_call_operand.vmem [shape: f32[8,128], index: 9, kind: output, shape index: {}]
  %s10 = sld [smem:[#allocation0]]
  $region46: #{bidirectional_rnn_forward.1} parent=0
    _
  %s12 = ssub.s32 1, %s10
  %s13 = scalar_select 0, %s12, %s10
  // Predicated region
  $region2: #{bidirectional_rnn_forward.1} parent=0 // pred_check
    _
  $region3: #{bidirectional_rnn_forward.1} parent=0 // pred_check_branch
    %15 = sbr.rel (0) target = $region5
  $region4: #{bidirectional_rnn_forward.1} parent=0 // pred_region
    _
  $region5: #{bidirectional_rnn_forward.1} parent=0 // pred_fallthru
    _
  // Predicated region
  $region6: #{bidirectional_rnn_forward.1} parent=0 // pred_check
    _
  $region7: #{bidirectional_rnn_forward.1} parent=0 // pred_check_branch
    %17 = sbr.rel (0) target = $region9
  $region8: #{bidirectional_rnn_forward.1} parent=0 // pred_region
    _
  $region9: #{bidirectional_rnn_forward.1} parent=0 // pred_fallthru
    _
  // Predicated region
  $region10: #{bidirectional_rnn_forward.1} parent=0 // pred_check
    _
  $region11: #{bidirectional_rnn_forward.1} parent=0 // pred_check_branch
    %19 = sbr.rel (0) target = $region13
  $region12: #{bidirectional_rnn_forward.1} parent=0 // pred_region
    _
  $region13: #{bidirectional_rnn_forward.1} parent=0 // pred_fallthru
    _
  // Predicated region
  $region14: #{bidirectional_rnn_forward.1} parent=0 // pred_check
    _
  $region15: #{bidirectional_rnn_forward.1} parent=0 // pred_check_branch
    %21 = sbr.rel (0) target = $region17
  $region16: #{bidirectional_rnn_forward.1} parent=0 // pred_region
    _
  $region17: #{bidirectional_rnn_forward.1} parent=0 // pred_fallthru
    _
  // Predicated region
  $region18: #{bidirectional_rnn_forward.1} parent=0 // pred_check
    _
  $region19: #{bidirectional_rnn_forward.1} parent=0 // pred_check_branch
    %23 = sbr.rel (0) target = $region21
  $region20: #{bidirectional_rnn_forward.1} parent=0 // pred_region
    _
  $region21: #{bidirectional_rnn_forward.1} parent=0 // pred_fallthru
    _
  // Predicated region
  $region22: #{bidirectional_rnn_forward.1} parent=0 // pred_check
    _
  $region23: #{bidirectional_rnn_forward.1} parent=0 // pred_check_branch
    %25 = sbr.rel (0) target = $region25
  $region24: #{bidirectional_rnn_forward.1} parent=0 // pred_region
    _
  $region25: #{bidirectional_rnn_forward.1} parent=0 // pred_fallthru
    _
  // Predicated region
  $region26: #{bidirectional_rnn_forward.1} parent=0 // pred_check
    _
  $region27: #{bidirectional_rnn_forward.1} parent=0 // pred_check_branch
    %27 = sbr.rel (0) target = $region29
  $region28: #{bidirectional_rnn_forward.1} parent=0 // pred_region
    _
  $region29: #{bidirectional_rnn_forward.1} parent=0 // pred_fallthru
    _
  // Predicated region
  $region30: #{bidirectional_rnn_forward.1} parent=0 // pred_check
    _
  $region31: #{bidirectional_rnn_forward.1} parent=0 // pred_check_branch
    %29 = sbr.rel (0) target = $region33
  $region32: #{bidirectional_rnn_forward.1} parent=0 // pred_region
    _
  $region33: #{bidirectional_rnn_forward.1} parent=0 // pred_fallthru
    _
  // Predicated region
  $region34: #{bidirectional_rnn_forward.1} parent=0 // pred_check
    _
  $region35: #{bidirectional_rnn_forward.1} parent=0 // pred_check_branch
    %31 = sbr.rel (0) target = $region37
  $region36: #{bidirectional_rnn_forward.1} parent=0 // pred_region
    _
  $region37: #{bidirectional_rnn_forward.1} parent=0 // pred_fallthru
    _
  %v33 = vld [vmem:[%s1] sm:$0xf]
  %v34 = vld [vmem:[%s1 + $0x4] sm:$0xf]
  %v35 = vld [vmem:[%s1 + $0x8] sm:$0xf]
  %v36 = vld [vmem:[%s1 + $0xc] sm:$0xf]
  %v37 = vld [vmem:[%s1 + $0x10] sm:$0xf]
  %v38 = vld [vmem:[%s1 + $0x14] sm:$0xf]
  %v39 = vld [vmem:[%s1 + $0x18] sm:$0xf]
  %v40 = vld [vmem:[%s1 + $0x1c] sm:$0xf]
  %v41 = vld [vmem:[%s1 + $0x20] sm:$0xf]
  %v42 = vld [vmem:[%s1 + $0x24] sm:$0xf]
  %v43 = vld [vmem:[%s1 + $0x28] sm:$0xf]
  %v44 = vld [vmem:[%s1 + $0x2c] sm:$0xf]
  %v45 = vld [vmem:[%s2] sm:$0xff]
  %v46 = vld [vmem:[%s2 + $0x8] sm:$0xff]
  %v47 = vld [vmem:[%s2 + $0x10] sm:$0xff]
  %v48 = vld [vmem:[%s2 + $0x18] sm:$0xff]
  %v49 = vld [vmem:[%s2 + $0x20] sm:$0xff]
  %v50 = vld [vmem:[%s2 + $0x28] sm:$0xff]
  %v51 = vld [vmem:[%s2 + $0x30] sm:$0xff]
  %v52 = vld [vmem:[%s2 + $0x38] sm:$0xff]
  %v53 = vld [vmem:[%s2 + $0x40] sm:$0xff]
  %v54 = vld [vmem:[%s2 + $0x48] sm:$0xff]
  %v55 = vld [vmem:[%s3] sm:$0xf]
  %v57 = vlaneseq
  %v58 = vshrl.u32 %v57, 7
  %v59 = vsub.s32 0, %v58
  %v60 = vrot.slane %v55, %v59
  %v61 = vlaneseq
  %v62 = vshrl.u32 %v61, 7
  %v63 = vsub.s32 1, %v62
  %v64 = vrot.slane %v55, %v63
  %v65 = vlaneseq
  %v66 = vshrl.u32 %v65, 7
  %v67 = vsub.s32 2, %v66
  %v68 = vrot.slane %v55, %v67
  %v69 = vlaneseq
  %v70 = vshrl.u32 %v69, 7
  %v71 = vsub.s32 3, %v70
  %v72 = vrot.slane %v55, %v71
  %v89 = vunpack.c.l.b16 %v33
  %v90 = vunpack.c.l.b16 %v34
  %v91 = vunpack.c.l.b16 %v35
  %v92 = vunpack.c.l.b16 %v36
  %v93 = vunpack.c.l.b16 %v37
  %v94 = vunpack.c.l.b16 %v38
  %v95 = vunpack.c.l.b16 %v39
  %v96 = vunpack.c.l.b16 %v40
  %v97 = vunpack.c.l.b16 %v41
  %v98 = vunpack.c.l.b16 %v42
  %v99 = vunpack.c.l.b16 %v43
  %v100 = vunpack.c.l.b16 %v44
  %v101 = vpack.c.b16 %v90, %v89
  %v102 = vpack.c.b16 %v92, %v91
  %v103 = vpack.c.b16 %v94, %v93
  %v104 = vpack.c.b16 %v96, %v95
  %v105 = vpack.c.b16 %v98, %v97
  %v106 = vpack.c.b16 %v100, %v99
  %v117 = vunpack.c.l.b16 %v45
  %v118 = vunpack.c.h.b16 %v45
  %v119 = vunpack.c.l.b16 %v46
  %v120 = vunpack.c.h.b16 %v46
  %v121 = vunpack.c.l.b16 %v47
  %v122 = vunpack.c.h.b16 %v47
  %v123 = vunpack.c.l.b16 %v48
  %v124 = vunpack.c.h.b16 %v48
  %v125 = vunpack.c.l.b16 %v49
  %v126 = vunpack.c.h.b16 %v49
  %v127 = vunpack.c.l.b16 %v50
  %v128 = vunpack.c.h.b16 %v50
  %v129 = vunpack.c.l.b16 %v51
  %v130 = vunpack.c.h.b16 %v51
  %v131 = vunpack.c.l.b16 %v52
  %v132 = vunpack.c.h.b16 %v52
  %v133 = vunpack.c.l.b16 %v53
  %v134 = vunpack.c.h.b16 %v53
  %v135 = vunpack.c.l.b16 %v54
  %v136 = vunpack.c.h.b16 %v54
  %v137 = vpack.c.b16 %v121, %v117
  %v138 = vpack.c.b16 %v122, %v118
  %v139 = vpack.c.b16 %v123, %v119
  %v140 = vpack.c.b16 %v124, %v120
  %v141 = vpack.c.b16 %v129, %v125
  %v142 = vpack.c.b16 %v130, %v126
  %v143 = vpack.c.b16 %v131, %v127
  %v144 = vpack.c.b16 %v132, %v128
  %v145 = vpack.c.b16 %v133, %v133
  %v146 = vpack.c.b16 %v134, %v134
  %v147 = vpack.c.b16 %v135, %v135
  %v148 = vpack.c.b16 %v136, %v136
  %vm157 = vcmask 326656
  %v159 = vsel %vm157, %v101, 0
  %v162 = vsel %vm157, %v102, 0
  %v165 = vsel %vm157, %v103, 0
  %v168 = vsel %vm157, %v104, 0
  %v171 = vsel %vm157, %v105, 0
  %v174 = vsel %vm157, %v106, 0
  %vm176 = vcmask 1043456
  %v178 = vsel %vm176, %v145, 0
  %v181 = vsel %vm176, %v146, 0
  %v184 = vsel %vm176, %v147, 0
  %v187 = vsel %vm176, %v148, 0
  %189 = vmatprep.subr.bf16.mxu0 %v138
  %190 = vmatpush1.bf16.msra.mxu0 %v137
  %191 = vmatprep.subr.bf16.mxu0 %v142
  %192 = vmatpush1.bf16.msra.mxu0 %v141
  %193 = vmatprep.subr.bf16.mxu0 %v181
  %194 = vmatpush1.bf16.msra.mxu0 %v178
  %195 = vmatprep.subr.bf16.mxu0 0
  %196 = vmatpush1.bf16.msra.mxu0 0
  %197 = vmatprep.subr.bf16.mxu0 0
  %198 = vmatpush1.bf16.msra.mxu0 0
  %199 = vmatprep.subr.bf16.mxu0 0
  %200 = vmatpush1.bf16.msra.mxu0 0
  %201 = vmatprep.subr.bf16.mxu0 0
  %202 = vmatpush1.bf16.msra.mxu0 0
  %203 = vmatprep.subr.bf16.mxu0 0
  %204 = vmatpush1.bf16.msra.mxu0 0
  %205 = vmatprep.subr.bf16.mxu0 0
  %206 = vmatpush1.bf16.msra.mxu0 0
  %207 = vmatprep.subr.bf16.mxu0 0
  %208 = vmatpush1.bf16.msra.mxu0 0
  %209 = vmatprep.subr.bf16.mxu0 0
  %210 = vmatpush1.bf16.msra.mxu0 0
  %211 = vmatprep.subr.bf16.mxu0 0
  %212 = vmatpush1.bf16.msra.mxu0 0
  %213 = vmatprep.subr.bf16.mxu0 0
  %214 = vmatpush1.bf16.msra.mxu0 0
  %215 = vmatprep.subr.bf16.mxu0 0
  %216 = vmatpush1.bf16.msra.mxu0 0
  %217 = vmatprep.subr.bf16.mxu0 0
  %218 = vmatpush1.bf16.msra.mxu0 0
  %219 = vmatprep.subr.bf16.mxu0 0
  %220 = vmatpush1.bf16.msra.mxu0 0
  %221 = vmatprep.mubr.bf16.mxu0 0
  %222 = vmatmul.mubr.bf16.gmra.mrb[0].mxu0 %v159
  %v223 = vpop.f32.mrb[0].mxu0
  %v224 = vadd.f32 %v60, %v223
  %v225 = vpop.f32.mrb[0].mxu0
  %v226 = vadd.f32 %v64, %v225
  %v227 = vpop.f32.mrb[0].mxu0
  %v228 = vadd.f32 %v60, %v227
  %v229 = vpop.f32.mrb[0].mxu0
  %v230 = vadd.f32 %v64, %v229
  %231 = vmatprep.mubr.bf16.mxu0 0
  %232 = vmatmul.mubr.bf16.gmra.mrb[0].mxu0 %v162
  %v233 = vpop.f32.mrb[0].mxu0
  %v234 = vadd.f32 %v60, %v233
  %v235 = vpop.f32.mrb[0].mxu0
  %v236 = vadd.f32 %v64, %v235
  %v237 = vpop.f32.mrb[0].mxu0
  %v238 = vadd.f32 %v60, %v237
  %v239 = vpop.f32.mrb[0].mxu0
  %v240 = vadd.f32 %v64, %v239
  %241 = vmatprep.mubr.bf16.mxu0 0
  %242 = vmatmul.mubr.bf16.gmra.mrb[0].mxu0 %v165
  %v243 = vpop.f32.mrb[0].mxu0
  %v244 = vadd.f32 %v60, %v243
  %v245 = vpop.f32.mrb[0].mxu0
  %v246 = vadd.f32 %v64, %v245
  %v247 = vpop.f32.mrb[0].mxu0
  %v248 = vadd.f32 %v60, %v247
  %v249 = vpop.f32.mrb[0].mxu0
  %v250 = vadd.f32 %v64, %v249
  %251 = vmatprep.mubr.bf16.mxu0 0
  %252 = vmatmul.mubr.bf16.gmra.mrb[0].mxu0 %v168
  %v253 = vpop.f32.mrb[0].mxu0
  %v254 = vadd.f32 %v60, %v253
  %v255 = vpop.f32.mrb[0].mxu0
  %v256 = vadd.f32 %v64, %v255
  %v257 = vpop.f32.mrb[0].mxu0
  %v258 = vadd.f32 %v60, %v257
  %v259 = vpop.f32.mrb[0].mxu0
  %v260 = vadd.f32 %v64, %v259
  %261 = vmatprep.mubr.bf16.mxu0 0
  %262 = vmatmul.mubr.bf16.gmra.mrb[0].mxu0 %v171
  %v263 = vpop.f32.mrb[0].mxu0
  %v264 = vadd.f32 %v60, %v263
  %v265 = vpop.f32.mrb[0].mxu0
  %v266 = vadd.f32 %v64, %v265
  %v267 = vpop.f32.mrb[0].mxu0
  %v268 = vadd.f32 %v60, %v267
  %v269 = vpop.f32.mrb[0].mxu0
  %v270 = vadd.f32 %v64, %v269
  %271 = vmatprep.mubr.bf16.mxu0 0
  %272 = vmatmul.mubr.bf16.gmra.mrb[0].mxu0 %v174
  %v273 = vpop.f32.mrb[0].mxu0
  %v274 = vadd.f32 %v60, %v273
  %v275 = vpop.f32.mrb[0].mxu0
  %v276 = vadd.f32 %v64, %v275
  %v277 = vpop.f32.mrb[0].mxu0
  %v278 = vadd.f32 %v60, %v277
  %v279 = vpop.f32.mrb[0].mxu0
  %v280 = vadd.f32 %v64, %v279
  %281 = vdwg.mxu0
  %282 = vmatprep.subr.bf16.mxu0 %v140
  %283 = vmatpush1.bf16.msra.mxu0 %v139
  %284 = vmatprep.subr.bf16.mxu0 %v144
  %285 = vmatpush1.bf16.msra.mxu0 %v143
  %286 = vmatprep.subr.bf16.mxu0 %v187
  %287 = vmatpush1.bf16.msra.mxu0 %v184
  %288 = vmatprep.subr.bf16.mxu0 0
  %289 = vmatpush1.bf16.msra.mxu0 0
  %290 = vmatprep.subr.bf16.mxu0 0
  %291 = vmatpush1.bf16.msra.mxu0 0
  %292 = vmatprep.subr.bf16.mxu0 0
  %293 = vmatpush1.bf16.msra.mxu0 0
  %294 = vmatprep.subr.bf16.mxu0 0
  %295 = vmatpush1.bf16.msra.mxu0 0
  %296 = vmatprep.subr.bf16.mxu0 0
  %297 = vmatpush1.bf16.msra.mxu0 0
  %298 = vmatprep.subr.bf16.mxu0 0
  %299 = vmatpush1.bf16.msra.mxu0 0
  %300 = vmatprep.subr.bf16.mxu0 0
  %301 = vmatpush1.bf16.msra.mxu0 0
  %302 = vmatprep.subr.bf16.mxu0 0
  %303 = vmatpush1.bf16.msra.mxu0 0
  %304 = vmatprep.subr.bf16.mxu0 0
  %305 = vmatpush1.bf16.msra.mxu0 0
  %306 = vmatprep.subr.bf16.mxu0 0
  %307 = vmatpush1.bf16.msra.mxu0 0
  %308 = vmatprep.subr.bf16.mxu0 0
  %309 = vmatpush1.bf16.msra.mxu0 0
  %310 = vmatprep.subr.bf16.mxu0 0
  %311 = vmatpush1.bf16.msra.mxu0 0
  %312 = vmatprep.subr.bf16.mxu0 0
  %313 = vmatpush1.bf16.msra.mxu0 0
  %314 = vmatprep.mubr.bf16.mxu0 0
  %315 = vmatmul.mubr.bf16.gmra.mrb[0].mxu0 %v159
  %v316 = vpop.f32.mrb[0].mxu0
  %v317 = vadd.f32 %v68, %v316
  %v318 = vpop.f32.mrb[0].mxu0
  %v319 = vadd.f32 %v72, %v318
  %v320 = vpop.f32.mrb[0].mxu0
  %v321 = vadd.f32 %v68, %v320
  %v322 = vpop.f32.mrb[0].mxu0
  %v323 = vadd.f32 %v72, %v322
  %324 = vmatprep.mubr.bf16.mxu0 0
  %325 = vmatmul.mubr.bf16.gmra.mrb[0].mxu0 %v162
  %v326 = vpop.f32.mrb[0].mxu0
  %v327 = vadd.f32 %v68, %v326
  %v328 = vpop.f32.mrb[0].mxu0
  %v329 = vadd.f32 %v72, %v328
  %v330 = vpop.f32.mrb[0].mxu0
  %v331 = vadd.f32 %v68, %v330
  %v332 = vpop.f32.mrb[0].mxu0
  %v333 = vadd.f32 %v72, %v332
  %334 = vmatprep.mubr.bf16.mxu0 0
  %335 = vmatmul.mubr.bf16.gmra.mrb[0].mxu0 %v165
  %v336 = vpop.f32.mrb[0].mxu0
  %v337 = vadd.f32 %v68, %v336
  %v338 = vpop.f32.mrb[0].mxu0
  %v339 = vadd.f32 %v72, %v338
  %v340 = vpop.f32.mrb[0].mxu0
  %v341 = vadd.f32 %v68, %v340
  %v342 = vpop.f32.mrb[0].mxu0
  %v343 = vadd.f32 %v72, %v342
  %344 = vmatprep.mubr.bf16.mxu0 0
  %345 = vmatmul.mubr.bf16.gmra.mrb[0].mxu0 %v168
  %v346 = vpop.f32.mrb[0].mxu0
  %v347 = vadd.f32 %v68, %v346
  %v348 = vpop.f32.mrb[0].mxu0
  %v349 = vadd.f32 %v72, %v348
  %v350 = vpop.f32.mrb[0].mxu0
  %v351 = vadd.f32 %v68, %v350
  %v352 = vpop.f32.mrb[0].mxu0
  %v353 = vadd.f32 %v72, %v352
  %354 = vmatprep.mubr.bf16.mxu0 0
  %355 = vmatmul.mubr.bf16.gmra.mrb[0].mxu0 %v171
  %v356 = vpop.f32.mrb[0].mxu0
  %v357 = vadd.f32 %v68, %v356
  %v358 = vpop.f32.mrb[0].mxu0
  %v359 = vadd.f32 %v72, %v358
  %v360 = vpop.f32.mrb[0].mxu0
  %v361 = vadd.f32 %v68, %v360
  %v362 = vpop.f32.mrb[0].mxu0
  %v363 = vadd.f32 %v72, %v362
  %364 = vmatprep.mubr.bf16.mxu0 0
  %365 = vmatmul.mubr.bf16.gmra.mrb[0].mxu0 %v174
  %v366 = vpop.f32.mrb[0].mxu0
  %v367 = vadd.f32 %v68, %v366
  %v368 = vpop.f32.mrb[0].mxu0
  %v369 = vadd.f32 %v72, %v368
  %v370 = vpop.f32.mrb[0].mxu0
  %v371 = vadd.f32 %v68, %v370
  %v372 = vpop.f32.mrb[0].mxu0
  %v373 = vadd.f32 %v72, %v372
  %374 = vdwg.mxu0
  %375 = vst [vmem:[#allocation2] sm:$0xff] %v224
  %376 = vst [vmem:[#allocation2 + $0x8] sm:$0xff] %v226
  %377 = vst [vmem:[#allocation2 + $0x10] sm:$0xff] %v317
  %378 = vst [vmem:[#allocation2 + $0x18] sm:$0xff] %v319
  %379 = vst [vmem:[#allocation2 + $0x20] sm:$0xff] %v228
  %380 = vst [vmem:[#allocation2 + $0x28] sm:$0xff] %v230
  %381 = vst [vmem:[#allocation2 + $0x30] sm:$0xff] %v321
  %382 = vst [vmem:[#allocation2 + $0x38] sm:$0xff] %v323
  %383 = vst [vmem:[#allocation2 + $0x40] sm:$0xff] %v234
  %384 = vst [vmem:[#allocation2 + $0x48] sm:$0xff] %v236
  %385 = vst [vmem:[#allocation2 + $0x50] sm:$0xff] %v327
  %386 = vst [vmem:[#allocation2 + $0x58] sm:$0xff] %v329
  %387 = vst [vmem:[#allocation2 + $0x60] sm:$0xff] %v238
  %388 = vst [vmem:[#allocation2 + $0x68] sm:$0xff] %v240
  %389 = vst [vmem:[#allocation2 + $0x70] sm:$0xff] %v331
  %390 = vst [vmem:[#allocation2 + $0x78] sm:$0xff] %v333
  %391 = vst [vmem:[#allocation2 + $0x80] sm:$0xff] %v244
  %392 = vst [vmem:[#allocation2 + $0x88] sm:$0xff] %v246
  %393 = vst [vmem:[#allocation2 + $0x90] sm:$0xff] %v337
  %394 = vst [vmem:[#allocation2 + $0x98] sm:$0xff] %v339
  %395 = vst [vmem:[#allocation2 + $0xa0] sm:$0xff] %v248
  %396 = vst [vmem:[#allocation2 + $0xa8] sm:$0xff] %v250
  %397 = vst [vmem:[#allocation2 + $0xb0] sm:$0xff] %v341
  %398 = vst [vmem:[#allocation2 + $0xb8] sm:$0xff] %v343
  %399 = vst [vmem:[#allocation2 + $0xc0] sm:$0xff] %v254
  %400 = vst [vmem:[#allocation2 + $0xc8] sm:$0xff] %v256
  %401 = vst [vmem:[#allocation2 + $0xd0] sm:$0xff] %v347
  %402 = vst [vmem:[#allocation2 + $0xd8] sm:$0xff] %v349
  %403 = vst [vmem:[#allocation2 + $0xe0] sm:$0xff] %v258
  %404 = vst [vmem:[#allocation2 + $0xe8] sm:$0xff] %v260
  %405 = vst [vmem:[#allocation2 + $0xf0] sm:$0xff] %v351
  %406 = vst [vmem:[#allocation2 + $0xf8] sm:$0xff] %v353
  %407 = vst [vmem:[#allocation2 + $0x100] sm:$0xff] %v264
  %408 = vst [vmem:[#allocation2 + $0x108] sm:$0xff] %v266
  %409 = vst [vmem:[#allocation2 + $0x110] sm:$0xff] %v357
  %410 = vst [vmem:[#allocation2 + $0x118] sm:$0xff] %v359
  %411 = vst [vmem:[#allocation2 + $0x120] sm:$0xff] %v268
  %412 = vst [vmem:[#allocation2 + $0x128] sm:$0xff] %v270
  %413 = vst [vmem:[#allocation2 + $0x130] sm:$0xff] %v361
  %414 = vst [vmem:[#allocation2 + $0x138] sm:$0xff] %v363
  %415 = vst [vmem:[#allocation2 + $0x140] sm:$0xff] %v274
  %416 = vst [vmem:[#allocation2 + $0x148] sm:$0xff] %v276
  %417 = vst [vmem:[#allocation2 + $0x150] sm:$0xff] %v367
  %418 = vst [vmem:[#allocation2 + $0x158] sm:$0xff] %v369
  %419 = vst [vmem:[#allocation2 + $0x160] sm:$0xff] %v278
  %420 = vst [vmem:[#allocation2 + $0x168] sm:$0xff] %v280
  %421 = vst [vmem:[#allocation2 + $0x170] sm:$0xff] %v371
  %422 = vst [vmem:[#allocation2 + $0x178] sm:$0xff] %v373
  %v423 = vld [vmem:[%s4] sm:$0xff]
  %v424 = vld [vmem:[%s4 + $0x8] sm:$0xff]
  %v425 = vld [vmem:[%s4 + $0x10] sm:$0xff]
  %v426 = vld [vmem:[%s4 + $0x18] sm:$0xff]
  %v427 = vld [vmem:[%s4 + $0x20] sm:$0xff]
  %v428 = vld [vmem:[%s4 + $0x28] sm:$0xff]
  %v429 = vld [vmem:[%s4 + $0x30] sm:$0xff]
  %v430 = vld [vmem:[%s4 + $0x38] sm:$0xff]
  %v431 = vld [vmem:[%s4 + $0x40] sm:$0xff]
  %v432 = vld [vmem:[%s4 + $0x48] sm:$0xff]
  %v433 = vld [vmem:[%s4 + $0x50] sm:$0xff]
  %v434 = vld [vmem:[%s4 + $0x58] sm:$0xff]
  %v435 = vld [vmem:[%s4 + $0x60] sm:$0xff]
  %v436 = vld [vmem:[%s4 + $0x68] sm:$0xff]
  %v437 = vld [vmem:[%s4 + $0x70] sm:$0xff]
  %v438 = vld [vmem:[%s4 + $0x78] sm:$0xff]
  %v439 = vld [vmem:[%s4 + $0x80] sm:$0xff]
  %v440 = vld [vmem:[%s4 + $0x88] sm:$0xff]
  %v441 = vld [vmem:[%s4 + $0x90] sm:$0xff]
  %v442 = vld [vmem:[%s4 + $0x98] sm:$0xff]
  %v443 = vld [vmem:[%s4 + $0xa0] sm:$0xff]
  %v444 = vld [vmem:[%s4 + $0xa8] sm:$0xff]
  %v445 = vld [vmem:[%s4 + $0xb0] sm:$0xff]
  %v446 = vld [vmem:[%s4 + $0xb8] sm:$0xff]
  %v447 = vld [vmem:[%s4 + $0xc0] sm:$0xff]
  %v448 = vld [vmem:[%s4 + $0xc8] sm:$0xff]
  %v449 = vld [vmem:[%s4 + $0xd0] sm:$0xff]
  %v450 = vld [vmem:[%s4 + $0xd8] sm:$0xff]
  %v451 = vld [vmem:[%s4 + $0xe0] sm:$0xff]
  %v452 = vld [vmem:[%s4 + $0xe8] sm:$0xff]
  %v453 = vld [vmem:[%s4 + $0xf0] sm:$0xff]
  %v454 = vld [vmem:[%s4 + $0xf8] sm:$0xff]
  %v455 = vld [vmem:[%s0] sm:$0xff]
  %v456 = vsub.s32 12, %v455
  %v457 = vlaneseq
  %v458 = vand.u32 %v457, 127
  %vm459 = vcmp.lt.s32.totalorder %v458, 64
  %v460 = vld [vmem:[#allocation2] sm:$0xff]
  %v461 = vld [vmem:[#allocation2 + $0x8] sm:$0xff]
  %v462 = vld [vmem:[#allocation2 + $0x10] sm:$0xff]
  %v463 = vld [vmem:[#allocation2 + $0x18] sm:$0xff]
  %v496 = vunpack.c.l.b16 %v423
  %v497 = vunpack.c.h.b16 %v423
  %v498 = vunpack.c.l.b16 %v424
  %v499 = vunpack.c.h.b16 %v424
  %v500 = vunpack.c.l.b16 %v425
  %v501 = vunpack.c.h.b16 %v425
  %v502 = vunpack.c.l.b16 %v426
  %v503 = vunpack.c.h.b16 %v426
  %v504 = vunpack.c.l.b16 %v427
  %v505 = vunpack.c.h.b16 %v427
  %v506 = vunpack.c.l.b16 %v428
  %v507 = vunpack.c.h.b16 %v428
  %v508 = vunpack.c.l.b16 %v429
  %v509 = vunpack.c.h.b16 %v429
  %v510 = vunpack.c.l.b16 %v430
  %v511 = vunpack.c.h.b16 %v430
  %v512 = vunpack.c.l.b16 %v431
  %v513 = vunpack.c.h.b16 %v431
  %v514 = vunpack.c.l.b16 %v432
  %v515 = vunpack.c.h.b16 %v432
  %v516 = vunpack.c.l.b16 %v433
  %v517 = vunpack.c.h.b16 %v433
  %v518 = vunpack.c.l.b16 %v434
  %v519 = vunpack.c.h.b16 %v434
  %v520 = vunpack.c.l.b16 %v435
  %v521 = vunpack.c.h.b16 %v435
  %v522 = vunpack.c.l.b16 %v436
  %v523 = vunpack.c.h.b16 %v436
  %v524 = vunpack.c.l.b16 %v437
  %v525 = vunpack.c.h.b16 %v437
  %v526 = vunpack.c.l.b16 %v438
  %v527 = vunpack.c.h.b16 %v438
  %v528 = vunpack.c.l.b16 %v439
  %v529 = vunpack.c.h.b16 %v439
  %v530 = vunpack.c.l.b16 %v440
  %v531 = vunpack.c.h.b16 %v440
  %v532 = vunpack.c.l.b16 %v441
  %v533 = vunpack.c.h.b16 %v441
  %v534 = vunpack.c.l.b16 %v442
  %v535 = vunpack.c.h.b16 %v442
  %v536 = vunpack.c.l.b16 %v443
  %v537 = vunpack.c.h.b16 %v443
  %v538 = vunpack.c.l.b16 %v444
  %v539 = vunpack.c.h.b16 %v444
  %v540 = vunpack.c.l.b16 %v445
  %v541 = vunpack.c.h.b16 %v445
  %v542 = vunpack.c.l.b16 %v446
  %v543 = vunpack.c.h.b16 %v446
  %v544 = vunpack.c.l.b16 %v447
  %v545 = vunpack.c.h.b16 %v447
  %v546 = vunpack.c.l.b16 %v448
  %v547 = vunpack.c.h.b16 %v448
  %v548 = vunpack.c.l.b16 %v449
  %v549 = vunpack.c.h.b16 %v449
  %v550 = vunpack.c.l.b16 %v450
  %v551 = vunpack.c.h.b16 %v450
  %v552 = vunpack.c.l.b16 %v451
  %v553 = vunpack.c.h.b16 %v451
  %v554 = vunpack.c.l.b16 %v452
  %v555 = vunpack.c.h.b16 %v452
  %v556 = vunpack.c.l.b16 %v453
  %v557 = vunpack.c.h.b16 %v453
  %v558 = vunpack.c.l.b16 %v454
  %v559 = vunpack.c.h.b16 %v454
  %v560 = vpack.c.b16 %v500, %v496
  %v561 = vpack.c.b16 %v501, %v497
  %v562 = vpack.c.b16 %v502, %v498
  %v563 = vpack.c.b16 %v503, %v499
  %v564 = vpack.c.b16 %v508, %v504
  %v565 = vpack.c.b16 %v509, %v505
  %v566 = vpack.c.b16 %v510, %v506
  %v567 = vpack.c.b16 %v511, %v507
  %v568 = vpack.c.b16 %v516, %v512
  %v569 = vpack.c.b16 %v517, %v513
  %v570 = vpack.c.b16 %v518, %v514
  %v571 = vpack.c.b16 %v519, %v515
  %v572 = vpack.c.b16 %v524, %v520
  %v573 = vpack.c.b16 %v525, %v521
  %v574 = vpack.c.b16 %v526, %v522
  %v575 = vpack.c.b16 %v527, %v523
  %v576 = vpack.c.b16 %v532, %v528
  %v577 = vpack.c.b16 %v533, %v529
  %v578 = vpack.c.b16 %v534, %v530
  %v579 = vpack.c.b16 %v535, %v531
  %v580 = vpack.c.b16 %v540, %v536
  %v581 = vpack.c.b16 %v541, %v537
  %v582 = vpack.c.b16 %v542, %v538
  %v583 = vpack.c.b16 %v543, %v539
  %v584 = vpack.c.b16 %v548, %v544
  %v585 = vpack.c.b16 %v549, %v545
  %v586 = vpack.c.b16 %v550, %v546
  %v587 = vpack.c.b16 %v551, %v547
  %v588 = vpack.c.b16 %v556, %v552
  %v589 = vpack.c.b16 %v557, %v553
  %v590 = vpack.c.b16 %v558, %v554
  %v591 = vpack.c.b16 %v559, %v555
  %624 = vmatprep.subr.bf16.mxu0 %v561
  %625 = vmatpush1.bf16.msra.mxu0 %v560
  %626 = vmatprep.subr.bf16.mxu0 %v565
  %627 = vmatpush1.bf16.msra.mxu0 %v564
  %628 = vmatprep.subr.bf16.mxu0 %v569
  %629 = vmatpush1.bf16.msra.mxu0 %v568
  %630 = vmatprep.subr.bf16.mxu0 %v573
  %631 = vmatpush1.bf16.msra.mxu0 %v572
  %632 = vmatprep.subr.bf16.mxu0 %v577
  %633 = vmatpush1.bf16.msra.mxu0 %v576
  %634 = vmatprep.subr.bf16.mxu0 %v581
  %635 = vmatpush1.bf16.msra.mxu0 %v580
  %636 = vmatprep.subr.bf16.mxu0 %v585
  %637 = vmatpush1.bf16.msra.mxu0 %v584
  %638 = vmatprep.subr.bf16.mxu0 %v589
  %639 = vmatpush1.bf16.msra.mxu0 %v588
  %640 = vmatprep.subr.bf16.mxu0 0
  %641 = vmatpush1.bf16.msra.mxu0 0
  %642 = vmatprep.subr.bf16.mxu0 0
  %643 = vmatpush1.bf16.msra.mxu0 0
  %644 = vmatprep.subr.bf16.mxu0 0
  %645 = vmatpush1.bf16.msra.mxu0 0
  %646 = vmatprep.subr.bf16.mxu0 0
  %647 = vmatpush1.bf16.msra.mxu0 0
  %648 = vmatprep.subr.bf16.mxu0 0
  %649 = vmatpush1.bf16.msra.mxu0 0
  %650 = vmatprep.subr.bf16.mxu0 0
  %651 = vmatpush1.bf16.msra.mxu0 0
  %652 = vmatprep.subr.bf16.mxu0 0
  %653 = vmatpush1.bf16.msra.mxu0 0
  %654 = vmatprep.subr.bf16.mxu0 0
  %655 = vmatpush1.bf16.msra.mxu0 0
  %656 = vmatprep.mubr.bf16.mxu0 0
  %657 = vmatmul.mubr.bf16.gmra.mrb[0].mxu0 0
  %v658 = vpop.f32.mrb[0].mxu0
  %v659 = vadd.f32 0.0, %v658
  %v660 = vpop.f32.mrb[0].mxu0
  %v661 = vadd.f32 0.0, %v660
  %v662 = vpop.f32.mrb[0].mxu0
  %v663 = vpop.f32.mrb[0].mxu0
  %664 = vdwg.mxu0
  %665 = vmatprep.subr.bf16.mxu0 %v563
  %666 = vmatpush1.bf16.msra.mxu0 %v562
  %667 = vmatprep.subr.bf16.mxu0 %v567
  %668 = vmatpush1.bf16.msra.mxu0 %v566
  %669 = vmatprep.subr.bf16.mxu0 %v571
  %670 = vmatpush1.bf16.msra.mxu0 %v570
  %671 = vmatprep.subr.bf16.mxu0 %v575
  %672 = vmatpush1.bf16.msra.mxu0 %v574
  %673 = vmatprep.subr.bf16.mxu0 %v579
  %674 = vmatpush1.bf16.msra.mxu0 %v578
  %675 = vmatprep.subr.bf16.mxu0 %v583
  %676 = vmatpush1.bf16.msra.mxu0 %v582
  %677 = vmatprep.subr.bf16.mxu0 %v587
  %678 = vmatpush1.bf16.msra.mxu0 %v586
  %679 = vmatprep.subr.bf16.mxu0 %v591
  %680 = vmatpush1.bf16.msra.mxu0 %v590
  %681 = vmatprep.subr.bf16.mxu0 0
  %682 = vmatpush1.bf16.msra.mxu0 0
  %683 = vmatprep.subr.bf16.mxu0 0
  %684 = vmatpush1.bf16.msra.mxu0 0
  %685 = vmatprep.subr.bf16.mxu0 0
  %686 = vmatpush1.bf16.msra.mxu0 0
  %687 = vmatprep.subr.bf16.mxu0 0
  %688 = vmatpush1.bf16.msra.mxu0 0
  %689 = vmatprep.subr.bf16.mxu0 0
  %690 = vmatpush1.bf16.msra.mxu0 0
  %691 = vmatprep.subr.bf16.mxu0 0
  %692 = vmatpush1.bf16.msra.mxu0 0
  %693 = vmatprep.subr.bf16.mxu0 0
  %694 = vmatpush1.bf16.msra.mxu0 0
  %695 = vmatprep.subr.bf16.mxu0 0
  %696 = vmatpush1.bf16.msra.mxu0 0
  %697 = vmatprep.mubr.bf16.mxu0 0
  %698 = vmatmul.mubr.bf16.gmra.mrb[0].mxu0 0
  %v699 = vpop.f32.mrb[0].mxu0
  %v700 = vadd.f32 0.0, %v699
  %v701 = vpop.f32.mrb[0].mxu0
  %v702 = vadd.f32 0.0, %v701
  %v703 = vpop.f32.mrb[0].mxu0
  %v704 = vpop.f32.mrb[0].mxu0
  %705 = vdwg.mxu0
  %v706 = vadd.f32 %v460, %v659
  %v707 = vadd.f32 %v461, %v661
  %v708 = vadd.f32 %v462, %v700
  %v709 = vadd.f32 %v463, %v702
  %v710 = vmul.f32 %v706, 0.5
  %v711 = vtanh.pop %v710
  %v712 = vmul.f32 %v711, 0.5
  %v713 = vadd.f32 %v712, 0.5
  %v714 = vmul.f32 %v707, 0.5
  %v715 = vtanh.pop %v714
  %v716 = vmul.f32 %v715, 0.5
  %v717 = vadd.f32 %v716, 0.5
  %v718 = vtanh.pop %v708
  %v719 = vmul.f32 %v709, 0.5
  %v720 = vtanh.pop %v719
  %v721 = vmul.f32 %v720, 0.5
  %v722 = vadd.f32 %v721, 0.5
  %v723 = vmul.f32 %v717, 0.0
  %v724 = vmul.f32 %v713, %v718
  %v725 = vadd.f32 %v723, %v724
  %v726 = vtanh.pop %v725
  %v727 = vmul.f32 %v722, %v726
  %vm728 = vcmp.gt.s32.totalorder %v455, 0
  %v729 = vsel %vm728, 1, 0
  %v730 = vcvt.s32.f32 %v729
  %vm731 = vcmp.le.s32.totalorder %v456, 0
  %v732 = vsel %vm731, 1, 0
  %v733 = vcvt.s32.f32 %v732
  %v734 = vsel %vm459, 1, 0
  %vm735 = vcmp.eq.s32.totalorder %v734, 1
  %737 = vset.pattern.permute.xlu0 0
  %738 = vperm.xlu0 %737, %v730
  %v739 = vpop.permute.xlu0 %738
  %742 = vset.pattern.permute.xlu0 0
  %743 = vperm.xlu0 %742, %v733
  %v744 = vpop.permute.xlu0 %743
  %v746 = vsel %vm735, %v739, %v744
  %vm747 = vcmp.gt.f32.partialorder %v746, 0.0
  %v748 = vsel %vm747, %v727, 0.0
  %v749 = vsel %vm747, %v725, 0.0
  %s750 = scalar_lea.vmem [#allocation2], 32
  %v751 = vld [vmem:[%s750] sm:$0xff]
  %v752 = vld [vmem:[%s750 + $0x8] sm:$0xff]
  %v753 = vld [vmem:[%s750 + $0x10] sm:$0xff]
  %v754 = vld [vmem:[%s750 + $0x18] sm:$0xff]
  %v755 = vpack.c.bf16 %v748, %v748
  %756 = vmatprep.subr.bf16.mxu0 %v561
  %757 = vmatpush1.bf16.msra.mxu0 %v560
  %758 = vmatprep.subr.bf16.mxu0 %v565
  %759 = vmatpush1.bf16.msra.mxu0 %v564
  %760 = vmatprep.subr.bf16.mxu0 %v569
  %761 = vmatpush1.bf16.msra.mxu0 %v568
  %762 = vmatprep.subr.bf16.mxu0 %v573
  %763 = vmatpush1.bf16.msra.mxu0 %v572
  %764 = vmatprep.subr.bf16.mxu0 %v577
  %765 = vmatpush1.bf16.msra.mxu0 %v576
  %766 = vmatprep.subr.bf16.mxu0 %v581
  %767 = vmatpush1.bf16.msra.mxu0 %v580
  %768 = vmatprep.subr.bf16.mxu0 %v585
  %769 = vmatpush1.bf16.msra.mxu0 %v584
  %770 = vmatprep.subr.bf16.mxu0 %v589
  %771 = vmatpush1.bf16.msra.mxu0 %v588
  %772 = vmatprep.subr.bf16.mxu0 0
  %773 = vmatpush1.bf16.msra.mxu0 0
  %774 = vmatprep.subr.bf16.mxu0 0
  %775 = vmatpush1.bf16.msra.mxu0 0
  %776 = vmatprep.subr.bf16.mxu0 0
  %777 = vmatpush1.bf16.msra.mxu0 0
  %778 = vmatprep.subr.bf16.mxu0 0
  %779 = vmatpush1.bf16.msra.mxu0 0
  %780 = vmatprep.subr.bf16.mxu0 0
  %781 = vmatpush1.bf16.msra.mxu0 0
  %782 = vmatprep.subr.bf16.mxu0 0
  %783 = vmatpush1.bf16.msra.mxu0 0
  %784 = vmatprep.subr.bf16.mxu0 0
  %785 = vmatpush1.bf16.msra.mxu0 0
  %786 = vmatprep.subr.bf16.mxu0 0
  %787 = vmatpush1.bf16.msra.mxu0 0
  %788 = vmatprep.mubr.bf16.mxu0 0
  %789 = vmatmul.mubr.bf16.gmra.mrb[0].mxu0 %v755
  %v790 = vpop.f32.mrb[0].mxu0
  %v791 = vadd.f32 0.0, %v790
  %v792 = vpop.f32.mrb[0].mxu0
  %v793 = vadd.f32 0.0, %v792
  %v794 = vpop.f32.mrb[0].mxu0
  %v795 = vpop.f32.mrb[0].mxu0
  %796 = vdwg.mxu0
  %797 = vmatprep.subr.bf16.mxu0 %v563
  %798 = vmatpush1.bf16.msra.mxu0 %v562
  %799 = vmatprep.subr.bf16.mxu0 %v567
  %800 = vmatpush1.bf16.msra.mxu0 %v566
  %801 = vmatprep.subr.bf16.mxu0 %v571
  %802 = vmatpush1.bf16.msra.mxu0 %v570
  %803 = vmatprep.subr.bf16.mxu0 %v575
  %804 = vmatpush1.bf16.msra.mxu0 %v574
  %805 = vmatprep.subr.bf16.mxu0 %v579
  %806 = vmatpush1.bf16.msra.mxu0 %v578
  %807 = vmatprep.subr.bf16.mxu0 %v583
  %808 = vmatpush1.bf16.msra.mxu0 %v582
  %809 = vmatprep.subr.bf16.mxu0 %v587
  %810 = vmatpush1.bf16.msra.mxu0 %v586
  %811 = vmatprep.subr.bf16.mxu0 %v591
  %812 = vmatpush1.bf16.msra.mxu0 %v590
  %813 = vmatprep.subr.bf16.mxu0 0
  %814 = vmatpush1.bf16.msra.mxu0 0
  %815 = vmatprep.subr.bf16.mxu0 0
  %816 = vmatpush1.bf16.msra.mxu0 0
  %817 = vmatprep.subr.bf16.mxu0 0
  %818 = vmatpush1.bf16.msra.mxu0 0
  %819 = vmatprep.subr.bf16.mxu0 0
  %820 = vmatpush1.bf16.msra.mxu0 0
  %821 = vmatprep.subr.bf16.mxu0 0
  %822 = vmatpush1.bf16.msra.mxu0 0
  %823 = vmatprep.subr.bf16.mxu0 0
  %824 = vmatpush1.bf16.msra.mxu0 0
  %825 = vmatprep.subr.bf16.mxu0 0
  %826 = vmatpush1.bf16.msra.mxu0 0
  %827 = vmatprep.subr.bf16.mxu0 0
  %828 = vmatpush1.bf16.msra.mxu0 0
  %829 = vmatprep.mubr.bf16.mxu0 0
  %830 = vmatmul.mubr.bf16.gmra.mrb[0].mxu0 %v755
  %v831 = vpop.f32.mrb[0].mxu0
  %v832 = vadd.f32 0.0, %v831
  %v833 = vpop.f32.mrb[0].mxu0
  %v834 = vadd.f32 0.0, %v833
  %v835 = vpop.f32.mrb[0].mxu0
  %v836 = vpop.f32.mrb[0].mxu0
  %837 = vdwg.mxu0
  %v838 = vadd.f32 %v751, %v791
  %v839 = vadd.f32 %v752, %v793
  %v840 = vadd.f32 %v753, %v832
  %v841 = vadd.f32 %v754, %v834
  %v842 = vmul.f32 %v838, 0.5
  %v843 = vtanh.pop %v842
  %v844 = vmul.f32 %v843, 0.5
  %v845 = vadd.f32 %v844, 0.5
  %v846 = vmul.f32 %v839, 0.5
  %v847 = vtanh.pop %v846
  %v848 = vmul.f32 %v847, 0.5
  %v849 = vadd.f32 %v848, 0.5
  %v850 = vtanh.pop %v840
  %v851 = vmul.f32 %v841, 0.5
  %v852 = vtanh.pop %v851
  %v853 = vmul.f32 %v852, 0.5
  %v854 = vadd.f32 %v853, 0.5
  %v855 = vmul.f32 %v849, %v749
  %v856 = vmul.f32 %v845, %v850
  %v857 = vadd.f32 %v855, %v856
  %v858 = vtanh.pop %v857
  %v859 = vmul.f32 %v854, %v858
  %vm860 = vcmp.gt.s32.totalorder %v455, 1
  %v861 = vsel %vm860, 1, 0
  %v862 = vcvt.s32.f32 %v861
  %vm863 = vcmp.le.s32.totalorder %v456, 1
  %v864 = vsel %vm863, 1, 0
  %v865 = vcvt.s32.f32 %v864
  %867 = vset.pattern.permute.xlu0 0
  %868 = vperm.xlu0 %867, %v862
  %v869 = vpop.permute.xlu0 %868
  %872 = vset.pattern.permute.xlu0 0
  %873 = vperm.xlu0 %872, %v865
  %v874 = vpop.permute.xlu0 %873
  %v876 = vsel %vm735, %v869, %v874
  %vm877 = vcmp.gt.f32.partialorder %v876, 0.0
  %v878 = vsel %vm877, %v859, %v748
  %v879 = vsel %vm877, %v857, %v749
  %s880 = scalar_lea.vmem [#allocation2], 64
  %v881 = vld [vmem:[%s880] sm:$0xff]
  %v882 = vld [vmem:[%s880 + $0x8] sm:$0xff]
  %v883 = vld [vmem:[%s880 + $0x10] sm:$0xff]
  %v884 = vld [vmem:[%s880 + $0x18] sm:$0xff]
  %v885 = vpack.c.bf16 %v878, %v878
  %886 = vmatprep.subr.bf16.mxu0 %v561
  %887 = vmatpush1.bf16.msra.mxu0 %v560
  %888 = vmatprep.subr.bf16.mxu0 %v565
  %889 = vmatpush1.bf16.msra.mxu0 %v564
  %890 = vmatprep.subr.bf16.mxu0 %v569
  %891 = vmatpush1.bf16.msra.mxu0 %v568
  %892 = vmatprep.subr.bf16.mxu0 %v573
  %893 = vmatpush1.bf16.msra.mxu0 %v572
  %894 = vmatprep.subr.bf16.mxu0 %v577
  %895 = vmatpush1.bf16.msra.mxu0 %v576
  %896 = vmatprep.subr.bf16.mxu0 %v581
  %897 = vmatpush1.bf16.msra.mxu0 %v580
  %898 = vmatprep.subr.bf16.mxu0 %v585
  %899 = vmatpush1.bf16.msra.mxu0 %v584
  %900 = vmatprep.subr.bf16.mxu0 %v589
  %901 = vmatpush1.bf16.msra.mxu0 %v588
  %902 = vmatprep.subr.bf16.mxu0 0
  %903 = vmatpush1.bf16.msra.mxu0 0
  %904 = vmatprep.subr.bf16.mxu0 0
  %905 = vmatpush1.bf16.msra.mxu0 0
  %906 = vmatprep.subr.bf16.mxu0 0
  %907 = vmatpush1.bf16.msra.mxu0 0
  %908 = vmatprep.subr.bf16.mxu0 0
  %909 = vmatpush1.bf16.msra.mxu0 0
  %910 = vmatprep.subr.bf16.mxu0 0
  %911 = vmatpush1.bf16.msra.mxu0 0
  %912 = vmatprep.subr.bf16.mxu0 0
  %913 = vmatpush1.bf16.msra.mxu0 0
  %914 = vmatprep.subr.bf16.mxu0 0
  %915 = vmatpush1.bf16.msra.mxu0 0
  %916 = vmatprep.subr.bf16.mxu0 0
  %917 = vmatpush1.bf16.msra.mxu0 0
  %918 = vmatprep.mubr.bf16.mxu0 0
  %919 = vmatmul.mubr.bf16.gmra.mrb[0].mxu0 %v885
  %v920 = vpop.f32.mrb[0].mxu0
  %v921 = vadd.f32 0.0, %v920
  %v922 = vpop.f32.mrb[0].mxu0
  %v923 = vadd.f32 0.0, %v922
  %v924 = vpop.f32.mrb[0].mxu0
  %v925 = vpop.f32.mrb[0].mxu0
  %926 = vdwg.mxu0
  %927 = vmatprep.subr.bf16.mxu0 %v563
  %928 = vmatpush1.bf16.msra.mxu0 %v562
  %929 = vmatprep.subr.bf16.mxu0 %v567
  %930 = vmatpush1.bf16.msra.mxu0 %v566
  %931 = vmatprep.subr.bf16.mxu0 %v571
  %932 = vmatpush1.bf16.msra.mxu0 %v570
  %933 = vmatprep.subr.bf16.mxu0 %v575
  %934 = vmatpush1.bf16.msra.mxu0 %v574
  %935 = vmatprep.subr.bf16.mxu0 %v579
  %936 = vmatpush1.bf16.msra.mxu0 %v578
  %937 = vmatprep.subr.bf16.mxu0 %v583
  %938 = vmatpush1.bf16.msra.mxu0 %v582
  %939 = vmatprep.subr.bf16.mxu0 %v587
  %940 = vmatpush1.bf16.msra.mxu0 %v586
  %941 = vmatprep.subr.bf16.mxu0 %v591
  %942 = vmatpush1.bf16.msra.mxu0 %v590
  %943 = vmatprep.subr.bf16.mxu0 0
  %944 = vmatpush1.bf16.msra.mxu0 0
  %945 = vmatprep.subr.bf16.mxu0 0
  %946 = vmatpush1.bf16.msra.mxu0 0
  %947 = vmatprep.subr.bf16.mxu0 0
  %948 = vmatpush1.bf16.msra.mxu0 0
  %949 = vmatprep.subr.bf16.mxu0 0
  %950 = vmatpush1.bf16.msra.mxu0 0
  %951 = vmatprep.subr.bf16.mxu0 0
  %952 = vmatpush1.bf16.msra.mxu0 0
  %953 = vmatprep.subr.bf16.mxu0 0
  %954 = vmatpush1.bf16.msra.mxu0 0
  %955 = vmatprep.subr.bf16.mxu0 0
  %956 = vmatpush1.bf16.msra.mxu0 0
  %957 = vmatprep.subr.bf16.mxu0 0
  %958 = vmatpush1.bf16.msra.mxu0 0
  %959 = vmatprep.mubr.bf16.mxu0 0
  %960 = vmatmul.mubr.bf16.gmra.mrb[0].mxu0 %v885
  %v961 = vpop.f32.mrb[0].mxu0
  %v962 = vadd.f32 0.0, %v961
  %v963 = vpop.f32.mrb[0].mxu0
  %v964 = vadd.f32 0.0, %v963
  %v965 = vpop.f32.mrb[0].mxu0
  %v966 = vpop.f32.mrb[0].mxu0
  %967 = vdwg.mxu0
  %v968 = vadd.f32 %v881, %v921
  %v969 = vadd.f32 %v882, %v923
  %v970 = vadd.f32 %v883, %v962
  %v971 = vadd.f32 %v884, %v964
  %v972 = vmul.f32 %v968, 0.5
  %v973 = vtanh.pop %v972
  %v974 = vmul.f32 %v973, 0.5
  %v975 = vadd.f32 %v974, 0.5
  %v976 = vmul.f32 %v969, 0.5
  %v977 = vtanh.pop %v976
  %v978 = vmul.f32 %v977, 0.5
  %v979 = vadd.f32 %v978, 0.5
  %v980 = vtanh.pop %v970
  %v981 = vmul.f32 %v971, 0.5
  %v982 = vtanh.pop %v981
  %v983 = vmul.f32 %v982, 0.5
  %v984 = vadd.f32 %v983, 0.5
  %v985 = vmul.f32 %v979, %v879
  %v986 = vmul.f32 %v975, %v980
  %v987 = vadd.f32 %v985, %v986
  %v988 = vtanh.pop %v987
  %v989 = vmul.f32 %v984, %v988
  %vm990 = vcmp.gt.s32.totalorder %v455, 2
  %v991 = vsel %vm990, 1, 0
  %v992 = vcvt.s32.f32 %v991
  %vm993 = vcmp.le.s32.totalorder %v456, 2
  %v994 = vsel %vm993, 1, 0
  %v995 = vcvt.s32.f32 %v994
  %997 = vset.pattern.permute.xlu0 0
  %998 = vperm.xlu0 %997, %v992
  %v999 = vpop.permute.xlu0 %998
  %1002 = vset.pattern.permute.xlu0 0
  %1003 = vperm.xlu0 %1002, %v995
  %v1004 = vpop.permute.xlu0 %1003
  %v1006 = vsel %vm735, %v999, %v1004
  %vm1007 = vcmp.gt.f32.partialorder %v1006, 0.0
  %v1008 = vsel %vm1007, %v989, %v878
  %v1009 = vsel %vm1007, %v987, %v879
  %s1010 = scalar_lea.vmem [#allocation2], 96
  %v1011 = vld [vmem:[%s1010] sm:$0xff]
  %v1012 = vld [vmem:[%s1010 + $0x8] sm:$0xff]
  %v1013 = vld [vmem:[%s1010 + $0x10] sm:$0xff]
  %v1014 = vld [vmem:[%s1010 + $0x18] sm:$0xff]
  %v1015 = vpack.c.bf16 %v1008, %v1008
  %1016 = vmatprep.subr.bf16.mxu0 %v561
  %1017 = vmatpush1.bf16.msra.mxu0 %v560
  %1018 = vmatprep.subr.bf16.mxu0 %v565
  %1019 = vmatpush1.bf16.msra.mxu0 %v564
  %1020 = vmatprep.subr.bf16.mxu0 %v569
  %1021 = vmatpush1.bf16.msra.mxu0 %v568
  %1022 = vmatprep.subr.bf16.mxu0 %v573
  %1023 = vmatpush1.bf16.msra.mxu0 %v572
  %1024 = vmatprep.subr.bf16.mxu0 %v577
  %1025 = vmatpush1.bf16.msra.mxu0 %v576
  %1026 = vmatprep.subr.bf16.mxu0 %v581
  %1027 = vmatpush1.bf16.msra.mxu0 %v580
  %1028 = vmatprep.subr.bf16.mxu0 %v585
  %1029 = vmatpush1.bf16.msra.mxu0 %v584
  %1030 = vmatprep.subr.bf16.mxu0 %v589
  %1031 = vmatpush1.bf16.msra.mxu0 %v588
  %1032 = vmatprep.subr.bf16.mxu0 0
  %1033 = vmatpush1.bf16.msra.mxu0 0
  %1034 = vmatprep.subr.bf16.mxu0 0
  %1035 = vmatpush1.bf16.msra.mxu0 0
  %1036 = vmatprep.subr.bf16.mxu0 0
  %1037 = vmatpush1.bf16.msra.mxu0 0
  %1038 = vmatprep.subr.bf16.mxu0 0
  %1039 = vmatpush1.bf16.msra.mxu0 0
  %1040 = vmatprep.subr.bf16.mxu0 0
  %1041 = vmatpush1.bf16.msra.mxu0 0
  %1042 = vmatprep.subr.bf16.mxu0 0
  %1043 = vmatpush1.bf16.msra.mxu0 0
  %1044 = vmatprep.subr.bf16.mxu0 0
  %1045 = vmatpush1.bf16.msra.mxu0 0
  %1046 = vmatprep.subr.bf16.mxu0 0
  %1047 = vmatpush1.bf16.msra.mxu0 0
  %1048 = vmatprep.mubr.bf16.mxu0 0
  %1049 = vmatmul.mubr.bf16.gmra.mrb[0].mxu0 %v1015
  %v1050 = vpop.f32.mrb[0].mxu0
  %v1051 = vadd.f32 0.0, %v1050
  %v1052 = vpop.f32.mrb[0].mxu0
  %v1053 = vadd.f32 0.0, %v1052
  %v1054 = vpop.f32.mrb[0].mxu0
  %v1055 = vpop.f32.mrb[0].mxu0
  %1056 = vdwg.mxu0
  %1057 = vmatprep.subr.bf16.mxu0 %v563
  %1058 = vmatpush1.bf16.msra.mxu0 %v562
  %1059 = vmatprep.subr.bf16.mxu0 %v567
  %1060 = vmatpush1.bf16.msra.mxu0 %v566
  %1061 = vmatprep.subr.bf16.mxu0 %v571
  %1062 = vmatpush1.bf16.msra.mxu0 %v570
  %1063 = vmatprep.subr.bf16.mxu0 %v575
  %1064 = vmatpush1.bf16.msra.mxu0 %v574
  %1065 = vmatprep.subr.bf16.mxu0 %v579
  %1066 = vmatpush1.bf16.msra.mxu0 %v578
  %1067 = vmatprep.subr.bf16.mxu0 %v583
  %1068 = vmatpush1.bf16.msra.mxu0 %v582
  %1069 = vmatprep.subr.bf16.mxu0 %v587
  %1070 = vmatpush1.bf16.msra.mxu0 %v586
  %1071 = vmatprep.subr.bf16.mxu0 %v591
  %1072 = vmatpush1.bf16.msra.mxu0 %v590
  %1073 = vmatprep.subr.bf16.mxu0 0
  %1074 = vmatpush1.bf16.msra.mxu0 0
  %1075 = vmatprep.subr.bf16.mxu0 0
  %1076 = vmatpush1.bf16.msra.mxu0 0
  %1077 = vmatprep.subr.bf16.mxu0 0
  %1078 = vmatpush1.bf16.msra.mxu0 0
  %1079 = vmatprep.subr.bf16.mxu0 0
  %1080 = vmatpush1.bf16.msra.mxu0 0
  %1081 = vmatprep.subr.bf16.mxu0 0
  %1082 = vmatpush1.bf16.msra.mxu0 0
  %1083 = vmatprep.subr.bf16.mxu0 0
  %1084 = vmatpush1.bf16.msra.mxu0 0
  %1085 = vmatprep.subr.bf16.mxu0 0
  %1086 = vmatpush1.bf16.msra.mxu0 0
  %1087 = vmatprep.subr.bf16.mxu0 0
  %1088 = vmatpush1.bf16.msra.mxu0 0
  %1089 = vmatprep.mubr.bf16.mxu0 0
  %1090 = vmatmul.mubr.bf16.gmra.mrb[0].mxu0 %v1015
  %v1091 = vpop.f32.mrb[0].mxu0
  %v1092 = vadd.f32 0.0, %v1091
  %v1093 = vpop.f32.mrb[0].mxu0
  %v1094 = vadd.f32 0.0, %v1093
  %v1095 = vpop.f32.mrb[0].mxu0
  %v1096 = vpop.f32.mrb[0].mxu0
  %1097 = vdwg.mxu0
  %v1098 = vadd.f32 %v1011, %v1051
  %v1099 = vadd.f32 %v1012, %v1053
  %v1100 = vadd.f32 %v1013, %v1092
  %v1101 = vadd.f32 %v1014, %v1094
  %v1102 = vmul.f32 %v1098, 0.5
  %v1103 = vtanh.pop %v1102
  %v1104 = vmul.f32 %v1103, 0.5
  %v1105 = vadd.f32 %v1104, 0.5
  %v1106 = vmul.f32 %v1099, 0.5
  %v1107 = vtanh.pop %v1106
  %v1108 = vmul.f32 %v1107, 0.5
  %v1109 = vadd.f32 %v1108, 0.5
  %v1110 = vtanh.pop %v1100
  %v1111 = vmul.f32 %v1101, 0.5
  %v1112 = vtanh.pop %v1111
  %v1113 = vmul.f32 %v1112, 0.5
  %v1114 = vadd.f32 %v1113, 0.5
  %v1115 = vmul.f32 %v1109, %v1009
  %v1116 = vmul.f32 %v1105, %v1110
  %v1117 = vadd.f32 %v1115, %v1116
  %v1118 = vtanh.pop %v1117
  %v1119 = vmul.f32 %v1114, %v1118
  %vm1120 = vcmp.gt.s32.totalorder %v455, 3
  %v1121 = vsel %vm1120, 1, 0
  %v1122 = vcvt.s32.f32 %v1121
  %vm1123 = vcmp.le.s32.totalorder %v456, 3
  %v1124 = vsel %vm1123, 1, 0
  %v1125 = vcvt.s32.f32 %v1124
  %1127 = vset.pattern.permute.xlu0 0
  %1128 = vperm.xlu0 %1127, %v1122
  %v1129 = vpop.permute.xlu0 %1128
  %1132 = vset.pattern.permute.xlu0 0
  %1133 = vperm.xlu0 %1132, %v1125
  %v1134 = vpop.permute.xlu0 %1133
  %v1136 = vsel %vm735, %v1129, %v1134
  %vm1137 = vcmp.gt.f32.partialorder %v1136, 0.0
  %v1138 = vsel %vm1137, %v1119, %v1008
  %v1139 = vsel %vm1137, %v1117, %v1009
  %s1140 = scalar_lea.vmem [#allocation2], 128
  %v1141 = vld [vmem:[%s1140] sm:$0xff]
  %v1142 = vld [vmem:[%s1140 + $0x8] sm:$0xff]
  %v1143 = vld [vmem:[%s1140 + $0x10] sm:$0xff]
  %v1144 = vld [vmem:[%s1140 + $0x18] sm:$0xff]
  %v1145 = vpack.c.bf16 %v1138, %v1138
  %1146 = vmatprep.subr.bf16.mxu0 %v561
  %1147 = vmatpush1.bf16.msra.mxu0 %v560
  %1148 = vmatprep.subr.bf16.mxu0 %v565
  %1149 = vmatpush1.bf16.msra.mxu0 %v564
  %1150 = vmatprep.subr.bf16.mxu0 %v569
  %1151 = vmatpush1.bf16.msra.mxu0 %v568
  %1152 = vmatprep.subr.bf16.mxu0 %v573
  %1153 = vmatpush1.bf16.msra.mxu0 %v572
  %1154 = vmatprep.subr.bf16.mxu0 %v577
  %1155 = vmatpush1.bf16.msra.mxu0 %v576
  %1156 = vmatprep.subr.bf16.mxu0 %v581
  %1157 = vmatpush1.bf16.msra.mxu0 %v580
  %1158 = vmatprep.subr.bf16.mxu0 %v585
  %1159 = vmatpush1.bf16.msra.mxu0 %v584
  %1160 = vmatprep.subr.bf16.mxu0 %v589
  %1161 = vmatpush1.bf16.msra.mxu0 %v588
  %1162 = vmatprep.subr.bf16.mxu0 0
  %1163 = vmatpush1.bf16.msra.mxu0 0
  %1164 = vmatprep.subr.bf16.mxu0 0
  %1165 = vmatpush1.bf16.msra.mxu0 0
  %1166 = vmatprep.subr.bf16.mxu0 0
  %1167 = vmatpush1.bf16.msra.mxu0 0
  %1168 = vmatprep.subr.bf16.mxu0 0
  %1169 = vmatpush1.bf16.msra.mxu0 0
  %1170 = vmatprep.subr.bf16.mxu0 0
  %1171 = vmatpush1.bf16.msra.mxu0 0
  %1172 = vmatprep.subr.bf16.mxu0 0
  %1173 = vmatpush1.bf16.msra.mxu0 0
  %1174 = vmatprep.subr.bf16.mxu0 0
  %1175 = vmatpush1.bf16.msra.mxu0 0
  %1176 = vmatprep.subr.bf16.mxu0 0
  %1177 = vmatpush1.bf16.msra.mxu0 0
  %1178 = vmatprep.mubr.bf16.mxu0 0
  %1179 = vmatmul.mubr.bf16.gmra.mrb[0].mxu0 %v1145
  %v1180 = vpop.f32.mrb[0].mxu0
  %v1181 = vadd.f32 0.0, %v1180
  %v1182 = vpop.f32.mrb[0].mxu0
  %v1183 = vadd.f32 0.0, %v1182
  %v1184 = vpop.f32.mrb[0].mxu0
  %v1185 = vpop.f32.mrb[0].mxu0
  %1186 = vdwg.mxu0
  %1187 = vmatprep.subr.bf16.mxu0 %v563
  %1188 = vmatpush1.bf16.msra.mxu0 %v562
  %1189 = vmatprep.subr.bf16.mxu0 %v567
  %1190 = vmatpush1.bf16.msra.mxu0 %v566
  %1191 = vmatprep.subr.bf16.mxu0 %v571
  %1192 = vmatpush1.bf16.msra.mxu0 %v570
  %1193 = vmatprep.subr.bf16.mxu0 %v575
  %1194 = vmatpush1.bf16.msra.mxu0 %v574
  %1195 = vmatprep.subr.bf16.mxu0 %v579
  %1196 = vmatpush1.bf16.msra.mxu0 %v578
  %1197 = vmatprep.subr.bf16.mxu0 %v583
  %1198 = vmatpush1.bf16.msra.mxu0 %v582
  %1199 = vmatprep.subr.bf16.mxu0 %v587
  %1200 = vmatpush1.bf16.msra.mxu0 %v586
  %1201 = vmatprep.subr.bf16.mxu0 %v591
  %1202 = vmatpush1.bf16.msra.mxu0 %v590
  %1203 = vmatprep.subr.bf16.mxu0 0
  %1204 = vmatpush1.bf16.msra.mxu0 0
  %1205 = vmatprep.subr.bf16.mxu0 0
  %1206 = vmatpush1.bf16.msra.mxu0 0
  %1207 = vmatprep.subr.bf16.mxu0 0
  %1208 = vmatpush1.bf16.msra.mxu0 0
  %1209 = vmatprep.subr.bf16.mxu0 0
  %1210 = vmatpush1.bf16.msra.mxu0 0
  %1211 = vmatprep.subr.bf16.mxu0 0
  %1212 = vmatpush1.bf16.msra.mxu0 0
  %1213 = vmatprep.subr.bf16.mxu0 0
  %1214 = vmatpush1.bf16.msra.mxu0 0
  %1215 = vmatprep.subr.bf16.mxu0 0
  %1216 = vmatpush1.bf16.msra.mxu0 0
  %1217 = vmatprep.subr.bf16.mxu0 0
  %1218 = vmatpush1.bf16.msra.mxu0 0
  %1219 = vmatprep.mubr.bf16.mxu0 0
  %1220 = vmatmul.mubr.bf16.gmra.mrb[0].mxu0 %v1145
  %v1221 = vpop.f32.mrb[0].mxu0
  %v1222 = vadd.f32 0.0, %v1221
  %v1223 = vpop.f32.mrb[0].mxu0
  %v1224 = vadd.f32 0.0, %v1223
  %v1225 = vpop.f32.mrb[0].mxu0
  %v1226 = vpop.f32.mrb[0].mxu0
  %1227 = vdwg.mxu0
  %v1228 = vadd.f32 %v1141, %v1181
  %v1229 = vadd.f32 %v1142, %v1183
  %v1230 = vadd.f32 %v1143, %v1222
  %v1231 = vadd.f32 %v1144, %v1224
  %v1232 = vmul.f32 %v1228, 0.5
  %v1233 = vtanh.pop %v1232
  %v1234 = vmul.f32 %v1233, 0.5
  %v1235 = vadd.f32 %v1234, 0.5
  %v1236 = vmul.f32 %v1229, 0.5
  %v1237 = vtanh.pop %v1236
  %v1238 = vmul.f32 %v1237, 0.5
  %v1239 = vadd.f32 %v1238, 0.5
  %v1240 = vtanh.pop %v1230
  %v1241 = vmul.f32 %v1231, 0.5
  %v1242 = vtanh.pop %v1241
  %v1243 = vmul.f32 %v1242, 0.5
  %v1244 = vadd.f32 %v1243, 0.5
  %v1245 = vmul.f32 %v1239, %v1139
  %v1246 = vmul.f32 %v1235, %v1240
  %v1247 = vadd.f32 %v1245, %v1246
  %v1248 = vtanh.pop %v1247
  %v1249 = vmul.f32 %v1244, %v1248
  %vm1250 = vcmp.gt.s32.totalorder %v455, 4
  %v1251 = vsel %vm1250, 1, 0
  %v1252 = vcvt.s32.f32 %v1251
  %vm1253 = vcmp.le.s32.totalorder %v456, 4
  %v1254 = vsel %vm1253, 1, 0
  %v1255 = vcvt.s32.f32 %v1254
  %1257 = vset.pattern.permute.xlu0 0
  %1258 = vperm.xlu0 %1257, %v1252
  %v1259 = vpop.permute.xlu0 %1258
  %1262 = vset.pattern.permute.xlu0 0
  %1263 = vperm.xlu0 %1262, %v1255
  %v1264 = vpop.permute.xlu0 %1263
  %v1266 = vsel %vm735, %v1259, %v1264
  %vm1267 = vcmp.gt.f32.partialorder %v1266, 0.0
  %v1268 = vsel %vm1267, %v1249, %v1138
  %v1269 = vsel %vm1267, %v1247, %v1139
  %s1270 = scalar_lea.vmem [#allocation2], 160
  %v1271 = vld [vmem:[%s1270] sm:$0xff]
  %v1272 = vld [vmem:[%s1270 + $0x8] sm:$0xff]
  %v1273 = vld [vmem:[%s1270 + $0x10] sm:$0xff]
  %v1274 = vld [vmem:[%s1270 + $0x18] sm:$0xff]
  %v1275 = vpack.c.bf16 %v1268, %v1268
  %1276 = vmatprep.subr.bf16.mxu0 %v561
  %1277 = vmatpush1.bf16.msra.mxu0 %v560
  %1278 = vmatprep.subr.bf16.mxu0 %v565
  %1279 = vmatpush1.bf16.msra.mxu0 %v564
  %1280 = vmatprep.subr.bf16.mxu0 %v569
  %1281 = vmatpush1.bf16.msra.mxu0 %v568
  %1282 = vmatprep.subr.bf16.mxu0 %v573
  %1283 = vmatpush1.bf16.msra.mxu0 %v572
  %1284 = vmatprep.subr.bf16.mxu0 %v577
  %1285 = vmatpush1.bf16.msra.mxu0 %v576
  %1286 = vmatprep.subr.bf16.mxu0 %v581
  %1287 = vmatpush1.bf16.msra.mxu0 %v580
  %1288 = vmatprep.subr.bf16.mxu0 %v585
  %1289 = vmatpush1.bf16.msra.mxu0 %v584
  %1290 = vmatprep.subr.bf16.mxu0 %v589
  %1291 = vmatpush1.bf16.msra.mxu0 %v588
  %1292 = vmatprep.subr.bf16.mxu0 0
  %1293 = vmatpush1.bf16.msra.mxu0 0
  %1294 = vmatprep.subr.bf16.mxu0 0
  %1295 = vmatpush1.bf16.msra.mxu0 0
  %1296 = vmatprep.subr.bf16.mxu0 0
  %1297 = vmatpush1.bf16.msra.mxu0 0
  %1298 = vmatprep.subr.bf16.mxu0 0
  %1299 = vmatpush1.bf16.msra.mxu0 0
  %1300 = vmatprep.subr.bf16.mxu0 0
  %1301 = vmatpush1.bf16.msra.mxu0 0
  %1302 = vmatprep.subr.bf16.mxu0 0
  %1303 = vmatpush1.bf16.msra.mxu0 0
  %1304 = vmatprep.subr.bf16.mxu0 0
  %1305 = vmatpush1.bf16.msra.mxu0 0
  %1306 = vmatprep.subr.bf16.mxu0 0
  %1307 = vmatpush1.bf16.msra.mxu0 0
  %1308 = vmatprep.mubr.bf16.mxu0 0
  %1309 = vmatmul.mubr.bf16.gmra.mrb[0].mxu0 %v1275
  %v1310 = vpop.f32.mrb[0].mxu0
  %v1311 = vadd.f32 0.0, %v1310
  %v1312 = vpop.f32.mrb[0].mxu0
  %v1313 = vadd.f32 0.0, %v1312
  %v1314 = vpop.f32.mrb[0].mxu0
  %v1315 = vpop.f32.mrb[0].mxu0
  %1316 = vdwg.mxu0
  %1317 = vmatprep.subr.bf16.mxu0 %v563
  %1318 = vmatpush1.bf16.msra.mxu0 %v562
  %1319 = vmatprep.subr.bf16.mxu0 %v567
  %1320 = vmatpush1.bf16.msra.mxu0 %v566
  %1321 = vmatprep.subr.bf16.mxu0 %v571
  %1322 = vmatpush1.bf16.msra.mxu0 %v570
  %1323 = vmatprep.subr.bf16.mxu0 %v575
  %1324 = vmatpush1.bf16.msra.mxu0 %v574
  %1325 = vmatprep.subr.bf16.mxu0 %v579
  %1326 = vmatpush1.bf16.msra.mxu0 %v578
  %1327 = vmatprep.subr.bf16.mxu0 %v583
  %1328 = vmatpush1.bf16.msra.mxu0 %v582
  %1329 = vmatprep.subr.bf16.mxu0 %v587
  %1330 = vmatpush1.bf16.msra.mxu0 %v586
  %1331 = vmatprep.subr.bf16.mxu0 %v591
  %1332 = vmatpush1.bf16.msra.mxu0 %v590
  %1333 = vmatprep.subr.bf16.mxu0 0
  %1334 = vmatpush1.bf16.msra.mxu0 0
  %1335 = vmatprep.subr.bf16.mxu0 0
  %1336 = vmatpush1.bf16.msra.mxu0 0
  %1337 = vmatprep.subr.bf16.mxu0 0
  %1338 = vmatpush1.bf16.msra.mxu0 0
  %1339 = vmatprep.subr.bf16.mxu0 0
  %1340 = vmatpush1.bf16.msra.mxu0 0
  %1341 = vmatprep.subr.bf16.mxu0 0
  %1342 = vmatpush1.bf16.msra.mxu0 0
  %1343 = vmatprep.subr.bf16.mxu0 0
  %1344 = vmatpush1.bf16.msra.mxu0 0
  %1345 = vmatprep.subr.bf16.mxu0 0
  %1346 = vmatpush1.bf16.msra.mxu0 0
  %1347 = vmatprep.subr.bf16.mxu0 0
  %1348 = vmatpush1.bf16.msra.mxu0 0
  %1349 = vmatprep.mubr.bf16.mxu0 0
  %1350 = vmatmul.mubr.bf16.gmra.mrb[0].mxu0 %v1275
  %v1351 = vpop.f32.mrb[0].mxu0
  %v1352 = vadd.f32 0.0, %v1351
  %v1353 = vpop.f32.mrb[0].mxu0
  %v1354 = vadd.f32 0.0, %v1353
  %v1355 = vpop.f32.mrb[0].mxu0
  %v1356 = vpop.f32.mrb[0].mxu0
  %1357 = vdwg.mxu0
  %v1358 = vadd.f32 %v1271, %v1311
  %v1359 = vadd.f32 %v1272, %v1313
  %v1360 = vadd.f32 %v1273, %v1352
  %v1361 = vadd.f32 %v1274, %v1354
  %v1362 = vmul.f32 %v1358, 0.5
  %v1363 = vtanh.pop %v1362
  %v1364 = vmul.f32 %v1363, 0.5
  %v1365 = vadd.f32 %v1364, 0.5
  %v1366 = vmul.f32 %v1359, 0.5
  %v1367 = vtanh.pop %v1366
  %v1368 = vmul.f32 %v1367, 0.5
  %v1369 = vadd.f32 %v1368, 0.5
  %v1370 = vtanh.pop %v1360
  %v1371 = vmul.f32 %v1361, 0.5
  %v1372 = vtanh.pop %v1371
  %v1373 = vmul.f32 %v1372, 0.5
  %v1374 = vadd.f32 %v1373, 0.5
  %v1375 = vmul.f32 %v1369, %v1269
  %v1376 = vmul.f32 %v1365, %v1370
  %v1377 = vadd.f32 %v1375, %v1376
  %v1378 = vtanh.pop %v1377
  %v1379 = vmul.f32 %v1374, %v1378
  %vm1380 = vcmp.gt.s32.totalorder %v455, 5
  %v1381 = vsel %vm1380, 1, 0
  %v1382 = vcvt.s32.f32 %v1381
  %vm1383 = vcmp.le.s32.totalorder %v456, 5
  %v1384 = vsel %vm1383, 1, 0
  %v1385 = vcvt.s32.f32 %v1384
  %1387 = vset.pattern.permute.xlu0 0
  %1388 = vperm.xlu0 %1387, %v1382
  %v1389 = vpop.permute.xlu0 %1388
  %1392 = vset.pattern.permute.xlu0 0
  %1393 = vperm.xlu0 %1392, %v1385
  %v1394 = vpop.permute.xlu0 %1393
  %v1396 = vsel %vm735, %v1389, %v1394
  %vm1397 = vcmp.gt.f32.partialorder %v1396, 0.0
  %v1398 = vsel %vm1397, %v1379, %v1268
  %v1399 = vsel %vm1397, %v1377, %v1269
  %s1400 = scalar_lea.vmem [#allocation2], 192
  %v1401 = vld [vmem:[%s1400] sm:$0xff]
  %v1402 = vld [vmem:[%s1400 + $0x8] sm:$0xff]
  %v1403 = vld [vmem:[%s1400 + $0x10] sm:$0xff]
  %v1404 = vld [vmem:[%s1400 + $0x18] sm:$0xff]
  %v1405 = vpack.c.bf16 %v1398, %v1398
  %1406 = vmatprep.subr.bf16.mxu0 %v561
  %1407 = vmatpush1.bf16.msra.mxu0 %v560
  %1408 = vmatprep.subr.bf16.mxu0 %v565
  %1409 = vmatpush1.bf16.msra.mxu0 %v564
  %1410 = vmatprep.subr.bf16.mxu0 %v569
  %1411 = vmatpush1.bf16.msra.mxu0 %v568
  %1412 = vmatprep.subr.bf16.mxu0 %v573
  %1413 = vmatpush1.bf16.msra.mxu0 %v572
  %1414 = vmatprep.subr.bf16.mxu0 %v577
  %1415 = vmatpush1.bf16.msra.mxu0 %v576
  %1416 = vmatprep.subr.bf16.mxu0 %v581
  %1417 = vmatpush1.bf16.msra.mxu0 %v580
  %1418 = vmatprep.subr.bf16.mxu0 %v585
  %1419 = vmatpush1.bf16.msra.mxu0 %v584
  %1420 = vmatprep.subr.bf16.mxu0 %v589
  %1421 = vmatpush1.bf16.msra.mxu0 %v588
  %1422 = vmatprep.subr.bf16.mxu0 0
  %1423 = vmatpush1.bf16.msra.mxu0 0
  %1424 = vmatprep.subr.bf16.mxu0 0
  %1425 = vmatpush1.bf16.msra.mxu0 0
  %1426 = vmatprep.subr.bf16.mxu0 0
  %1427 = vmatpush1.bf16.msra.mxu0 0
  %1428 = vmatprep.subr.bf16.mxu0 0
  %1429 = vmatpush1.bf16.msra.mxu0 0
  %1430 = vmatprep.subr.bf16.mxu0 0
  %1431 = vmatpush1.bf16.msra.mxu0 0
  %1432 = vmatprep.subr.bf16.mxu0 0
  %1433 = vmatpush1.bf16.msra.mxu0 0
  %1434 = vmatprep.subr.bf16.mxu0 0
  %1435 = vmatpush1.bf16.msra.mxu0 0
  %1436 = vmatprep.subr.bf16.mxu0 0
  %1437 = vmatpush1.bf16.msra.mxu0 0
  %1438 = vmatprep.mubr.bf16.mxu0 0
  %1439 = vmatmul.mubr.bf16.gmra.mrb[0].mxu0 %v1405
  %v1440 = vpop.f32.mrb[0].mxu0
  %v1441 = vadd.f32 0.0, %v1440
  %v1442 = vpop.f32.mrb[0].mxu0
  %v1443 = vadd.f32 0.0, %v1442
  %v1444 = vpop.f32.mrb[0].mxu0
  %v1445 = vpop.f32.mrb[0].mxu0
  %1446 = vdwg.mxu0
  %1447 = vmatprep.subr.bf16.mxu0 %v563
  %1448 = vmatpush1.bf16.msra.mxu0 %v562
  %1449 = vmatprep.subr.bf16.mxu0 %v567
  %1450 = vmatpush1.bf16.msra.mxu0 %v566
  %1451 = vmatprep.subr.bf16.mxu0 %v571
  %1452 = vmatpush1.bf16.msra.mxu0 %v570
  %1453 = vmatprep.subr.bf16.mxu0 %v575
  %1454 = vmatpush1.bf16.msra.mxu0 %v574
  %1455 = vmatprep.subr.bf16.mxu0 %v579
  %1456 = vmatpush1.bf16.msra.mxu0 %v578
  %1457 = vmatprep.subr.bf16.mxu0 %v583
  %1458 = vmatpush1.bf16.msra.mxu0 %v582
  %1459 = vmatprep.subr.bf16.mxu0 %v587
  %1460 = vmatpush1.bf16.msra.mxu0 %v586
  %1461 = vmatprep.subr.bf16.mxu0 %v591
  %1462 = vmatpush1.bf16.msra.mxu0 %v590
  %1463 = vmatprep.subr.bf16.mxu0 0
  %1464 = vmatpush1.bf16.msra.mxu0 0
  %1465 = vmatprep.subr.bf16.mxu0 0
  %1466 = vmatpush1.bf16.msra.mxu0 0
  %1467 = vmatprep.subr.bf16.mxu0 0
  %1468 = vmatpush1.bf16.msra.mxu0 0
  %1469 = vmatprep.subr.bf16.mxu0 0
  %1470 = vmatpush1.bf16.msra.mxu0 0
  %1471 = vmatprep.subr.bf16.mxu0 0
  %1472 = vmatpush1.bf16.msra.mxu0 0
  %1473 = vmatprep.subr.bf16.mxu0 0
  %1474 = vmatpush1.bf16.msra.mxu0 0
  %1475 = vmatprep.subr.bf16.mxu0 0
  %1476 = vmatpush1.bf16.msra.mxu0 0
  %1477 = vmatprep.subr.bf16.mxu0 0
  %1478 = vmatpush1.bf16.msra.mxu0 0
  %1479 = vmatprep.mubr.bf16.mxu0 0
  %1480 = vmatmul.mubr.bf16.gmra.mrb[0].mxu0 %v1405
  %v1481 = vpop.f32.mrb[0].mxu0
  %v1482 = vadd.f32 0.0, %v1481
  %v1483 = vpop.f32.mrb[0].mxu0
  %v1484 = vadd.f32 0.0, %v1483
  %v1485 = vpop.f32.mrb[0].mxu0
  %v1486 = vpop.f32.mrb[0].mxu0
  %1487 = vdwg.mxu0
  %v1488 = vadd.f32 %v1401, %v1441
  %v1489 = vadd.f32 %v1402, %v1443
  %v1490 = vadd.f32 %v1403, %v1482
  %v1491 = vadd.f32 %v1404, %v1484
  %v1492 = vmul.f32 %v1488, 0.5
  %v1493 = vtanh.pop %v1492
  %v1494 = vmul.f32 %v1493, 0.5
  %v1495 = vadd.f32 %v1494, 0.5
  %v1496 = vmul.f32 %v1489, 0.5
  %v1497 = vtanh.pop %v1496
  %v1498 = vmul.f32 %v1497, 0.5
  %v1499 = vadd.f32 %v1498, 0.5
  %v1500 = vtanh.pop %v1490
  %v1501 = vmul.f32 %v1491, 0.5
  %v1502 = vtanh.pop %v1501
  %v1503 = vmul.f32 %v1502, 0.5
  %v1504 = vadd.f32 %v1503, 0.5
  %v1505 = vmul.f32 %v1499, %v1399
  %v1506 = vmul.f32 %v1495, %v1500
  %v1507 = vadd.f32 %v1505, %v1506
  %v1508 = vtanh.pop %v1507
  %v1509 = vmul.f32 %v1504, %v1508
  %vm1510 = vcmp.gt.s32.totalorder %v455, 6
  %v1511 = vsel %vm1510, 1, 0
  %v1512 = vcvt.s32.f32 %v1511
  %vm1513 = vcmp.le.s32.totalorder %v456, 6
  %v1514 = vsel %vm1513, 1, 0
  %v1515 = vcvt.s32.f32 %v1514
  %1517 = vset.pattern.permute.xlu0 0
  %1518 = vperm.xlu0 %1517, %v1512
  %v1519 = vpop.permute.xlu0 %1518
  %1522 = vset.pattern.permute.xlu0 0
  %1523 = vperm.xlu0 %1522, %v1515
  %v1524 = vpop.permute.xlu0 %1523
  %v1526 = vsel %vm735, %v1519, %v1524
  %vm1527 = vcmp.gt.f32.partialorder %v1526, 0.0
  %v1528 = vsel %vm1527, %v1509, %v1398
  %v1529 = vsel %vm1527, %v1507, %v1399
  %s1530 = scalar_lea.vmem [#allocation2], 224
  %v1531 = vld [vmem:[%s1530] sm:$0xff]
  %v1532 = vld [vmem:[%s1530 + $0x8] sm:$0xff]
  %v1533 = vld [vmem:[%s1530 + $0x10] sm:$0xff]
  %v1534 = vld [vmem:[%s1530 + $0x18] sm:$0xff]
  %v1535 = vpack.c.bf16 %v1528, %v1528
  %1536 = vmatprep.subr.bf16.mxu0 %v561
  %1537 = vmatpush1.bf16.msra.mxu0 %v560
  %1538 = vmatprep.subr.bf16.mxu0 %v565
  %1539 = vmatpush1.bf16.msra.mxu0 %v564
  %1540 = vmatprep.subr.bf16.mxu0 %v569
  %1541 = vmatpush1.bf16.msra.mxu0 %v568
  %1542 = vmatprep.subr.bf16.mxu0 %v573
  %1543 = vmatpush1.bf16.msra.mxu0 %v572
  %1544 = vmatprep.subr.bf16.mxu0 %v577
  %1545 = vmatpush1.bf16.msra.mxu0 %v576
  %1546 = vmatprep.subr.bf16.mxu0 %v581
  %1547 = vmatpush1.bf16.msra.mxu0 %v580
  %1548 = vmatprep.subr.bf16.mxu0 %v585
  %1549 = vmatpush1.bf16.msra.mxu0 %v584
  %1550 = vmatprep.subr.bf16.mxu0 %v589
  %1551 = vmatpush1.bf16.msra.mxu0 %v588
  %1552 = vmatprep.subr.bf16.mxu0 0
  %1553 = vmatpush1.bf16.msra.mxu0 0
  %1554 = vmatprep.subr.bf16.mxu0 0
  %1555 = vmatpush1.bf16.msra.mxu0 0
  %1556 = vmatprep.subr.bf16.mxu0 0
  %1557 = vmatpush1.bf16.msra.mxu0 0
  %1558 = vmatprep.subr.bf16.mxu0 0
  %1559 = vmatpush1.bf16.msra.mxu0 0
  %1560 = vmatprep.subr.bf16.mxu0 0
  %1561 = vmatpush1.bf16.msra.mxu0 0
  %1562 = vmatprep.subr.bf16.mxu0 0
  %1563 = vmatpush1.bf16.msra.mxu0 0
  %1564 = vmatprep.subr.bf16.mxu0 0
  %1565 = vmatpush1.bf16.msra.mxu0 0
  %1566 = vmatprep.subr.bf16.mxu0 0
  %1567 = vmatpush1.bf16.msra.mxu0 0
  %1568 = vmatprep.mubr.bf16.mxu0 0
  %1569 = vmatmul.mubr.bf16.gmra.mrb[0].mxu0 %v1535
  %v1570 = vpop.f32.mrb[0].mxu0
  %v1571 = vadd.f32 0.0, %v1570
  %v1572 = vpop.f32.mrb[0].mxu0
  %v1573 = vadd.f32 0.0, %v1572
  %v1574 = vpop.f32.mrb[0].mxu0
  %v1575 = vpop.f32.mrb[0].mxu0
  %1576 = vdwg.mxu0
  %1577 = vmatprep.subr.bf16.mxu0 %v563
  %1578 = vmatpush1.bf16.msra.mxu0 %v562
  %1579 = vmatprep.subr.bf16.mxu0 %v567
  %1580 = vmatpush1.bf16.msra.mxu0 %v566
  %1581 = vmatprep.subr.bf16.mxu0 %v571
  %1582 = vmatpush1.bf16.msra.mxu0 %v570
  %1583 = vmatprep.subr.bf16.mxu0 %v575
  %1584 = vmatpush1.bf16.msra.mxu0 %v574
  %1585 = vmatprep.subr.bf16.mxu0 %v579
  %1586 = vmatpush1.bf16.msra.mxu0 %v578
  %1587 = vmatprep.subr.bf16.mxu0 %v583
  %1588 = vmatpush1.bf16.msra.mxu0 %v582
  %1589 = vmatprep.subr.bf16.mxu0 %v587
  %1590 = vmatpush1.bf16.msra.mxu0 %v586
  %1591 = vmatprep.subr.bf16.mxu0 %v591
  %1592 = vmatpush1.bf16.msra.mxu0 %v590
  %1593 = vmatprep.subr.bf16.mxu0 0
  %1594 = vmatpush1.bf16.msra.mxu0 0
  %1595 = vmatprep.subr.bf16.mxu0 0
  %1596 = vmatpush1.bf16.msra.mxu0 0
  %1597 = vmatprep.subr.bf16.mxu0 0
  %1598 = vmatpush1.bf16.msra.mxu0 0
  %1599 = vmatprep.subr.bf16.mxu0 0
  %1600 = vmatpush1.bf16.msra.mxu0 0
  %1601 = vmatprep.subr.bf16.mxu0 0
  %1602 = vmatpush1.bf16.msra.mxu0 0
  %1603 = vmatprep.subr.bf16.mxu0 0
  %1604 = vmatpush1.bf16.msra.mxu0 0
  %1605 = vmatprep.subr.bf16.mxu0 0
  %1606 = vmatpush1.bf16.msra.mxu0 0
  %1607 = vmatprep.subr.bf16.mxu0 0
  %1608 = vmatpush1.bf16.msra.mxu0 0
  %1609 = vmatprep.mubr.bf16.mxu0 0
  %1610 = vmatmul.mubr.bf16.gmra.mrb[0].mxu0 %v1535
  %v1611 = vpop.f32.mrb[0].mxu0
  %v1612 = vadd.f32 0.0, %v1611
  %v1613 = vpop.f32.mrb[0].mxu0
  %v1614 = vadd.f32 0.0, %v1613
  %v1615 = vpop.f32.mrb[0].mxu0
  %v1616 = vpop.f32.mrb[0].mxu0
  %1617 = vdwg.mxu0
  %v1618 = vadd.f32 %v1531, %v1571
  %v1619 = vadd.f32 %v1532, %v1573
  %v1620 = vadd.f32 %v1533, %v1612
  %v1621 = vadd.f32 %v1534, %v1614
  %v1622 = vmul.f32 %v1618, 0.5
  %v1623 = vtanh.pop %v1622
  %v1624 = vmul.f32 %v1623, 0.5
  %v1625 = vadd.f32 %v1624, 0.5
  %v1626 = vmul.f32 %v1619, 0.5
  %v1627 = vtanh.pop %v1626
  %v1628 = vmul.f32 %v1627, 0.5
  %v1629 = vadd.f32 %v1628, 0.5
  %v1630 = vtanh.pop %v1620
  %v1631 = vmul.f32 %v1621, 0.5
  %v1632 = vtanh.pop %v1631
  %v1633 = vmul.f32 %v1632, 0.5
  %v1634 = vadd.f32 %v1633, 0.5
  %v1635 = vmul.f32 %v1629, %v1529
  %v1636 = vmul.f32 %v1625, %v1630
  %v1637 = vadd.f32 %v1635, %v1636
  %v1638 = vtanh.pop %v1637
  %v1639 = vmul.f32 %v1634, %v1638
  %vm1640 = vcmp.gt.s32.totalorder %v455, 7
  %v1641 = vsel %vm1640, 1, 0
  %v1642 = vcvt.s32.f32 %v1641
  %vm1643 = vcmp.le.s32.totalorder %v456, 7
  %v1644 = vsel %vm1643, 1, 0
  %v1645 = vcvt.s32.f32 %v1644
  %1647 = vset.pattern.permute.xlu0 0
  %1648 = vperm.xlu0 %1647, %v1642
  %v1649 = vpop.permute.xlu0 %1648
  %1652 = vset.pattern.permute.xlu0 0
  %1653 = vperm.xlu0 %1652, %v1645
  %v1654 = vpop.permute.xlu0 %1653
  %v1656 = vsel %vm735, %v1649, %v1654
  %vm1657 = vcmp.gt.f32.partialorder %v1656, 0.0
  %v1658 = vsel %vm1657, %v1639, %v1528
  %v1659 = vsel %vm1657, %v1637, %v1529
  %s1660 = scalar_lea.vmem [#allocation2], 256
  %v1661 = vld [vmem:[%s1660] sm:$0xff]
  %v1662 = vld [vmem:[%s1660 + $0x8] sm:$0xff]
  %v1663 = vld [vmem:[%s1660 + $0x10] sm:$0xff]
  %v1664 = vld [vmem:[%s1660 + $0x18] sm:$0xff]
  %v1665 = vpack.c.bf16 %v1658, %v1658
  %1666 = vmatprep.subr.bf16.mxu0 %v561
  %1667 = vmatpush1.bf16.msra.mxu0 %v560
  %1668 = vmatprep.subr.bf16.mxu0 %v565
  %1669 = vmatpush1.bf16.msra.mxu0 %v564
  %1670 = vmatprep.subr.bf16.mxu0 %v569
  %1671 = vmatpush1.bf16.msra.mxu0 %v568
  %1672 = vmatprep.subr.bf16.mxu0 %v573
  %1673 = vmatpush1.bf16.msra.mxu0 %v572
  %1674 = vmatprep.subr.bf16.mxu0 %v577
  %1675 = vmatpush1.bf16.msra.mxu0 %v576
  %1676 = vmatprep.subr.bf16.mxu0 %v581
  %1677 = vmatpush1.bf16.msra.mxu0 %v580
  %1678 = vmatprep.subr.bf16.mxu0 %v585
  %1679 = vmatpush1.bf16.msra.mxu0 %v584
  %1680 = vmatprep.subr.bf16.mxu0 %v589
  %1681 = vmatpush1.bf16.msra.mxu0 %v588
  %1682 = vmatprep.subr.bf16.mxu0 0
  %1683 = vmatpush1.bf16.msra.mxu0 0
  %1684 = vmatprep.subr.bf16.mxu0 0
  %1685 = vmatpush1.bf16.msra.mxu0 0
  %1686 = vmatprep.subr.bf16.mxu0 0
  %1687 = vmatpush1.bf16.msra.mxu0 0
  %1688 = vmatprep.subr.bf16.mxu0 0
  %1689 = vmatpush1.bf16.msra.mxu0 0
  %1690 = vmatprep.subr.bf16.mxu0 0
  %1691 = vmatpush1.bf16.msra.mxu0 0
  %1692 = vmatprep.subr.bf16.mxu0 0
  %1693 = vmatpush1.bf16.msra.mxu0 0
  %1694 = vmatprep.subr.bf16.mxu0 0
  %1695 = vmatpush1.bf16.msra.mxu0 0
  %1696 = vmatprep.subr.bf16.mxu0 0
  %1697 = vmatpush1.bf16.msra.mxu0 0
  %1698 = vmatprep.mubr.bf16.mxu0 0
  %1699 = vmatmul.mubr.bf16.gmra.mrb[0].mxu0 %v1665
  %v1700 = vpop.f32.mrb[0].mxu0
  %v1701 = vadd.f32 0.0, %v1700
  %v1702 = vpop.f32.mrb[0].mxu0
  %v1703 = vadd.f32 0.0, %v1702
  %v1704 = vpop.f32.mrb[0].mxu0
  %v1705 = vpop.f32.mrb[0].mxu0
  %1706 = vdwg.mxu0
  %1707 = vmatprep.subr.bf16.mxu0 %v563
  %1708 = vmatpush1.bf16.msra.mxu0 %v562
  %1709 = vmatprep.subr.bf16.mxu0 %v567
  %1710 = vmatpush1.bf16.msra.mxu0 %v566
  %1711 = vmatprep.subr.bf16.mxu0 %v571
  %1712 = vmatpush1.bf16.msra.mxu0 %v570
  %1713 = vmatprep.subr.bf16.mxu0 %v575
  %1714 = vmatpush1.bf16.msra.mxu0 %v574
  %1715 = vmatprep.subr.bf16.mxu0 %v579
  %1716 = vmatpush1.bf16.msra.mxu0 %v578
  %1717 = vmatprep.subr.bf16.mxu0 %v583
  %1718 = vmatpush1.bf16.msra.mxu0 %v582
  %1719 = vmatprep.subr.bf16.mxu0 %v587
  %1720 = vmatpush1.bf16.msra.mxu0 %v586
  %1721 = vmatprep.subr.bf16.mxu0 %v591
  %1722 = vmatpush1.bf16.msra.mxu0 %v590
  %1723 = vmatprep.subr.bf16.mxu0 0
  %1724 = vmatpush1.bf16.msra.mxu0 0
  %1725 = vmatprep.subr.bf16.mxu0 0
  %1726 = vmatpush1.bf16.msra.mxu0 0
  %1727 = vmatprep.subr.bf16.mxu0 0
  %1728 = vmatpush1.bf16.msra.mxu0 0
  %1729 = vmatprep.subr.bf16.mxu0 0
  %1730 = vmatpush1.bf16.msra.mxu0 0
  %1731 = vmatprep.subr.bf16.mxu0 0
  %1732 = vmatpush1.bf16.msra.mxu0 0
  %1733 = vmatprep.subr.bf16.mxu0 0
  %1734 = vmatpush1.bf16.msra.mxu0 0
  %1735 = vmatprep.subr.bf16.mxu0 0
  %1736 = vmatpush1.bf16.msra.mxu0 0
  %1737 = vmatprep.subr.bf16.mxu0 0
  %1738 = vmatpush1.bf16.msra.mxu0 0
  %1739 = vmatprep.mubr.bf16.mxu0 0
  %1740 = vmatmul.mubr.bf16.gmra.mrb[0].mxu0 %v1665
  %v1741 = vpop.f32.mrb[0].mxu0
  %v1742 = vadd.f32 0.0, %v1741
  %v1743 = vpop.f32.mrb[0].mxu0
  %v1744 = vadd.f32 0.0, %v1743
  %v1745 = vpop.f32.mrb[0].mxu0
  %v1746 = vpop.f32.mrb[0].mxu0
  %1747 = vdwg.mxu0
  %v1748 = vadd.f32 %v1661, %v1701
  %v1749 = vadd.f32 %v1662, %v1703
  %v1750 = vadd.f32 %v1663, %v1742
  %v1751 = vadd.f32 %v1664, %v1744
  %v1752 = vmul.f32 %v1748, 0.5
  %v1753 = vtanh.pop %v1752
  %v1754 = vmul.f32 %v1753, 0.5
  %v1755 = vadd.f32 %v1754, 0.5
  %v1756 = vmul.f32 %v1749, 0.5
  %v1757 = vtanh.pop %v1756
  %v1758 = vmul.f32 %v1757, 0.5
  %v1759 = vadd.f32 %v1758, 0.5
  %v1760 = vtanh.pop %v1750
  %v1761 = vmul.f32 %v1751, 0.5
  %v1762 = vtanh.pop %v1761
  %v1763 = vmul.f32 %v1762, 0.5
  %v1764 = vadd.f32 %v1763, 0.5
  %v1765 = vmul.f32 %v1759, %v1659
  %v1766 = vmul.f32 %v1755, %v1760
  %v1767 = vadd.f32 %v1765, %v1766
  %v1768 = vtanh.pop %v1767
  %v1769 = vmul.f32 %v1764, %v1768
  %vm1770 = vcmp.gt.s32.totalorder %v455, 8
  %v1771 = vsel %vm1770, 1, 0
  %v1772 = vcvt.s32.f32 %v1771
  %vm1773 = vcmp.le.s32.totalorder %v456, 8
  %v1774 = vsel %vm1773, 1, 0
  %v1775 = vcvt.s32.f32 %v1774
  %1777 = vset.pattern.permute.xlu0 0
  %1778 = vperm.xlu0 %1777, %v1772
  %v1779 = vpop.permute.xlu0 %1778
  %1782 = vset.pattern.permute.xlu0 0
  %1783 = vperm.xlu0 %1782, %v1775
  %v1784 = vpop.permute.xlu0 %1783
  %v1786 = vsel %vm735, %v1779, %v1784
  %vm1787 = vcmp.gt.f32.partialorder %v1786, 0.0
  %v1788 = vsel %vm1787, %v1769, %v1658
  %v1789 = vsel %vm1787, %v1767, %v1659
  %s1790 = scalar_lea.vmem [#allocation2], 288
  %v1791 = vld [vmem:[%s1790] sm:$0xff]
  %v1792 = vld [vmem:[%s1790 + $0x8] sm:$0xff]
  %v1793 = vld [vmem:[%s1790 + $0x10] sm:$0xff]
  %v1794 = vld [vmem:[%s1790 + $0x18] sm:$0xff]
  %v1795 = vpack.c.bf16 %v1788, %v1788
  %1796 = vmatprep.subr.bf16.mxu0 %v561
  %1797 = vmatpush1.bf16.msra.mxu0 %v560
  %1798 = vmatprep.subr.bf16.mxu0 %v565
  %1799 = vmatpush1.bf16.msra.mxu0 %v564
  %1800 = vmatprep.subr.bf16.mxu0 %v569
  %1801 = vmatpush1.bf16.msra.mxu0 %v568
  %1802 = vmatprep.subr.bf16.mxu0 %v573
  %1803 = vmatpush1.bf16.msra.mxu0 %v572
  %1804 = vmatprep.subr.bf16.mxu0 %v577
  %1805 = vmatpush1.bf16.msra.mxu0 %v576
  %1806 = vmatprep.subr.bf16.mxu0 %v581
  %1807 = vmatpush1.bf16.msra.mxu0 %v580
  %1808 = vmatprep.subr.bf16.mxu0 %v585
  %1809 = vmatpush1.bf16.msra.mxu0 %v584
  %1810 = vmatprep.subr.bf16.mxu0 %v589
  %1811 = vmatpush1.bf16.msra.mxu0 %v588
  %1812 = vmatprep.subr.bf16.mxu0 0
  %1813 = vmatpush1.bf16.msra.mxu0 0
  %1814 = vmatprep.subr.bf16.mxu0 0
  %1815 = vmatpush1.bf16.msra.mxu0 0
  %1816 = vmatprep.subr.bf16.mxu0 0
  %1817 = vmatpush1.bf16.msra.mxu0 0
  %1818 = vmatprep.subr.bf16.mxu0 0
  %1819 = vmatpush1.bf16.msra.mxu0 0
  %1820 = vmatprep.subr.bf16.mxu0 0
  %1821 = vmatpush1.bf16.msra.mxu0 0
  %1822 = vmatprep.subr.bf16.mxu0 0
  %1823 = vmatpush1.bf16.msra.mxu0 0
  %1824 = vmatprep.subr.bf16.mxu0 0
  %1825 = vmatpush1.bf16.msra.mxu0 0
  %1826 = vmatprep.subr.bf16.mxu0 0
  %1827 = vmatpush1.bf16.msra.mxu0 0
  %1828 = vmatprep.mubr.bf16.mxu0 0
  %1829 = vmatmul.mubr.bf16.gmra.mrb[0].mxu0 %v1795
  %v1830 = vpop.f32.mrb[0].mxu0
  %v1831 = vadd.f32 0.0, %v1830
  %v1832 = vpop.f32.mrb[0].mxu0
  %v1833 = vadd.f32 0.0, %v1832
  %v1834 = vpop.f32.mrb[0].mxu0
  %v1835 = vpop.f32.mrb[0].mxu0
  %1836 = vdwg.mxu0
  %1837 = vmatprep.subr.bf16.mxu0 %v563
  %1838 = vmatpush1.bf16.msra.mxu0 %v562
  %1839 = vmatprep.subr.bf16.mxu0 %v567
  %1840 = vmatpush1.bf16.msra.mxu0 %v566
  %1841 = vmatprep.subr.bf16.mxu0 %v571
  %1842 = vmatpush1.bf16.msra.mxu0 %v570
  %1843 = vmatprep.subr.bf16.mxu0 %v575
  %1844 = vmatpush1.bf16.msra.mxu0 %v574
  %1845 = vmatprep.subr.bf16.mxu0 %v579
  %1846 = vmatpush1.bf16.msra.mxu0 %v578
  %1847 = vmatprep.subr.bf16.mxu0 %v583
  %1848 = vmatpush1.bf16.msra.mxu0 %v582
  %1849 = vmatprep.subr.bf16.mxu0 %v587
  %1850 = vmatpush1.bf16.msra.mxu0 %v586
  %1851 = vmatprep.subr.bf16.mxu0 %v591
  %1852 = vmatpush1.bf16.msra.mxu0 %v590
  %1853 = vmatprep.subr.bf16.mxu0 0
  %1854 = vmatpush1.bf16.msra.mxu0 0
  %1855 = vmatprep.subr.bf16.mxu0 0
  %1856 = vmatpush1.bf16.msra.mxu0 0
  %1857 = vmatprep.subr.bf16.mxu0 0
  %1858 = vmatpush1.bf16.msra.mxu0 0
  %1859 = vmatprep.subr.bf16.mxu0 0
  %1860 = vmatpush1.bf16.msra.mxu0 0
  %1861 = vmatprep.subr.bf16.mxu0 0
  %1862 = vmatpush1.bf16.msra.mxu0 0
  %1863 = vmatprep.subr.bf16.mxu0 0
  %1864 = vmatpush1.bf16.msra.mxu0 0
  %1865 = vmatprep.subr.bf16.mxu0 0
  %1866 = vmatpush1.bf16.msra.mxu0 0
  %1867 = vmatprep.subr.bf16.mxu0 0
  %1868 = vmatpush1.bf16.msra.mxu0 0
  %1869 = vmatprep.mubr.bf16.mxu0 0
  %1870 = vmatmul.mubr.bf16.gmra.mrb[0].mxu0 %v1795
  %v1871 = vpop.f32.mrb[0].mxu0
  %v1872 = vadd.f32 0.0, %v1871
  %v1873 = vpop.f32.mrb[0].mxu0
  %v1874 = vadd.f32 0.0, %v1873
  %v1875 = vpop.f32.mrb[0].mxu0
  %v1876 = vpop.f32.mrb[0].mxu0
  %1877 = vdwg.mxu0
  %v1878 = vadd.f32 %v1791, %v1831
  %v1879 = vadd.f32 %v1792, %v1833
  %v1880 = vadd.f32 %v1793, %v1872
  %v1881 = vadd.f32 %v1794, %v1874
  %v1882 = vmul.f32 %v1878, 0.5
  %v1883 = vtanh.pop %v1882
  %v1884 = vmul.f32 %v1883, 0.5
  %v1885 = vadd.f32 %v1884, 0.5
  %v1886 = vmul.f32 %v1879, 0.5
  %v1887 = vtanh.pop %v1886
  %v1888 = vmul.f32 %v1887, 0.5
  %v1889 = vadd.f32 %v1888, 0.5
  %v1890 = vtanh.pop %v1880
  %v1891 = vmul.f32 %v1881, 0.5
  %v1892 = vtanh.pop %v1891
  %v1893 = vmul.f32 %v1892, 0.5
  %v1894 = vadd.f32 %v1893, 0.5
  %v1895 = vmul.f32 %v1889, %v1789
  %v1896 = vmul.f32 %v1885, %v1890
  %v1897 = vadd.f32 %v1895, %v1896
  %v1898 = vtanh.pop %v1897
  %v1899 = vmul.f32 %v1894, %v1898
  %vm1900 = vcmp.gt.s32.totalorder %v455, 9
  %v1901 = vsel %vm1900, 1, 0
  %v1902 = vcvt.s32.f32 %v1901
  %vm1903 = vcmp.le.s32.totalorder %v456, 9
  %v1904 = vsel %vm1903, 1, 0
  %v1905 = vcvt.s32.f32 %v1904
  %1907 = vset.pattern.permute.xlu0 0
  %1908 = vperm.xlu0 %1907, %v1902
  %v1909 = vpop.permute.xlu0 %1908
  %1912 = vset.pattern.permute.xlu0 0
  %1913 = vperm.xlu0 %1912, %v1905
  %v1914 = vpop.permute.xlu0 %1913
  %v1916 = vsel %vm735, %v1909, %v1914
  %vm1917 = vcmp.gt.f32.partialorder %v1916, 0.0
  %v1918 = vsel %vm1917, %v1899, %v1788
  %v1919 = vsel %vm1917, %v1897, %v1789
  %s1920 = scalar_lea.vmem [#allocation2], 320
  %v1921 = vld [vmem:[%s1920] sm:$0xff]
  %v1922 = vld [vmem:[%s1920 + $0x8] sm:$0xff]
  %v1923 = vld [vmem:[%s1920 + $0x10] sm:$0xff]
  %v1924 = vld [vmem:[%s1920 + $0x18] sm:$0xff]
  %v1925 = vpack.c.bf16 %v1918, %v1918
  %1926 = vmatprep.subr.bf16.mxu0 %v561
  %1927 = vmatpush1.bf16.msra.mxu0 %v560
  %1928 = vmatprep.subr.bf16.mxu0 %v565
  %1929 = vmatpush1.bf16.msra.mxu0 %v564
  %1930 = vmatprep.subr.bf16.mxu0 %v569
  %1931 = vmatpush1.bf16.msra.mxu0 %v568
  %1932 = vmatprep.subr.bf16.mxu0 %v573
  %1933 = vmatpush1.bf16.msra.mxu0 %v572
  %1934 = vmatprep.subr.bf16.mxu0 %v577
  %1935 = vmatpush1.bf16.msra.mxu0 %v576
  %1936 = vmatprep.subr.bf16.mxu0 %v581
  %1937 = vmatpush1.bf16.msra.mxu0 %v580
  %1938 = vmatprep.subr.bf16.mxu0 %v585
  %1939 = vmatpush1.bf16.msra.mxu0 %v584
  %1940 = vmatprep.subr.bf16.mxu0 %v589
  %1941 = vmatpush1.bf16.msra.mxu0 %v588
  %1942 = vmatprep.subr.bf16.mxu0 0
  %1943 = vmatpush1.bf16.msra.mxu0 0
  %1944 = vmatprep.subr.bf16.mxu0 0
  %1945 = vmatpush1.bf16.msra.mxu0 0
  %1946 = vmatprep.subr.bf16.mxu0 0
  %1947 = vmatpush1.bf16.msra.mxu0 0
  %1948 = vmatprep.subr.bf16.mxu0 0
  %1949 = vmatpush1.bf16.msra.mxu0 0
  %1950 = vmatprep.subr.bf16.mxu0 0
  %1951 = vmatpush1.bf16.msra.mxu0 0
  %1952 = vmatprep.subr.bf16.mxu0 0
  %1953 = vmatpush1.bf16.msra.mxu0 0
  %1954 = vmatprep.subr.bf16.mxu0 0
  %1955 = vmatpush1.bf16.msra.mxu0 0
  %1956 = vmatprep.subr.bf16.mxu0 0
  %1957 = vmatpush1.bf16.msra.mxu0 0
  %1958 = vmatprep.mubr.bf16.mxu0 0
  %1959 = vmatmul.mubr.bf16.gmra.mrb[0].mxu0 %v1925
  %v1960 = vpop.f32.mrb[0].mxu0
  %v1961 = vadd.f32 0.0, %v1960
  %v1962 = vpop.f32.mrb[0].mxu0
  %v1963 = vadd.f32 0.0, %v1962
  %v1964 = vpop.f32.mrb[0].mxu0
  %v1965 = vpop.f32.mrb[0].mxu0
  %1966 = vdwg.mxu0
  %1967 = vmatprep.subr.bf16.mxu0 %v563
  %1968 = vmatpush1.bf16.msra.mxu0 %v562
  %1969 = vmatprep.subr.bf16.mxu0 %v567
  %1970 = vmatpush1.bf16.msra.mxu0 %v566
  %1971 = vmatprep.subr.bf16.mxu0 %v571
  %1972 = vmatpush1.bf16.msra.mxu0 %v570
  %1973 = vmatprep.subr.bf16.mxu0 %v575
  %1974 = vmatpush1.bf16.msra.mxu0 %v574
  %1975 = vmatprep.subr.bf16.mxu0 %v579
  %1976 = vmatpush1.bf16.msra.mxu0 %v578
  %1977 = vmatprep.subr.bf16.mxu0 %v583
  %1978 = vmatpush1.bf16.msra.mxu0 %v582
  %1979 = vmatprep.subr.bf16.mxu0 %v587
  %1980 = vmatpush1.bf16.msra.mxu0 %v586
  %1981 = vmatprep.subr.bf16.mxu0 %v591
  %1982 = vmatpush1.bf16.msra.mxu0 %v590
  %1983 = vmatprep.subr.bf16.mxu0 0
  %1984 = vmatpush1.bf16.msra.mxu0 0
  %1985 = vmatprep.subr.bf16.mxu0 0
  %1986 = vmatpush1.bf16.msra.mxu0 0
  %1987 = vmatprep.subr.bf16.mxu0 0
  %1988 = vmatpush1.bf16.msra.mxu0 0
  %1989 = vmatprep.subr.bf16.mxu0 0
  %1990 = vmatpush1.bf16.msra.mxu0 0
  %1991 = vmatprep.subr.bf16.mxu0 0
  %1992 = vmatpush1.bf16.msra.mxu0 0
  %1993 = vmatprep.subr.bf16.mxu0 0
  %1994 = vmatpush1.bf16.msra.mxu0 0
  %1995 = vmatprep.subr.bf16.mxu0 0
  %1996 = vmatpush1.bf16.msra.mxu0 0
  %1997 = vmatprep.subr.bf16.mxu0 0
  %1998 = vmatpush1.bf16.msra.mxu0 0
  %1999 = vmatprep.mubr.bf16.mxu0 0
  %2000 = vmatmul.mubr.bf16.gmra.mrb[0].mxu0 %v1925
  %v2001 = vpop.f32.mrb[0].mxu0
  %v2002 = vadd.f32 0.0, %v2001
  %v2003 = vpop.f32.mrb[0].mxu0
  %v2004 = vadd.f32 0.0, %v2003
  %v2005 = vpop.f32.mrb[0].mxu0
  %v2006 = vpop.f32.mrb[0].mxu0
  %2007 = vdwg.mxu0
  %v2008 = vadd.f32 %v1921, %v1961
  %v2009 = vadd.f32 %v1922, %v1963
  %v2010 = vadd.f32 %v1923, %v2002
  %v2011 = vadd.f32 %v1924, %v2004
  %v2012 = vmul.f32 %v2008, 0.5
  %v2013 = vtanh.pop %v2012
  %v2014 = vmul.f32 %v2013, 0.5
  %v2015 = vadd.f32 %v2014, 0.5
  %v2016 = vmul.f32 %v2009, 0.5
  %v2017 = vtanh.pop %v2016
  %v2018 = vmul.f32 %v2017, 0.5
  %v2019 = vadd.f32 %v2018, 0.5
  %v2020 = vtanh.pop %v2010
  %v2021 = vmul.f32 %v2011, 0.5
  %v2022 = vtanh.pop %v2021
  %v2023 = vmul.f32 %v2022, 0.5
  %v2024 = vadd.f32 %v2023, 0.5
  %v2025 = vmul.f32 %v2019, %v1919
  %v2026 = vmul.f32 %v2015, %v2020
  %v2027 = vadd.f32 %v2025, %v2026
  %v2028 = vtanh.pop %v2027
  %v2029 = vmul.f32 %v2024, %v2028
  %vm2030 = vcmp.gt.s32.totalorder %v455, 10
  %v2031 = vsel %vm2030, 1, 0
  %v2032 = vcvt.s32.f32 %v2031
  %vm2033 = vcmp.le.s32.totalorder %v456, 10
  %v2034 = vsel %vm2033, 1, 0
  %v2035 = vcvt.s32.f32 %v2034
  %2037 = vset.pattern.permute.xlu0 0
  %2038 = vperm.xlu0 %2037, %v2032
  %v2039 = vpop.permute.xlu0 %2038
  %2042 = vset.pattern.permute.xlu0 0
  %2043 = vperm.xlu0 %2042, %v2035
  %v2044 = vpop.permute.xlu0 %2043
  %v2046 = vsel %vm735, %v2039, %v2044
  %vm2047 = vcmp.gt.f32.partialorder %v2046, 0.0
  %v2048 = vsel %vm2047, %v2029, %v1918
  %v2049 = vsel %vm2047, %v2027, %v1919
  %s2050 = scalar_lea.vmem [#allocation2], 352
  %v2051 = vld [vmem:[%s2050] sm:$0xff]
  %v2052 = vld [vmem:[%s2050 + $0x8] sm:$0xff]
  %v2053 = vld [vmem:[%s2050 + $0x10] sm:$0xff]
  %v2054 = vld [vmem:[%s2050 + $0x18] sm:$0xff]
  %v2055 = vpack.c.bf16 %v2048, %v2048
  %2056 = vmatprep.subr.bf16.mxu0 %v561
  %2057 = vmatpush1.bf16.msra.mxu0 %v560
  %2058 = vmatprep.subr.bf16.mxu0 %v565
  %2059 = vmatpush1.bf16.msra.mxu0 %v564
  %2060 = vmatprep.subr.bf16.mxu0 %v569
  %2061 = vmatpush1.bf16.msra.mxu0 %v568
  %2062 = vmatprep.subr.bf16.mxu0 %v573
  %2063 = vmatpush1.bf16.msra.mxu0 %v572
  %2064 = vmatprep.subr.bf16.mxu0 %v577
  %2065 = vmatpush1.bf16.msra.mxu0 %v576
  %2066 = vmatprep.subr.bf16.mxu0 %v581
  %2067 = vmatpush1.bf16.msra.mxu0 %v580
  %2068 = vmatprep.subr.bf16.mxu0 %v585
  %2069 = vmatpush1.bf16.msra.mxu0 %v584
  %2070 = vmatprep.subr.bf16.mxu0 %v589
  %2071 = vmatpush1.bf16.msra.mxu0 %v588
  %2072 = vmatprep.subr.bf16.mxu0 0
  %2073 = vmatpush1.bf16.msra.mxu0 0
  %2074 = vmatprep.subr.bf16.mxu0 0
  %2075 = vmatpush1.bf16.msra.mxu0 0
  %2076 = vmatprep.subr.bf16.mxu0 0
  %2077 = vmatpush1.bf16.msra.mxu0 0
  %2078 = vmatprep.subr.bf16.mxu0 0
  %2079 = vmatpush1.bf16.msra.mxu0 0
  %2080 = vmatprep.subr.bf16.mxu0 0
  %2081 = vmatpush1.bf16.msra.mxu0 0
  %2082 = vmatprep.subr.bf16.mxu0 0
  %2083 = vmatpush1.bf16.msra.mxu0 0
  %2084 = vmatprep.subr.bf16.mxu0 0
  %2085 = vmatpush1.bf16.msra.mxu0 0
  %2086 = vmatprep.subr.bf16.mxu0 0
  %2087 = vmatpush1.bf16.msra.mxu0 0
  %2088 = vmatprep.mubr.bf16.mxu0 0
  %2089 = vmatmul.mubr.bf16.gmra.mrb[0].mxu0 %v2055
  %v2090 = vpop.f32.mrb[0].mxu0
  %v2091 = vadd.f32 0.0, %v2090
  %v2092 = vpop.f32.mrb[0].mxu0
  %v2093 = vadd.f32 0.0, %v2092
  %v2094 = vpop.f32.mrb[0].mxu0
  %v2095 = vpop.f32.mrb[0].mxu0
  %2096 = vdwg.mxu0
  %2097 = vmatprep.subr.bf16.mxu0 %v563
  %2098 = vmatpush1.bf16.msra.mxu0 %v562
  %2099 = vmatprep.subr.bf16.mxu0 %v567
  %2100 = vmatpush1.bf16.msra.mxu0 %v566
  %2101 = vmatprep.subr.bf16.mxu0 %v571
  %2102 = vmatpush1.bf16.msra.mxu0 %v570
  %2103 = vmatprep.subr.bf16.mxu0 %v575
  %2104 = vmatpush1.bf16.msra.mxu0 %v574
  %2105 = vmatprep.subr.bf16.mxu0 %v579
  %2106 = vmatpush1.bf16.msra.mxu0 %v578
  %2107 = vmatprep.subr.bf16.mxu0 %v583
  %2108 = vmatpush1.bf16.msra.mxu0 %v582
  %2109 = vmatprep.subr.bf16.mxu0 %v587
  %2110 = vmatpush1.bf16.msra.mxu0 %v586
  %2111 = vmatprep.subr.bf16.mxu0 %v591
  %2112 = vmatpush1.bf16.msra.mxu0 %v590
  %2113 = vmatprep.subr.bf16.mxu0 0
  %2114 = vmatpush1.bf16.msra.mxu0 0
  %2115 = vmatprep.subr.bf16.mxu0 0
  %2116 = vmatpush1.bf16.msra.mxu0 0
  %2117 = vmatprep.subr.bf16.mxu0 0
  %2118 = vmatpush1.bf16.msra.mxu0 0
  %2119 = vmatprep.subr.bf16.mxu0 0
  %2120 = vmatpush1.bf16.msra.mxu0 0
  %2121 = vmatprep.subr.bf16.mxu0 0
  %2122 = vmatpush1.bf16.msra.mxu0 0
  %2123 = vmatprep.subr.bf16.mxu0 0
  %2124 = vmatpush1.bf16.msra.mxu0 0
  %2125 = vmatprep.subr.bf16.mxu0 0
  %2126 = vmatpush1.bf16.msra.mxu0 0
  %2127 = vmatprep.subr.bf16.mxu0 0
  %2128 = vmatpush1.bf16.msra.mxu0 0
  %2129 = vmatprep.mubr.bf16.mxu0 0
  %2130 = vmatmul.mubr.bf16.gmra.mrb[0].mxu0 %v2055
  %v2131 = vpop.f32.mrb[0].mxu0
  %v2132 = vadd.f32 0.0, %v2131
  %v2133 = vpop.f32.mrb[0].mxu0
  %v2134 = vadd.f32 0.0, %v2133
  %v2135 = vpop.f32.mrb[0].mxu0
  %v2136 = vpop.f32.mrb[0].mxu0
  %2137 = vdwg.mxu0
  %v2138 = vadd.f32 %v2051, %v2091
  %v2139 = vadd.f32 %v2052, %v2093
  %v2140 = vadd.f32 %v2053, %v2132
  %v2141 = vadd.f32 %v2054, %v2134
  %v2142 = vmul.f32 %v2138, 0.5
  %v2143 = vtanh.pop %v2142
  %v2144 = vmul.f32 %v2143, 0.5
  %v2145 = vadd.f32 %v2144, 0.5
  %v2146 = vmul.f32 %v2139, 0.5
  %v2147 = vtanh.pop %v2146
  %v2148 = vmul.f32 %v2147, 0.5
  %v2149 = vadd.f32 %v2148, 0.5
  %v2150 = vtanh.pop %v2140
  %v2151 = vmul.f32 %v2141, 0.5
  %v2152 = vtanh.pop %v2151
  %v2153 = vmul.f32 %v2152, 0.5
  %v2154 = vadd.f32 %v2153, 0.5
  %v2155 = vmul.f32 %v2149, %v2049
  %v2156 = vmul.f32 %v2145, %v2150
  %v2157 = vadd.f32 %v2155, %v2156
  %v2158 = vtanh.pop %v2157
  %v2159 = vmul.f32 %v2154, %v2158
  %vm2160 = vcmp.gt.s32.totalorder %v455, 11
  %v2161 = vsel %vm2160, 1, 0
  %v2162 = vcvt.s32.f32 %v2161
  %vm2163 = vcmp.le.s32.totalorder %v456, 11
  %v2164 = vsel %vm2163, 1, 0
  %v2165 = vcvt.s32.f32 %v2164
  %2167 = vset.pattern.permute.xlu0 0
  %2168 = vperm.xlu0 %2167, %v2162
  %v2169 = vpop.permute.xlu0 %2168
  %2172 = vset.pattern.permute.xlu0 0
  %2173 = vperm.xlu0 %2172, %v2165
  %v2174 = vpop.permute.xlu0 %2173
  %v2176 = vsel %vm735, %v2169, %v2174
  %vm2177 = vcmp.gt.f32.partialorder %v2176, 0.0
  %v2178 = vsel %vm2177, %v2159, %v2048
  %v2179 = vpack.c.bf16 %v2178, %v2178
  %v2180 = vld [vmem:[%s5] sm:$0xf]
  %v2181 = vld [vmem:[%s5 + $0x4] sm:$0xf]
  %v2182 = vld [vmem:[%s5 + $0x8] sm:$0xf]
  %v2183 = vld [vmem:[%s5 + $0xc] sm:$0xf]
  %v2184 = vld [vmem:[%s5 + $0x10] sm:$0xf]
  %v2185 = vld [vmem:[%s5 + $0x14] sm:$0xf]
  %v2186 = vld [vmem:[%s5 + $0x18] sm:$0xf]
  %v2187 = vld [vmem:[%s5 + $0x1c] sm:$0xf]
  %v2188 = vld [vmem:[%s5 + $0x20] sm:$0xf]
  %v2189 = vld [vmem:[%s5 + $0x24] sm:$0xf]
  %v2190 = vld [vmem:[%s5 + $0x28] sm:$0xf]
  %v2191 = vld [vmem:[%s5 + $0x2c] sm:$0xf]
  %v2192 = vld [vmem:[%s5 + $0x30] sm:$0xf]
  %v2193 = vld [vmem:[%s5 + $0x34] sm:$0xf]
  %v2194 = vld [vmem:[%s5 + $0x38] sm:$0xf]
  %v2195 = vld [vmem:[%s5 + $0x3c] sm:$0xf]
  %v2196 = vld [vmem:[%s6] sm:$0x1]
  %v2198 = vlaneseq
  %v2199 = vshrl.u32 %v2198, 7
  %v2200 = vsub.s32 0, %v2199
  %v2201 = vrot.slane %v2196, %v2200
  %v2219 = vunpack.c.l.b16 %v2180
  %v2220 = vunpack.c.l.b16 %v2181
  %v2221 = vunpack.c.l.b16 %v2182
  %v2222 = vunpack.c.l.b16 %v2183
  %v2223 = vunpack.c.l.b16 %v2184
  %v2224 = vunpack.c.l.b16 %v2185
  %v2225 = vunpack.c.l.b16 %v2186
  %v2226 = vunpack.c.l.b16 %v2187
  %v2227 = vunpack.c.l.b16 %v2188
  %v2228 = vunpack.c.l.b16 %v2189
  %v2229 = vunpack.c.l.b16 %v2190
  %v2230 = vunpack.c.l.b16 %v2191
  %v2231 = vunpack.c.l.b16 %v2192
  %v2232 = vunpack.c.l.b16 %v2193
  %v2233 = vunpack.c.l.b16 %v2194
  %v2234 = vunpack.c.l.b16 %v2195
  %v2235 = vpack.c.b16 %v2220, %v2219
  %v2236 = vpack.c.b16 %v2222, %v2221
  %v2237 = vpack.c.b16 %v2224, %v2223
  %v2238 = vpack.c.b16 %v2226, %v2225
  %v2239 = vpack.c.b16 %v2228, %v2227
  %v2240 = vpack.c.b16 %v2230, %v2229
  %v2241 = vpack.c.b16 %v2232, %v2231
  %v2242 = vpack.c.b16 %v2234, %v2233
  %2251 = vmatprep.subr.bf16.mxu0 0
  %2252 = vmatpush1.bf16.msra.mxu0 %v2235
  %2253 = vmatprep.subr.bf16.mxu0 0
  %2254 = vmatpush1.bf16.msra.mxu0 %v2236
  %2255 = vmatprep.subr.bf16.mxu0 0
  %2256 = vmatpush1.bf16.msra.mxu0 %v2237
  %2257 = vmatprep.subr.bf16.mxu0 0
  %2258 = vmatpush1.bf16.msra.mxu0 %v2238
  %2259 = vmatprep.subr.bf16.mxu0 0
  %2260 = vmatpush1.bf16.msra.mxu0 %v2239
  %2261 = vmatprep.subr.bf16.mxu0 0
  %2262 = vmatpush1.bf16.msra.mxu0 %v2240
  %2263 = vmatprep.subr.bf16.mxu0 0
  %2264 = vmatpush1.bf16.msra.mxu0 %v2241
  %2265 = vmatprep.subr.bf16.mxu0 0
  %2266 = vmatpush1.bf16.msra.mxu0 %v2242
  %2267 = vmatprep.subr.bf16.mxu0 0
  %2268 = vmatpush1.bf16.msra.mxu0 0
  %2269 = vmatprep.subr.bf16.mxu0 0
  %2270 = vmatpush1.bf16.msra.mxu0 0
  %2271 = vmatprep.subr.bf16.mxu0 0
  %2272 = vmatpush1.bf16.msra.mxu0 0
  %2273 = vmatprep.subr.bf16.mxu0 0
  %2274 = vmatpush1.bf16.msra.mxu0 0
  %2275 = vmatprep.subr.bf16.mxu0 0
  %2276 = vmatpush1.bf16.msra.mxu0 0
  %2277 = vmatprep.subr.bf16.mxu0 0
  %2278 = vmatpush1.bf16.msra.mxu0 0
  %2279 = vmatprep.subr.bf16.mxu0 0
  %2280 = vmatpush1.bf16.msra.mxu0 0
  %2281 = vmatprep.subr.bf16.mxu0 0
  %2282 = vmatpush1.bf16.msra.mxu0 0
  %2283 = vmatprep.mubr.bf16.mxu0 0
  %2284 = vmatmul.mubr.bf16.gmra.mrb[0].mxu0 %v2179
  %v2285 = vpop.f32.mrb[0].mxu0
  %v2286 = vadd.f32 %v2201, %v2285
  %v2287 = vpop.f32.mrb[0].mxu0
  %v2288 = vpop.f32.mrb[0].mxu0
  %v2289 = vpop.f32.mrb[0].mxu0
  %2290 = vdwg.mxu0
  %v2291 = vmax.f32 %v2286, 0.0
  %v2292 = vpack.c.bf16 %v2291, %v2291
  %v2293 = vld [vmem:[%s7] sm:$0xf]
  %v2294 = vld [vmem:[%s7 + $0x4] sm:$0xf]
  %v2295 = vld [vmem:[%s7 + $0x8] sm:$0xf]
  %v2296 = vld [vmem:[%s7 + $0xc] sm:$0xf]
  %v2297 = vld [vmem:[%s7 + $0x10] sm:$0xf]
  %v2298 = vld [vmem:[%s7 + $0x14] sm:$0xf]
  %v2299 = vld [vmem:[%s7 + $0x18] sm:$0xf]
  %v2300 = vld [vmem:[%s7 + $0x1c] sm:$0xf]
  %v2301 = vld [vmem:[%s7 + $0x20] sm:$0xf]
  %v2302 = vld [vmem:[%s7 + $0x24] sm:$0xf]
  %v2303 = vld [vmem:[%s7 + $0x28] sm:$0xf]
  %v2304 = vld [vmem:[%s7 + $0x2c] sm:$0xf]
  %v2305 = vld [vmem:[%s7 + $0x30] sm:$0xf]
  %v2306 = vld [vmem:[%s7 + $0x34] sm:$0xf]
  %v2307 = vld [vmem:[%s7 + $0x38] sm:$0xf]
  %v2308 = vld [vmem:[%s7 + $0x3c] sm:$0xf]
  %v2309 = vld [vmem:[%s8] sm:$0x1]
  %v2311 = vlaneseq
  %v2312 = vshrl.u32 %v2311, 7
  %v2313 = vsub.s32 0, %v2312
  %v2314 = vrot.slane %v2309, %v2313
  %v2332 = vunpack.c.l.b16 %v2293
  %v2333 = vunpack.c.l.b16 %v2294
  %v2334 = vunpack.c.l.b16 %v2295
  %v2335 = vunpack.c.l.b16 %v2296
  %v2336 = vunpack.c.l.b16 %v2297
  %v2337 = vunpack.c.l.b16 %v2298
  %v2338 = vunpack.c.l.b16 %v2299
  %v2339 = vunpack.c.l.b16 %v2300
  %v2340 = vunpack.c.l.b16 %v2301
  %v2341 = vunpack.c.l.b16 %v2302
  %v2342 = vunpack.c.l.b16 %v2303
  %v2343 = vunpack.c.l.b16 %v2304
  %v2344 = vunpack.c.l.b16 %v2305
  %v2345 = vunpack.c.l.b16 %v2306
  %v2346 = vunpack.c.l.b16 %v2307
  %v2347 = vunpack.c.l.b16 %v2308
  %v2348 = vpack.c.b16 %v2333, %v2332
  %v2349 = vpack.c.b16 %v2335, %v2334
  %v2350 = vpack.c.b16 %v2337, %v2336
  %v2351 = vpack.c.b16 %v2339, %v2338
  %v2352 = vpack.c.b16 %v2341, %v2340
  %v2353 = vpack.c.b16 %v2343, %v2342
  %v2354 = vpack.c.b16 %v2345, %v2344
  %v2355 = vpack.c.b16 %v2347, %v2346
  %2364 = vmatprep.subr.bf16.mxu0 0
  %2365 = vmatpush1.bf16.msra.mxu0 %v2348
  %2366 = vmatprep.subr.bf16.mxu0 0
  %2367 = vmatpush1.bf16.msra.mxu0 %v2349
  %2368 = vmatprep.subr.bf16.mxu0 0
  %2369 = vmatpush1.bf16.msra.mxu0 %v2350
  %2370 = vmatprep.subr.bf16.mxu0 0
  %2371 = vmatpush1.bf16.msra.mxu0 %v2351
  %2372 = vmatprep.subr.bf16.mxu0 0
  %2373 = vmatpush1.bf16.msra.mxu0 %v2352
  %2374 = vmatprep.subr.bf16.mxu0 0
  %2375 = vmatpush1.bf16.msra.mxu0 %v2353
  %2376 = vmatprep.subr.bf16.mxu0 0
  %2377 = vmatpush1.bf16.msra.mxu0 %v2354
  %2378 = vmatprep.subr.bf16.mxu0 0
  %2379 = vmatpush1.bf16.msra.mxu0 %v2355
  %2380 = vmatprep.subr.bf16.mxu0 0
  %2381 = vmatpush1.bf16.msra.mxu0 0
  %2382 = vmatprep.subr.bf16.mxu0 0
  %2383 = vmatpush1.bf16.msra.mxu0 0
  %2384 = vmatprep.subr.bf16.mxu0 0
  %2385 = vmatpush1.bf16.msra.mxu0 0
  %2386 = vmatprep.subr.bf16.mxu0 0
  %2387 = vmatpush1.bf16.msra.mxu0 0
  %2388 = vmatprep.subr.bf16.mxu0 0
  %2389 = vmatpush1.bf16.msra.mxu0 0
  %2390 = vmatprep.subr.bf16.mxu0 0
  %2391 = vmatpush1.bf16.msra.mxu0 0
  %2392 = vmatprep.subr.bf16.mxu0 0
  %2393 = vmatpush1.bf16.msra.mxu0 0
  %2394 = vmatprep.subr.bf16.mxu0 0
  %2395 = vmatpush1.bf16.msra.mxu0 0
  %2396 = vmatprep.mubr.bf16.mxu0 0
  %2397 = vmatmul.mubr.bf16.gmra.mrb[0].mxu0 %v2292
  %v2398 = vpop.f32.mrb[0].mxu0
  %v2399 = vadd.f32 %v2314, %v2398
  %v2400 = vpop.f32.mrb[0].mxu0
  %v2401 = vpop.f32.mrb[0].mxu0
  %v2402 = vpop.f32.mrb[0].mxu0
  %2403 = vdwg.mxu0
  %v2404 = vmul.f32 %v2399, 0.5
  %v2405 = vtanh.pop %v2404
  %v2406 = vmul.f32 %v2405, 0.5
  %v2407 = vadd.f32 %v2406, 0.5
  %2408 = vst [vmem:[%s9] sm:$0xff] %v2407
  // Predicated region
  $region38: #{bidirectional_rnn_forward.1} parent=0 // pred_check
    _
  $region39: #{bidirectional_rnn_forward.1} parent=0 // pred_check_branch
    %2410 = sbr.rel (0) target = $region41
  $region40: #{bidirectional_rnn_forward.1} parent=0 // pred_region
    _
  $region41: #{bidirectional_rnn_forward.1} parent=0 // pred_fallthru
    _
  // Predicated region
  $region42: #{bidirectional_rnn_forward.1} parent=0 // pred_check
    _
  $region43: #{bidirectional_rnn_forward.1} parent=0 // pred_check_branch
    %2412 = sbr.rel (0) target = $region45
  $region44: #{bidirectional_rnn_forward.1} parent=0 // pred_region
    _
  $region45: #{bidirectional_rnn_forward.1} parent=0 // pred_fallthru
    _

</llo_original>
